<compile_context>
chip_gen: v7x
topology: tpu7x:2x2x1
jax: 0.10.0
libtpu: 0.0.40
codegen_flags: <defaults>
</compile_context>

<pallas_src>
import jax
import jax.numpy as jnp
from jax import lax
from jax.experimental import pallas as pl
from jax.experimental.pallas import tpu as pltpu

C0 = 100   # conv0/conv1/fc1/conv2-out width (hard-coded in the module)
C2 = 200   # conv2 input width (100 global + 100 local)


def _gumbel_selector_kernel(ids_ref,                     # SMEM (Bp, L) int32 (scalar prefetch)
                            emb_hbm,                     # ANY  (V, E) f32  (stays in HBM)
                            w0_ref, b0_ref,              # (C0, 3E), (C0, 1)
                            w1_ref, b1_ref,              # (C0, 3C0), (C0, 1)
                            wfc_ref, bfc_ref,            # (C0, C0), (C0, 1)
                            w2g_ref, w2l_ref, b2_ref,    # (C0, C0), (C0, C0), (C0, 1)
                            w3_ref, b3_ref,              # (1, C0), (1, 1)
                            out_ref,                     # (Bt, 1, Lp)
                            emb_buf,                     # VMEM (Lp, E) scratch
                            dma_sem):                    # DMA semaphore (1,)
    bt = out_ref.shape[0]
    lp = out_ref.shape[2]
    seq_len = ids_ref.shape[1]
    g = pl.program_id(0)

    # Lane mask for the padded sequence tail (hoisted out of all loops).
    col = lax.broadcasted_iota(jnp.int32, (1, lp), 1)
    valid = col < seq_len

    w0 = w0_ref[...]
    w1 = w1_ref[...]
    b0 = b0_ref[...]
    b1 = b1_ref[...]

    def conv3_same(x, w, b):
        # x: (Cin, Lp) with padded columns zeroed; w: (Cout, 3*Cin); b: (Cout, 1).
        # k=3 'same' conv as one fused MXU matmul against the stacked taps.
        z1 = jnp.zeros((x.shape[0], 1), jnp.float32)
        x_m1 = jnp.concatenate([z1, x[:, :-1]], axis=1)     # x[:, t-1]
        x_p1 = jnp.concatenate([x[:, 1:], z1], axis=1)      # x[:, t+1]
        xs = jnp.concatenate([x_m1, x, x_p1], axis=0)       # (3*Cin, Lp)
        return jnp.dot(w, xs, preferred_element_type=jnp.float32) + b

    for bb in range(bt):   # static sub-batch loop: amortizes per-grid-step cost
        row = g * bt + bb

        # ---- embedding lookup: DMA-gather the L needed rows from HBM ----
        def issue(l, carry):
            tok = ids_ref[row, l]
            pltpu.make_async_copy(emb_hbm.at[tok], emb_buf.at[l],
                                  dma_sem.at[0]).start()
            return carry
        lax.fori_loop(0, seq_len, issue, 0)

        def drain(l, carry):
            pltpu.make_async_copy(emb_hbm.at[0], emb_buf.at[0],
                                  dma_sem.at[0]).wait()
            return carry
        lax.fori_loop(0, seq_len, drain, 0)

        # (Lp, E) -> (E, Lp); zero the padded / never-written columns.
        emb = jnp.where(valid, emb_buf[...].T, 0.0)

        # dropout(p=0.2): identity in eval mode.
        # TODO(synk): training-mode dropout masking not implemented.

        # conv0 (k=3) + relu; keep padded columns at zero for pooling / next conv.
        first = jnp.where(valid, jnp.maximum(conv3_same(emb, w0, b0), 0.0), 0.0)

        # adaptive_max_pool1d(output_size=1): global max over the sequence.
        pooled = jnp.max(first, axis=1, keepdims=True)                        # (C0, 1)
        global_info = (jnp.dot(wfc_ref[...], pooled,
                               preferred_element_type=jnp.float32)
                       + bfc_ref[...])                                        # (C0, 1)

        # conv1 applied twice (shared weights) + relu.
        net = jnp.where(valid, jnp.maximum(conv3_same(first, w1, b1), 0.0), 0.0)
        local = jnp.maximum(conv3_same(net, w1, b1), 0.0)                     # (C0, Lp)

        # concat([tile(global), local]) + conv2 (k=1): the global half is
        # rank-1 along the sequence -> fold it into a per-channel bias.
        gbias = jnp.dot(w2g_ref[...], global_info,
                        preferred_element_type=jnp.float32)                   # (C0, 1)
        net2 = jnp.maximum(
            jnp.dot(w2l_ref[...], local, preferred_element_type=jnp.float32)
            + gbias + b2_ref[...], 0.0)                                       # (C0, Lp)

        # conv3 (k=1): (1, C0) @ (C0, Lp)
        logits = (jnp.dot(w3_ref[...], net2, preferred_element_type=jnp.float32)
                  + b3_ref[...])                                              # (1, Lp)

        out_ref[bb] = logits


def gumbel_selector_forward(ids, params, *, block_batch=None):
    B, L = ids.shape
    V, E = params["emb"].shape

    Lp = ((L + 127) // 128) * 128                 # lane-dense sequence padding
    Bt = block_batch if block_batch is not None else min(B, 4)
    Bp = ((B + Bt - 1) // Bt) * Bt

    ids_p = jnp.zeros((Bp, L), jnp.int32).at[:B].set(ids.astype(jnp.int32))

    # ---- re-layout the (PyTorch-shaped) parameters for the kernel ----
    # conv weight (out, in, k=3) -> (out, 3*in), tap order [t-1 | t | t+1]
    w0s = jnp.transpose(params["w0"], (0, 2, 1)).reshape(C0, 3 * E)
    w1s = jnp.transpose(params["w1"], (0, 2, 1)).reshape(C0, 3 * C0)
    b0 = params["b0"].reshape(C0, 1)
    b1 = params["b1"].reshape(C0, 1)
    wfc = params["wfc"]
    bfc = params["bfc"].reshape(C0, 1)
    w2 = params["w2"][:, :, 0]                    # (C0, C2)
    w2g = w2[:, :C0]                              # multiplies tiled global branch
    w2l = w2[:, C0:]                              # multiplies local branch
    b2 = params["b2"].reshape(C0, 1)
    w3 = params["w3"][:, :, 0]                    # (1, C0)
    b3 = params["b3"].reshape(1, 1)

    const2 = lambda g, ids: (0, 0)

    out = pl.pallas_call(
        _gumbel_selector_kernel,
        out_shape=jax.ShapeDtypeStruct((Bp, 1, Lp), jnp.float32),
        grid_spec=pltpu.PrefetchScalarGridSpec(
            num_scalar_prefetch=1,                       # token ids -> SMEM
            grid=(Bp // Bt,),
            in_specs=[
                pl.BlockSpec(memory_space=pl.ANY),       # embedding table (HBM)
                pl.BlockSpec((C0, 3 * E), const2),       # fused conv0 weight
                pl.BlockSpec((C0, 1), const2),           # conv0 bias
                pl.BlockSpec((C0, 3 * C0), const2),      # fused conv1 weight
                pl.BlockSpec((C0, 1), const2),           # conv1 bias
                pl.BlockSpec((C0, C0), const2),          # fc1 weight
                pl.BlockSpec((C0, 1), const2),           # fc1 bias
                pl.BlockSpec((C0, C0), const2),          # conv2 weight (global half)
                pl.BlockSpec((C0, C0), const2),          # conv2 weight (local half)
                pl.BlockSpec((C0, 1), const2),           # conv2 bias
                pl.BlockSpec((1, C0), const2),           # conv3 weight
                pl.BlockSpec((1, 1), const2),            # conv3 bias
            ],
            out_specs=pl.BlockSpec((Bt, 1, Lp), lambda g, ids: (g, 0, 0)),
            scratch_shapes=[
                pltpu.VMEM((Lp, E), jnp.float32),        # gathered embeddings
                pltpu.SemaphoreType.DMA((1,)),
            ],
        ),
        compiler_params=pltpu.CompilerParams(
            dimension_semantics=("parallel",)),          # batch axis -> megacore
    )(ids_p, params["emb"], w0s, b0, w1s, b1, wfc, bfc, w2g, w2l, b2, w3, b3)

    return out[:B, :, :L]


def make_params(key, vocab_size, embed_dim):
    """Parameters in PyTorch-native layouts."""
    ks = jax.random.split(key, 11)
    s = 0.1
    return {
        "emb": s * jax.random.normal(ks[0], (vocab_size, embed_dim), jnp.float32),
        "w0": s * jax.random.normal(ks[1], (C0, embed_dim, 3), jnp.float32),
        "b0": s * jax.random.normal(ks[2], (C0,), jnp.float32),
        "w1": s * jax.random.normal(ks[3], (C0, C0, 3), jnp.float32),
        "b1": s * jax.random.normal(ks[4], (C0,), jnp.float32),
        "wfc": s * jax.random.normal(ks[5], (C0, C0), jnp.float32),
        "bfc": s * jax.random.normal(ks[6], (C0,), jnp.float32),
        "w2": s * jax.random.normal(ks[7], (C0, C2, 1), jnp.float32),
        "b2": s * jax.random.normal(ks[8], (C0,), jnp.float32),
        "w3": s * jax.random.normal(ks[9], (1, C0, 1), jnp.float32),
        "b3": s * jax.random.normal(ks[10], (1,), jnp.float32),
    }


def reference_forward(ids, params):
    """Pure-JAX reference (eval-mode dropout) using lax.conv_general_dilated."""
    x = params["emb"][ids]                      # (B, L, E)
    x = jnp.transpose(x, (0, 2, 1))             # (B, E, L)

    def conv1d(h, w, b):                        # w: (out, in, k)
        y = lax.conv_general_dilated(h, w, window_strides=(1,), padding="SAME",
                                     dimension_numbers=("NCH", "OIH", "NCH"))
        return y + b.reshape(1, -1, 1)

    first = jax.nn.relu(conv1d(x, params["w0"], params["b0"]))
    pooled = jnp.max(first, axis=2)                                    # (B, 100)
    glob = pooled @ params["wfc"].T + params["bfc"][None, :]
    net = jax.nn.relu(conv1d(first, params["w1"], params["b1"]))
    local = jax.nn.relu(conv1d(net, params["w1"], params["b1"]))
    concat = jnp.concatenate(
        [jnp.broadcast_to(glob[:, :, None], local.shape), local], axis=1)
    net2 = jax.nn.relu(conv1d(concat, params["w2"], params["b2"]))
    logits = conv1d(net2, params["w3"], params["b3"])                  # (B, 1, L)
    return logits


if __name__ == "__main__":
    vocab_size, embed_dim = 64, 32
    B, L = 2, 16

    key = jax.random.PRNGKey(0)
    k_ids, k_params = jax.random.split(key)
    ids = jax.random.randint(k_ids, (B, L), 0, vocab_size, dtype=jnp.int32)
    params = make_params(k_params, vocab_size, embed_dim)

    out = gumbel_selector_forward(ids, params)
    out = jax.block_until_ready(out)

    ref = jax.block_until_ready(reference_forward(ids, params))
    assert out.shape == (B, 1, L), out.shape
    assert jnp.allclose(out, ref, rtol=1e-4, atol=1e-4), \
        f"max err {jnp.max(jnp.abs(out - ref))}"

    print("KERNEL_OK")
</pallas_src>

<mosaic_0001>
module attributes {stable_mosaic.version = 11 : i64} {
  func.func @_gumbel_selector_kernel(%arg0: i32, %arg1: memref<2x16xi32, #tpu.memory_space<smem>>, %arg2: memref<64x32xf32, #tpu.memory_space<any>>, %arg3: memref<100x96xf32, #tpu.memory_space<vmem>>, %arg4: memref<100x1xf32, #tpu.memory_space<vmem>>, %arg5: memref<100x300xf32, #tpu.memory_space<vmem>>, %arg6: memref<100x1xf32, #tpu.memory_space<vmem>>, %arg7: memref<100x100xf32, #tpu.memory_space<vmem>>, %arg8: memref<100x1xf32, #tpu.memory_space<vmem>>, %arg9: memref<100x100xf32, #tpu.memory_space<vmem>>, %arg10: memref<100x100xf32, #tpu.memory_space<vmem>>, %arg11: memref<100x1xf32, #tpu.memory_space<vmem>>, %arg12: memref<1x100xf32, #tpu.memory_space<vmem>>, %arg13: memref<1x1xf32, #tpu.memory_space<vmem>>, %arg14: memref<2x1x128xf32, #tpu.memory_space<vmem>>, %arg15: memref<128x32xf32, #tpu.memory_space<vmem>>, %arg16: memref<1x!tpu.dma_semaphore, #tpu.memory_space<semaphore_mem>>) attributes {dimension_semantics = [#tpu.dimension_semantics<parallel>], iteration_bounds = array<i64: 1>, scalar_prefetch = 1 : i64, scratch_operands = 2 : i64, tpu.core_type = #tpu.core_type<tc>, window_params = [{}, {pipeline_mode = #tpu.pipeline_mode<synchronous>, transform_indices = @transform_1, window_bounds = array<i64: 100, 96>}, {pipeline_mode = #tpu.pipeline_mode<synchronous>, transform_indices = @transform_2, window_bounds = array<i64: 100, 1>}, {pipeline_mode = #tpu.pipeline_mode<synchronous>, transform_indices = @transform_3, window_bounds = array<i64: 100, 300>}, {pipeline_mode = #tpu.pipeline_mode<synchronous>, transform_indices = @transform_4, window_bounds = array<i64: 100, 1>}, {pipeline_mode = #tpu.pipeline_mode<synchronous>, transform_indices = @transform_5, window_bounds = array<i64: 100, 100>}, {pipeline_mode = #tpu.pipeline_mode<synchronous>, transform_indices = @transform_6, window_bounds = array<i64: 100, 1>}, {pipeline_mode = #tpu.pipeline_mode<synchronous>, transform_indices = @transform_7, window_bounds = array<i64: 100, 100>}, {pipeline_mode = #tpu.pipeline_mode<synchronous>, transform_indices = @transform_8, window_bounds = array<i64: 100, 100>}, {pipeline_mode = #tpu.pipeline_mode<synchronous>, transform_indices = @transform_9, window_bounds = array<i64: 100, 1>}, {pipeline_mode = #tpu.pipeline_mode<synchronous>, transform_indices = @transform_10, window_bounds = array<i64: 1, 100>}, {pipeline_mode = #tpu.pipeline_mode<synchronous>, transform_indices = @transform_11, window_bounds = array<i64: 1, 1>}, {transform_indices = @transform_12, window_bounds = array<i64: 2, 1, 128>}]} {
    %0 = tpu.iota {dimensions = array<i32: 1>} : vector<1x128xi32>
    %c16_i32 = arith.constant 16 : i32
    %1 = vector.broadcast %c16_i32 : i32 to vector<1x128xi32>
    %2 = arith.cmpi slt, %0, %1 : vector<1x128xi32>
    %c0 = arith.constant 0 : index
    %c0_0 = arith.constant 0 : index
    %3 = vector.load %arg3[%c0, %c0_0] : memref<100x96xf32, #tpu.memory_space<vmem>>, vector<100x96xf32>
    %c0_1 = arith.constant 0 : index
    %c0_2 = arith.constant 0 : index
    %4 = vector.load %arg5[%c0_1, %c0_2] : memref<100x300xf32, #tpu.memory_space<vmem>>, vector<100x300xf32>
    %c0_3 = arith.constant 0 : index
    %c0_4 = arith.constant 0 : index
    %5 = vector.load %arg4[%c0_3, %c0_4] : memref<100x1xf32, #tpu.memory_space<vmem>>, vector<100x1xf32>
    %c0_5 = arith.constant 0 : index
    %c0_6 = arith.constant 0 : index
    %6 = vector.load %arg6[%c0_5, %c0_6] : memref<100x1xf32, #tpu.memory_space<vmem>>, vector<100x1xf32>
    %c2_i32 = arith.constant 2 : i32
    %7 = arith.muli %arg0, %c2_i32 : i32
    %c0_i32 = arith.constant 0 : i32
    %8 = arith.addi %7, %c0_i32 : i32
    %c0_i32_7 = arith.constant 0 : i32
    %c16_i32_8 = arith.constant 16 : i32
    %9 = arith.addi %c0_i32_7, %c16_i32_8 : i32
    %c1_i32 = arith.constant 1 : i32
    scf.for %arg17 = %c0_i32_7 to %9 step %c1_i32  : i32 {
      %159 = arith.index_cast %8 : i32 to index
      %160 = arith.index_cast %arg17 : i32 to index
      %161 = memref.load %arg1[%159, %160] : memref<2x16xi32, #tpu.memory_space<smem>>
      %c0_i32_94 = arith.constant 0 : i32
      %c0_i32_95 = arith.constant 0 : i32
      %162 = tpu.memref_slice %arg2[%161, %c0_i32_95] : memref<64x32xf32, #tpu.memory_space<any>> -> memref<1x32xf32, #tpu.memory_space<any>>
      %163 = tpu.memref_squeeze %162 : memref<1x32xf32, #tpu.memory_space<any>> -> memref<32xf32, #tpu.memory_space<any>>
      %c0_i32_96 = arith.constant 0 : i32
      %164 = tpu.memref_slice %arg15[%arg17, %c0_i32_96] : memref<128x32xf32, #tpu.memory_space<vmem>> -> memref<1x32xf32, #tpu.memory_space<vmem>>
      %165 = tpu.memref_squeeze %164 : memref<1x32xf32, #tpu.memory_space<vmem>> -> memref<32xf32, #tpu.memory_space<vmem>>
      %166 = tpu.memref_slice %arg16[%c0_i32_94] : memref<1x!tpu.dma_semaphore, #tpu.memory_space<semaphore_mem>> -> memref<1x!tpu.dma_semaphore, #tpu.memory_space<semaphore_mem>>
      %167 = tpu.memref_squeeze %166 : memref<1x!tpu.dma_semaphore, #tpu.memory_space<semaphore_mem>> -> memref<!tpu.dma_semaphore, #tpu.memory_space<semaphore_mem>>
      tpu.enqueue_dma source(%163 : memref<32xf32, #tpu.memory_space<any>>) target(%165 : memref<32xf32, #tpu.memory_space<vmem>>) target_semaphore(%167 : memref<!tpu.dma_semaphore, #tpu.memory_space<semaphore_mem>>)
    }
    %c16_i32_9 = arith.constant 16 : i32
    %c0_i32_10 = arith.constant 0 : i32
    %c16_i32_11 = arith.constant 16 : i32
    %10 = arith.addi %c0_i32_10, %c16_i32_11 : i32
    %c1_i32_12 = arith.constant 1 : i32
    scf.for %arg17 = %c0_i32_10 to %10 step %c1_i32_12  : i32 {
      %c0_i32_94 = arith.constant 0 : i32
      %c0_i32_95 = arith.constant 0 : i32
      %c0_i32_96 = arith.constant 0 : i32
      %c0_i32_97 = arith.constant 0 : i32
      %159 = tpu.memref_slice %arg2[%c0_i32_94, %c0_i32_97] : memref<64x32xf32, #tpu.memory_space<any>> -> memref<1x32xf32, #tpu.memory_space<any>>
      %160 = tpu.memref_squeeze %159 : memref<1x32xf32, #tpu.memory_space<any>> -> memref<32xf32, #tpu.memory_space<any>>
      %c0_i32_98 = arith.constant 0 : i32
      %161 = tpu.memref_slice %arg15[%c0_i32_95, %c0_i32_98] : memref<128x32xf32, #tpu.memory_space<vmem>> -> memref<1x32xf32, #tpu.memory_space<vmem>>
      %162 = tpu.memref_squeeze %161 : memref<1x32xf32, #tpu.memory_space<vmem>> -> memref<32xf32, #tpu.memory_space<vmem>>
      %163 = tpu.memref_slice %arg16[%c0_i32_96] : memref<1x!tpu.dma_semaphore, #tpu.memory_space<semaphore_mem>> -> memref<1x!tpu.dma_semaphore, #tpu.memory_space<semaphore_mem>>
      %164 = tpu.memref_squeeze %163 : memref<1x!tpu.dma_semaphore, #tpu.memory_space<semaphore_mem>> -> memref<!tpu.dma_semaphore, #tpu.memory_space<semaphore_mem>>
      tpu.wait_dma2 semaphore(%164 : memref<!tpu.dma_semaphore, #tpu.memory_space<semaphore_mem>>) src(%160 : memref<32xf32, #tpu.memory_space<any>>) dst(%162 : memref<32xf32, #tpu.memory_space<vmem>>)
    }
    %c0_13 = arith.constant 0 : index
    %c0_14 = arith.constant 0 : index
    %11 = vector.load %arg15[%c0_13, %c0_14] : memref<128x32xf32, #tpu.memory_space<vmem>>, vector<128x32xf32>
    %12 = tpu.transpose %11, [1, 0] : vector<128x32xf32> -> vector<32x128xf32>
    %cst = arith.constant 0.000000e+00 : f32
    %13 = vector.shape_cast %2 : vector<1x128xi1> to vector<1x128xi1>
    %14 = vector.broadcast %13 : vector<1x128xi1> to vector<32x128xi1>
    %15 = vector.broadcast %cst : f32 to vector<32x128xf32>
    %16 = arith.select %14, %12, %15 : vector<32x128xi1>, vector<32x128xf32>
    %cst_15 = arith.constant 0.000000e+00 : f32
    %17 = vector.broadcast %cst_15 : f32 to vector<32x1xf32>
    %18 = vector.extract_strided_slice %16 {offsets = [0, 0], sizes = [32, 127], strides = [1, 1]} : vector<32x128xf32> to vector<32x127xf32>
    %19 = tpu.concatenate %17, %18 in 1 : vector<32x1xf32>, vector<32x127xf32> -> vector<32x128xf32>
    %20 = vector.extract_strided_slice %16 {offsets = [0, 1], sizes = [32, 127], strides = [1, 1]} : vector<32x128xf32> to vector<32x127xf32>
    %21 = tpu.concatenate %20, %17 in 1 : vector<32x127xf32>, vector<32x1xf32> -> vector<32x128xf32>
    %22 = tpu.concatenate %19, %16, %21 in 0 : vector<32x128xf32>, vector<32x128xf32>, vector<32x128xf32> -> vector<96x128xf32>
    %cst_16 = arith.constant dense<0.000000e+00> : vector<100x128xf32>
    %23 = tpu.matmul %3, %22, %cst_16 {dimension_numbers = #tpu.dot_dimension_numbers<[1], [0], [0], [1], [0, 0, 1, 1], [], []>} : vector<100x96xf32>, vector<96x128xf32>, vector<100x128xf32> -> vector<100x128xf32>
    %24 = vector.broadcast %5 : vector<100x1xf32> to vector<100x128xf32>
    %25 = arith.addf %23, %24 : vector<100x128xf32>
    %cst_17 = arith.constant 0.000000e+00 : f32
    %26 = vector.broadcast %cst_17 : f32 to vector<100x128xf32>
    %27 = arith.maximumf %25, %26 : vector<100x128xf32>
    %cst_18 = arith.constant 0.000000e+00 : f32
    %28 = vector.shape_cast %2 : vector<1x128xi1> to vector<1x128xi1>
    %29 = vector.broadcast %28 : vector<1x128xi1> to vector<100x128xi1>
    %30 = vector.broadcast %cst_18 : f32 to vector<100x128xf32>
    %31 = arith.select %29, %27, %30 : vector<100x128xi1>, vector<100x128xf32>
    %cst_19 = arith.constant dense<0xFF800000> : vector<100xf32>
    %32 = vector.multi_reduction <maximumf>, %31, %cst_19 [1] : vector<100x128xf32> to vector<100xf32>
    %33 = vector.shape_cast %32 : vector<100xf32> to vector<100x1xf32>
    %c0_20 = arith.constant 0 : index
    %c0_21 = arith.constant 0 : index
    %34 = vector.load %arg7[%c0_20, %c0_21] : memref<100x100xf32, #tpu.memory_space<vmem>>, vector<100x100xf32>
    %cst_22 = arith.constant dense<0.000000e+00> : vector<100x1xf32>
    %35 = tpu.matmul %34, %33, %cst_22 {dimension_numbers = #tpu.dot_dimension_numbers<[1], [0], [0], [1], [0, 0, 1, 1], [], []>} : vector<100x100xf32>, vector<100x1xf32>, vector<100x1xf32> -> vector<100x1xf32>
    %c0_23 = arith.constant 0 : index
    %c0_24 = arith.constant 0 : index
    %36 = vector.load %arg8[%c0_23, %c0_24] : memref<100x1xf32, #tpu.memory_space<vmem>>, vector<100x1xf32>
    %37 = arith.addf %35, %36 : vector<100x1xf32>
    %cst_25 = arith.constant 0.000000e+00 : f32
    %38 = vector.broadcast %cst_25 : f32 to vector<100x1xf32>
    %39 = vector.extract_strided_slice %31 {offsets = [0, 0], sizes = [100, 127], strides = [1, 1]} : vector<100x128xf32> to vector<100x127xf32>
    %40 = tpu.concatenate %38, %39 in 1 : vector<100x1xf32>, vector<100x127xf32> -> vector<100x128xf32>
    %41 = vector.extract_strided_slice %31 {offsets = [0, 1], sizes = [100, 127], strides = [1, 1]} : vector<100x128xf32> to vector<100x127xf32>
    %42 = tpu.concatenate %41, %38 in 1 : vector<100x127xf32>, vector<100x1xf32> -> vector<100x128xf32>
    %43 = tpu.concatenate %40, %31, %42 in 0 : vector<100x128xf32>, vector<100x128xf32>, vector<100x128xf32> -> vector<300x128xf32>
    %cst_26 = arith.constant dense<0.000000e+00> : vector<100x128xf32>
    %44 = tpu.matmul %4, %43, %cst_26 {dimension_numbers = #tpu.dot_dimension_numbers<[1], [0], [0], [1], [0, 0, 1, 1], [], []>} : vector<100x300xf32>, vector<300x128xf32>, vector<100x128xf32> -> vector<100x128xf32>
    %45 = vector.broadcast %6 : vector<100x1xf32> to vector<100x128xf32>
    %46 = arith.addf %44, %45 : vector<100x128xf32>
    %cst_27 = arith.constant 0.000000e+00 : f32
    %47 = vector.broadcast %cst_27 : f32 to vector<100x128xf32>
    %48 = arith.maximumf %46, %47 : vector<100x128xf32>
    %cst_28 = arith.constant 0.000000e+00 : f32
    %49 = vector.shape_cast %2 : vector<1x128xi1> to vector<1x128xi1>
    %50 = vector.broadcast %49 : vector<1x128xi1> to vector<100x128xi1>
    %51 = vector.broadcast %cst_28 : f32 to vector<100x128xf32>
    %52 = arith.select %50, %48, %51 : vector<100x128xi1>, vector<100x128xf32>
    %cst_29 = arith.constant 0.000000e+00 : f32
    %53 = vector.broadcast %cst_29 : f32 to vector<100x1xf32>
    %54 = vector.extract_strided_slice %52 {offsets = [0, 0], sizes = [100, 127], strides = [1, 1]} : vector<100x128xf32> to vector<100x127xf32>
    %55 = tpu.concatenate %53, %54 in 1 : vector<100x1xf32>, vector<100x127xf32> -> vector<100x128xf32>
    %56 = vector.extract_strided_slice %52 {offsets = [0, 1], sizes = [100, 127], strides = [1, 1]} : vector<100x128xf32> to vector<100x127xf32>
    %57 = tpu.concatenate %56, %53 in 1 : vector<100x127xf32>, vector<100x1xf32> -> vector<100x128xf32>
    %58 = tpu.concatenate %55, %52, %57 in 0 : vector<100x128xf32>, vector<100x128xf32>, vector<100x128xf32> -> vector<300x128xf32>
    %cst_30 = arith.constant dense<0.000000e+00> : vector<100x128xf32>
    %59 = tpu.matmul %4, %58, %cst_30 {dimension_numbers = #tpu.dot_dimension_numbers<[1], [0], [0], [1], [0, 0, 1, 1], [], []>} : vector<100x300xf32>, vector<300x128xf32>, vector<100x128xf32> -> vector<100x128xf32>
    %60 = vector.broadcast %6 : vector<100x1xf32> to vector<100x128xf32>
    %61 = arith.addf %59, %60 : vector<100x128xf32>
    %cst_31 = arith.constant 0.000000e+00 : f32
    %62 = vector.broadcast %cst_31 : f32 to vector<100x128xf32>
    %63 = arith.maximumf %61, %62 : vector<100x128xf32>
    %c0_32 = arith.constant 0 : index
    %c0_33 = arith.constant 0 : index
    %64 = vector.load %arg9[%c0_32, %c0_33] : memref<100x100xf32, #tpu.memory_space<vmem>>, vector<100x100xf32>
    %cst_34 = arith.constant dense<0.000000e+00> : vector<100x1xf32>
    %65 = tpu.matmul %64, %37, %cst_34 {dimension_numbers = #tpu.dot_dimension_numbers<[1], [0], [0], [1], [0, 0, 1, 1], [], []>} : vector<100x100xf32>, vector<100x1xf32>, vector<100x1xf32> -> vector<100x1xf32>
    %c0_35 = arith.constant 0 : index
    %c0_36 = arith.constant 0 : index
    %66 = vector.load %arg10[%c0_35, %c0_36] : memref<100x100xf32, #tpu.memory_space<vmem>>, vector<100x100xf32>
    %cst_37 = arith.constant dense<0.000000e+00> : vector<100x128xf32>
    %67 = tpu.matmul %66, %63, %cst_37 {dimension_numbers = #tpu.dot_dimension_numbers<[1], [0], [0], [1], [0, 0, 1, 1], [], []>} : vector<100x100xf32>, vector<100x128xf32>, vector<100x128xf32> -> vector<100x128xf32>
    %68 = vector.broadcast %65 : vector<100x1xf32> to vector<100x128xf32>
    %69 = arith.addf %67, %68 : vector<100x128xf32>
    %c0_38 = arith.constant 0 : index
    %c0_39 = arith.constant 0 : index
    %70 = vector.load %arg11[%c0_38, %c0_39] : memref<100x1xf32, #tpu.memory_space<vmem>>, vector<100x1xf32>
    %71 = vector.broadcast %70 : vector<100x1xf32> to vector<100x128xf32>
    %72 = arith.addf %69, %71 : vector<100x128xf32>
    %cst_40 = arith.constant 0.000000e+00 : f32
    %73 = vector.broadcast %cst_40 : f32 to vector<100x128xf32>
    %74 = arith.maximumf %72, %73 : vector<100x128xf32>
    %c0_41 = arith.constant 0 : index
    %c0_42 = arith.constant 0 : index
    %75 = vector.load %arg12[%c0_41, %c0_42] : memref<1x100xf32, #tpu.memory_space<vmem>>, vector<1x100xf32>
    %cst_43 = arith.constant dense<0.000000e+00> : vector<1x128xf32>
    %76 = tpu.matmul %75, %74, %cst_43 {dimension_numbers = #tpu.dot_dimension_numbers<[1], [0], [0], [1], [0, 0, 1, 1], [], []>} : vector<1x100xf32>, vector<100x128xf32>, vector<1x128xf32> -> vector<1x128xf32>
    %c0_44 = arith.constant 0 : index
    %c0_45 = arith.constant 0 : index
    %77 = vector.load %arg13[%c0_44, %c0_45] : memref<1x1xf32, #tpu.memory_space<vmem>>, vector<1x1xf32>
    %78 = vector.broadcast %77 : vector<1x1xf32> to vector<1x128xf32>
    %79 = arith.addf %76, %78 : vector<1x128xf32>
    %c0_46 = arith.constant 0 : index
    %c0_47 = arith.constant 0 : index
    %c0_48 = arith.constant 0 : index
    %80 = vector.load %arg14[%c0_46, %c0_47, %c0_48] : memref<2x1x128xf32, #tpu.memory_space<vmem>>, vector<1x1x128xf32>
    %81 = vector.shape_cast %80 : vector<1x1x128xf32> to vector<1x128xf32>
    %82 = vector.shape_cast %79 : vector<1x128xf32> to vector<1x1x128xf32>
    tpu.vector_store %arg14[%c0_46, %c0_47, %c0_48], %82 {strides = array<i32>} : memref<2x1x128xf32, #tpu.memory_space<vmem>>, vector<1x1x128xf32>,
    %c2_i32_49 = arith.constant 2 : i32
    %83 = arith.muli %arg0, %c2_i32_49 : i32
    %c1_i32_50 = arith.constant 1 : i32
    %84 = arith.addi %83, %c1_i32_50 : i32
    %c0_i32_51 = arith.constant 0 : i32
    %c16_i32_52 = arith.constant 16 : i32
    %85 = arith.addi %c0_i32_51, %c16_i32_52 : i32
    %c1_i32_53 = arith.constant 1 : i32
    scf.for %arg17 = %c0_i32_51 to %85 step %c1_i32_53  : i32 {
      %159 = arith.index_cast %84 : i32 to index
      %160 = arith.index_cast %arg17 : i32 to index
      %161 = memref.load %arg1[%159, %160] : memref<2x16xi32, #tpu.memory_space<smem>>
      %c0_i32_94 = arith.constant 0 : i32
      %c0_i32_95 = arith.constant 0 : i32
      %162 = tpu.memref_slice %arg2[%161, %c0_i32_95] : memref<64x32xf32, #tpu.memory_space<any>> -> memref<1x32xf32, #tpu.memory_space<any>>
      %163 = tpu.memref_squeeze %162 : memref<1x32xf32, #tpu.memory_space<any>> -> memref<32xf32, #tpu.memory_space<any>>
      %c0_i32_96 = arith.constant 0 : i32
      %164 = tpu.memref_slice %arg15[%arg17, %c0_i32_96] : memref<128x32xf32, #tpu.memory_space<vmem>> -> memref<1x32xf32, #tpu.memory_space<vmem>>
      %165 = tpu.memref_squeeze %164 : memref<1x32xf32, #tpu.memory_space<vmem>> -> memref<32xf32, #tpu.memory_space<vmem>>
      %166 = tpu.memref_slice %arg16[%c0_i32_94] : memref<1x!tpu.dma_semaphore, #tpu.memory_space<semaphore_mem>> -> memref<1x!tpu.dma_semaphore, #tpu.memory_space<semaphore_mem>>
      %167 = tpu.memref_squeeze %166 : memref<1x!tpu.dma_semaphore, #tpu.memory_space<semaphore_mem>> -> memref<!tpu.dma_semaphore, #tpu.memory_space<semaphore_mem>>
      tpu.enqueue_dma source(%163 : memref<32xf32, #tpu.memory_space<any>>) target(%165 : memref<32xf32, #tpu.memory_space<vmem>>) target_semaphore(%167 : memref<!tpu.dma_semaphore, #tpu.memory_space<semaphore_mem>>)
    }
    %c16_i32_54 = arith.constant 16 : i32
    %c0_i32_55 = arith.constant 0 : i32
    %c16_i32_56 = arith.constant 16 : i32
    %86 = arith.addi %c0_i32_55, %c16_i32_56 : i32
    %c1_i32_57 = arith.constant 1 : i32
    scf.for %arg17 = %c0_i32_55 to %86 step %c1_i32_57  : i32 {
      %c0_i32_94 = arith.constant 0 : i32
      %c0_i32_95 = arith.constant 0 : i32
      %c0_i32_96 = arith.constant 0 : i32
      %c0_i32_97 = arith.constant 0 : i32
      %159 = tpu.memref_slice %arg2[%c0_i32_94, %c0_i32_97] : memref<64x32xf32, #tpu.memory_space<any>> -> memref<1x32xf32, #tpu.memory_space<any>>
      %160 = tpu.memref_squeeze %159 : memref<1x32xf32, #tpu.memory_space<any>> -> memref<32xf32, #tpu.memory_space<any>>
      %c0_i32_98 = arith.constant 0 : i32
      %161 = tpu.memref_slice %arg15[%c0_i32_95, %c0_i32_98] : memref<128x32xf32, #tpu.memory_space<vmem>> -> memref<1x32xf32, #tpu.memory_space<vmem>>
      %162 = tpu.memref_squeeze %161 : memref<1x32xf32, #tpu.memory_space<vmem>> -> memref<32xf32, #tpu.memory_space<vmem>>
      %163 = tpu.memref_slice %arg16[%c0_i32_96] : memref<1x!tpu.dma_semaphore, #tpu.memory_space<semaphore_mem>> -> memref<1x!tpu.dma_semaphore, #tpu.memory_space<semaphore_mem>>
      %164 = tpu.memref_squeeze %163 : memref<1x!tpu.dma_semaphore, #tpu.memory_space<semaphore_mem>> -> memref<!tpu.dma_semaphore, #tpu.memory_space<semaphore_mem>>
      tpu.wait_dma2 semaphore(%164 : memref<!tpu.dma_semaphore, #tpu.memory_space<semaphore_mem>>) src(%160 : memref<32xf32, #tpu.memory_space<any>>) dst(%162 : memref<32xf32, #tpu.memory_space<vmem>>)
    }
    %c0_58 = arith.constant 0 : index
    %c0_59 = arith.constant 0 : index
    %87 = vector.load %arg15[%c0_58, %c0_59] : memref<128x32xf32, #tpu.memory_space<vmem>>, vector<128x32xf32>
    %88 = tpu.transpose %87, [1, 0] : vector<128x32xf32> -> vector<32x128xf32>
    %cst_60 = arith.constant 0.000000e+00 : f32
    %89 = vector.shape_cast %2 : vector<1x128xi1> to vector<1x128xi1>
    %90 = vector.broadcast %89 : vector<1x128xi1> to vector<32x128xi1>
    %91 = vector.broadcast %cst_60 : f32 to vector<32x128xf32>
    %92 = arith.select %90, %88, %91 : vector<32x128xi1>, vector<32x128xf32>
    %cst_61 = arith.constant 0.000000e+00 : f32
    %93 = vector.broadcast %cst_61 : f32 to vector<32x1xf32>
    %94 = vector.extract_strided_slice %92 {offsets = [0, 0], sizes = [32, 127], strides = [1, 1]} : vector<32x128xf32> to vector<32x127xf32>
    %95 = tpu.concatenate %93, %94 in 1 : vector<32x1xf32>, vector<32x127xf32> -> vector<32x128xf32>
    %96 = vector.extract_strided_slice %92 {offsets = [0, 1], sizes = [32, 127], strides = [1, 1]} : vector<32x128xf32> to vector<32x127xf32>
    %97 = tpu.concatenate %96, %93 in 1 : vector<32x127xf32>, vector<32x1xf32> -> vector<32x128xf32>
    %98 = tpu.concatenate %95, %92, %97 in 0 : vector<32x128xf32>, vector<32x128xf32>, vector<32x128xf32> -> vector<96x128xf32>
    %cst_62 = arith.constant dense<0.000000e+00> : vector<100x128xf32>
    %99 = tpu.matmul %3, %98, %cst_62 {dimension_numbers = #tpu.dot_dimension_numbers<[1], [0], [0], [1], [0, 0, 1, 1], [], []>} : vector<100x96xf32>, vector<96x128xf32>, vector<100x128xf32> -> vector<100x128xf32>
    %100 = vector.broadcast %5 : vector<100x1xf32> to vector<100x128xf32>
    %101 = arith.addf %99, %100 : vector<100x128xf32>
    %cst_63 = arith.constant 0.000000e+00 : f32
    %102 = vector.broadcast %cst_63 : f32 to vector<100x128xf32>
    %103 = arith.maximumf %101, %102 : vector<100x128xf32>
    %cst_64 = arith.constant 0.000000e+00 : f32
    %104 = vector.shape_cast %2 : vector<1x128xi1> to vector<1x128xi1>
    %105 = vector.broadcast %104 : vector<1x128xi1> to vector<100x128xi1>
    %106 = vector.broadcast %cst_64 : f32 to vector<100x128xf32>
    %107 = arith.select %105, %103, %106 : vector<100x128xi1>, vector<100x128xf32>
    %cst_65 = arith.constant dense<0xFF800000> : vector<100xf32>
    %108 = vector.multi_reduction <maximumf>, %107, %cst_65 [1] : vector<100x128xf32> to vector<100xf32>
    %109 = vector.shape_cast %108 : vector<100xf32> to vector<100x1xf32>
    %c0_66 = arith.constant 0 : index
    %c0_67 = arith.constant 0 : index
    %110 = vector.load %arg7[%c0_66, %c0_67] : memref<100x100xf32, #tpu.memory_space<vmem>>, vector<100x100xf32>
    %cst_68 = arith.constant dense<0.000000e+00> : vector<100x1xf32>
    %111 = tpu.matmul %110, %109, %cst_68 {dimension_numbers = #tpu.dot_dimension_numbers<[1], [0], [0], [1], [0, 0, 1, 1], [], []>} : vector<100x100xf32>, vector<100x1xf32>, vector<100x1xf32> -> vector<100x1xf32>
    %c0_69 = arith.constant 0 : index
    %c0_70 = arith.constant 0 : index
    %112 = vector.load %arg8[%c0_69, %c0_70] : memref<100x1xf32, #tpu.memory_space<vmem>>, vector<100x1xf32>
    %113 = arith.addf %111, %112 : vector<100x1xf32>
    %cst_71 = arith.constant 0.000000e+00 : f32
    %114 = vector.broadcast %cst_71 : f32 to vector<100x1xf32>
    %115 = vector.extract_strided_slice %107 {offsets = [0, 0], sizes = [100, 127], strides = [1, 1]} : vector<100x128xf32> to vector<100x127xf32>
    %116 = tpu.concatenate %114, %115 in 1 : vector<100x1xf32>, vector<100x127xf32> -> vector<100x128xf32>
    %117 = vector.extract_strided_slice %107 {offsets = [0, 1], sizes = [100, 127], strides = [1, 1]} : vector<100x128xf32> to vector<100x127xf32>
    %118 = tpu.concatenate %117, %114 in 1 : vector<100x127xf32>, vector<100x1xf32> -> vector<100x128xf32>
    %119 = tpu.concatenate %116, %107, %118 in 0 : vector<100x128xf32>, vector<100x128xf32>, vector<100x128xf32> -> vector<300x128xf32>
    %cst_72 = arith.constant dense<0.000000e+00> : vector<100x128xf32>
    %120 = tpu.matmul %4, %119, %cst_72 {dimension_numbers = #tpu.dot_dimension_numbers<[1], [0], [0], [1], [0, 0, 1, 1], [], []>} : vector<100x300xf32>, vector<300x128xf32>, vector<100x128xf32> -> vector<100x128xf32>
    %121 = vector.broadcast %6 : vector<100x1xf32> to vector<100x128xf32>
    %122 = arith.addf %120, %121 : vector<100x128xf32>
    %cst_73 = arith.constant 0.000000e+00 : f32
    %123 = vector.broadcast %cst_73 : f32 to vector<100x128xf32>
    %124 = arith.maximumf %122, %123 : vector<100x128xf32>
    %cst_74 = arith.constant 0.000000e+00 : f32
    %125 = vector.shape_cast %2 : vector<1x128xi1> to vector<1x128xi1>
    %126 = vector.broadcast %125 : vector<1x128xi1> to vector<100x128xi1>
    %127 = vector.broadcast %cst_74 : f32 to vector<100x128xf32>
    %128 = arith.select %126, %124, %127 : vector<100x128xi1>, vector<100x128xf32>
    %cst_75 = arith.constant 0.000000e+00 : f32
    %129 = vector.broadcast %cst_75 : f32 to vector<100x1xf32>
    %130 = vector.extract_strided_slice %128 {offsets = [0, 0], sizes = [100, 127], strides = [1, 1]} : vector<100x128xf32> to vector<100x127xf32>
    %131 = tpu.concatenate %129, %130 in 1 : vector<100x1xf32>, vector<100x127xf32> -> vector<100x128xf32>
    %132 = vector.extract_strided_slice %128 {offsets = [0, 1], sizes = [100, 127], strides = [1, 1]} : vector<100x128xf32> to vector<100x127xf32>
    %133 = tpu.concatenate %132, %129 in 1 : vector<100x127xf32>, vector<100x1xf32> -> vector<100x128xf32>
    %134 = tpu.concatenate %131, %128, %133 in 0 : vector<100x128xf32>, vector<100x128xf32>, vector<100x128xf32> -> vector<300x128xf32>
    %cst_76 = arith.constant dense<0.000000e+00> : vector<100x128xf32>
    %135 = tpu.matmul %4, %134, %cst_76 {dimension_numbers = #tpu.dot_dimension_numbers<[1], [0], [0], [1], [0, 0, 1, 1], [], []>} : vector<100x300xf32>, vector<300x128xf32>, vector<100x128xf32> -> vector<100x128xf32>
    %136 = vector.broadcast %6 : vector<100x1xf32> to vector<100x128xf32>
    %137 = arith.addf %135, %136 : vector<100x128xf32>
    %cst_77 = arith.constant 0.000000e+00 : f32
    %138 = vector.broadcast %cst_77 : f32 to vector<100x128xf32>
    %139 = arith.maximumf %137, %138 : vector<100x128xf32>
    %c0_78 = arith.constant 0 : index
    %c0_79 = arith.constant 0 : index
    %140 = vector.load %arg9[%c0_78, %c0_79] : memref<100x100xf32, #tpu.memory_space<vmem>>, vector<100x100xf32>
    %cst_80 = arith.constant dense<0.000000e+00> : vector<100x1xf32>
    %141 = tpu.matmul %140, %113, %cst_80 {dimension_numbers = #tpu.dot_dimension_numbers<[1], [0], [0], [1], [0, 0, 1, 1], [], []>} : vector<100x100xf32>, vector<100x1xf32>, vector<100x1xf32> -> vector<100x1xf32>
    %c0_81 = arith.constant 0 : index
    %c0_82 = arith.constant 0 : index
    %142 = vector.load %arg10[%c0_81, %c0_82] : memref<100x100xf32, #tpu.memory_space<vmem>>, vector<100x100xf32>
    %cst_83 = arith.constant dense<0.000000e+00> : vector<100x128xf32>
    %143 = tpu.matmul %142, %139, %cst_83 {dimension_numbers = #tpu.dot_dimension_numbers<[1], [0], [0], [1], [0, 0, 1, 1], [], []>} : vector<100x100xf32>, vector<100x128xf32>, vector<100x128xf32> -> vector<100x128xf32>
    %144 = vector.broadcast %141 : vector<100x1xf32> to vector<100x128xf32>
    %145 = arith.addf %143, %144 : vector<100x128xf32>
    %c0_84 = arith.constant 0 : index
    %c0_85 = arith.constant 0 : index
    %146 = vector.load %arg11[%c0_84, %c0_85] : memref<100x1xf32, #tpu.memory_space<vmem>>, vector<100x1xf32>
    %147 = vector.broadcast %146 : vector<100x1xf32> to vector<100x128xf32>
    %148 = arith.addf %145, %147 : vector<100x128xf32>
    %cst_86 = arith.constant 0.000000e+00 : f32
    %149 = vector.broadcast %cst_86 : f32 to vector<100x128xf32>
    %150 = arith.maximumf %148, %149 : vector<100x128xf32>
    %c0_87 = arith.constant 0 : index
    %c0_88 = arith.constant 0 : index
    %151 = vector.load %arg12[%c0_87, %c0_88] : memref<1x100xf32, #tpu.memory_space<vmem>>, vector<1x100xf32>
    %cst_89 = arith.constant dense<0.000000e+00> : vector<1x128xf32>
    %152 = tpu.matmul %151, %150, %cst_89 {dimension_numbers = #tpu.dot_dimension_numbers<[1], [0], [0], [1], [0, 0, 1, 1], [], []>} : vector<1x100xf32>, vector<100x128xf32>, vector<1x128xf32> -> vector<1x128xf32>
    %c0_90 = arith.constant 0 : index
    %c0_91 = arith.constant 0 : index
    %153 = vector.load %arg13[%c0_90, %c0_91] : memref<1x1xf32, #tpu.memory_space<vmem>>, vector<1x1xf32>
    %154 = vector.broadcast %153 : vector<1x1xf32> to vector<1x128xf32>
    %155 = arith.addf %152, %154 : vector<1x128xf32>
    %c1 = arith.constant 1 : index
    %c0_92 = arith.constant 0 : index
    %c0_93 = arith.constant 0 : index
    %156 = vector.load %arg14[%c1, %c0_92, %c0_93] : memref<2x1x128xf32, #tpu.memory_space<vmem>>, vector<1x1x128xf32>
    %157 = vector.shape_cast %156 : vector<1x1x128xf32> to vector<1x128xf32>
    %158 = vector.shape_cast %155 : vector<1x128xf32> to vector<1x1x128xf32>
    tpu.vector_store %arg14[%c1, %c0_92, %c0_93], %158 {strides = array<i32>} : memref<2x1x128xf32, #tpu.memory_space<vmem>>, vector<1x1x128xf32>,
    return
  }
  func.func @transform_1(%arg0: i32, %arg1: memref<2x16xi32, #tpu.memory_space<smem>>) -> (i32, i32) {
    %c0_i32 = arith.constant 0 : i32
    %c0_i32_0 = arith.constant 0 : i32
    %c0_i32_1 = arith.constant 0 : i32
    return %c0_i32, %c0_i32_0 : i32, i32
  }
  func.func @transform_2(%arg0: i32, %arg1: memref<2x16xi32, #tpu.memory_space<smem>>) -> (i32, i32) {
    %c0_i32 = arith.constant 0 : i32
    %c0_i32_0 = arith.constant 0 : i32
    %c0_i32_1 = arith.constant 0 : i32
    return %c0_i32, %c0_i32_0 : i32, i32
  }
  func.func @transform_3(%arg0: i32, %arg1: memref<2x16xi32, #tpu.memory_space<smem>>) -> (i32, i32) {
    %c0_i32 = arith.constant 0 : i32
    %c0_i32_0 = arith.constant 0 : i32
    %c0_i32_1 = arith.constant 0 : i32
    return %c0_i32, %c0_i32_0 : i32, i32
  }
  func.func @transform_4(%arg0: i32, %arg1: memref<2x16xi32, #tpu.memory_space<smem>>) -> (i32, i32) {
    %c0_i32 = arith.constant 0 : i32
    %c0_i32_0 = arith.constant 0 : i32
    %c0_i32_1 = arith.constant 0 : i32
    return %c0_i32, %c0_i32_0 : i32, i32
  }
  func.func @transform_5(%arg0: i32, %arg1: memref<2x16xi32, #tpu.memory_space<smem>>) -> (i32, i32) {
    %c0_i32 = arith.constant 0 : i32
    %c0_i32_0 = arith.constant 0 : i32
    %c0_i32_1 = arith.constant 0 : i32
    return %c0_i32, %c0_i32_0 : i32, i32
  }
  func.func @transform_6(%arg0: i32, %arg1: memref<2x16xi32, #tpu.memory_space<smem>>) -> (i32, i32) {
    %c0_i32 = arith.constant 0 : i32
    %c0_i32_0 = arith.constant 0 : i32
    %c0_i32_1 = arith.constant 0 : i32
    return %c0_i32, %c0_i32_0 : i32, i32
  }
  func.func @transform_7(%arg0: i32, %arg1: memref<2x16xi32, #tpu.memory_space<smem>>) -> (i32, i32) {
    %c0_i32 = arith.constant 0 : i32
    %c0_i32_0 = arith.constant 0 : i32
    %c0_i32_1 = arith.constant 0 : i32
    return %c0_i32, %c0_i32_0 : i32, i32
  }
  func.func @transform_8(%arg0: i32, %arg1: memref<2x16xi32, #tpu.memory_space<smem>>) -> (i32, i32) {
    %c0_i32 = arith.constant 0 : i32
    %c0_i32_0 = arith.constant 0 : i32
    %c0_i32_1 = arith.constant 0 : i32
    return %c0_i32, %c0_i32_0 : i32, i32
  }
  func.func @transform_9(%arg0: i32, %arg1: memref<2x16xi32, #tpu.memory_space<smem>>) -> (i32, i32) {
    %c0_i32 = arith.constant 0 : i32
    %c0_i32_0 = arith.constant 0 : i32
    %c0_i32_1 = arith.constant 0 : i32
    return %c0_i32, %c0_i32_0 : i32, i32
  }
  func.func @transform_10(%arg0: i32, %arg1: memref<2x16xi32, #tpu.memory_space<smem>>) -> (i32, i32) {
    %c0_i32 = arith.constant 0 : i32
    %c0_i32_0 = arith.constant 0 : i32
    %c0_i32_1 = arith.constant 0 : i32
    return %c0_i32, %c0_i32_0 : i32, i32
  }
  func.func @transform_11(%arg0: i32, %arg1: memref<2x16xi32, #tpu.memory_space<smem>>) -> (i32, i32) {
    %c0_i32 = arith.constant 0 : i32
    %c0_i32_0 = arith.constant 0 : i32
    %c0_i32_1 = arith.constant 0 : i32
    return %c0_i32, %c0_i32_0 : i32, i32
  }
  func.func @transform_12(%arg0: i32, %arg1: memref<2x16xi32, #tpu.memory_space<smem>>) -> (i32, i32, i32) {
    %c0_i32 = arith.constant 0 : i32
    %c0_i32_0 = arith.constant 0 : i32
    %c0_i32_1 = arith.constant 0 : i32
    return %arg0, %c0_i32, %c0_i32_0 : i32, i32, i32
  }
}

</mosaic_0001>

<llo_original>
// kernel: tpu_custom_call.1
$region0: #{tpu_custom_call.1}
  #allocation0 [shape = 'u32[]', space=smem, size = 0x4, offset = 0x4, fixed_abs, tag = 'smem constant byte address 0x4 - core index']
  #allocation1 [shape = 'u32[144,128]{1,0:T(1,128)}', space=vmem, size = 0x12000, scoped, tag = 'internal scratch']
  #allocation2 [shape = 'f32[128,32]{1,0:T(8,128)}', space=vmem, size = 0x10000, scoped, tag = 'scratch operand']
  #allocation3 [shape = 's32[1]{0}', space=sflag, size = 0x4, scoped, tag = 'scratch operand']
  #allocation4 [shape = 's32[1]{0}', space=sflag, size = 0x4, scoped, tag = 'scoped memory for tpu_custom_call.1']
  #allocation5 [shape = 'u8[1024]{0}', space=smem, size = 0x400, scoped, tag = 'prefetched SMEM operand 0']
  #allocation6 [shape = 'f32[1,1]{1,0:T(1,128)S(1)}', space=vmem, size = 0x200, scoped, tag = 'scoped memory for tpu_custom_call.1']
  #allocation9 [shape = 's32[]', space=sflag, size = 0x4, offset = 0, fixed_abs, tag = 'sflag constant byte address 0x0 - dummy sync flag']
  #allocation10 [shape = 's32[]', space=sflag, size = 0x4, offset = 0, fixed_abs, tag = 'sflag constant byte address 0x0 - dummy sync flag']
  %s0 = inlined_call_operand.vmem [shape: s32[2,16], index: 0, kind: input, shape index: {}]
  %s1 = inlined_call_operand.vmem [shape: f32[64,32], index: 1, kind: input, shape index: {}]
  %s2 = inlined_call_operand.vmem [shape: f32[100,96], index: 2, kind: input, shape index: {}]
  %s3 = inlined_call_operand.vmem [shape: f32[100,1], index: 3, kind: input, shape index: {}]
  %s4 = inlined_call_operand.vmem [shape: f32[100,300], index: 4, kind: input, shape index: {}]
  %s5 = inlined_call_operand.vmem [shape: f32[100,1], index: 5, kind: input, shape index: {}]
  %s6 = inlined_call_operand.vmem [shape: f32[100,100], index: 6, kind: input, shape index: {}]
  %s7 = inlined_call_operand.vmem [shape: f32[100,1], index: 7, kind: input, shape index: {}]
  %s8 = inlined_call_operand.vmem [shape: f32[100,100], index: 8, kind: input, shape index: {}]
  %s9 = inlined_call_operand.vmem [shape: f32[100,100], index: 9, kind: input, shape index: {}]
  %s10 = inlined_call_operand.vmem [shape: f32[100,1], index: 10, kind: input, shape index: {}]
  %s11 = inlined_call_operand.vmem [shape: f32[1,100], index: 11, kind: input, shape index: {}]
  %s12 = inlined_call_operand.<no memory space> [shape: f32[1,1], index: 12, kind: input, shape index: {}]
  %s13 = inlined_call_operand.hbm [shape: f32[2,1,128], index: 13, kind: output, shape index: {}]
  %s14 = sld [smem:[#allocation0]]
  $region142: #{tpu_custom_call.1} parent=0
    _
  %s16 = ssub.s32 1, %s14
  %s17 = scalar_select 0, %s16, %s14
  %s18 = sshll.u32 %s0, 4
  %s19 = int_to_ptr.vmem [resolvable:$true] %s18
  %21 = dma.vmem_to_smem %s19, 32, [#allocation5], [#allocation4]
  %v22 = vstv %s12
  %23 = vst [vmem:[#allocation6] sm:$0x1] %v22
  %24 = dma.done [#allocation4], 32
  %25 = sfence
  $region1: #{tpu_custom_call.1} parent=0
    #allocation7 [shape = 'u8[1024]{0}', space=vmem, size = 0x400, scoped, tag = 'output window, operand 0, single buffered']
    #allocation8 [shape = 's32[1]{0}', space=sflag, size = 0x4, scoped, tag = 'scoped memory for tpu_custom_call.1']
    %26 = vsyncpa [#allocation8], 0
    // Predicated region
    $region2: #{tpu_custom_call.1} parent=1 // pred_check
      _
    $region3: #{tpu_custom_call.1} parent=1 // pred_check_branch
      %28 = sbr.rel (0) target = $region5
    $region4: #{tpu_custom_call.1} parent=1 // pred_region
      _
    $region5: #{tpu_custom_call.1} parent=1 // pred_fallthru
      _
    // Predicated region
    $region6: #{tpu_custom_call.1} parent=1 // pred_check
      _
    $region7: #{tpu_custom_call.1} parent=1 // pred_check_branch
      %30 = sbr.rel (0) target = $region9
    $region8: #{tpu_custom_call.1} parent=1 // pred_region
      _
    $region9: #{tpu_custom_call.1} parent=1 // pred_fallthru
      _
    // Predicated region
    $region10: #{tpu_custom_call.1} parent=1 // pred_check
      _
    $region11: #{tpu_custom_call.1} parent=1 // pred_check_branch
      %32 = sbr.rel (0) target = $region13
    $region12: #{tpu_custom_call.1} parent=1 // pred_region
      _
    $region13: #{tpu_custom_call.1} parent=1 // pred_fallthru
      _
    // Predicated region
    $region14: #{tpu_custom_call.1} parent=1 // pred_check
      _
    $region15: #{tpu_custom_call.1} parent=1 // pred_check_branch
      %34 = sbr.rel (0) target = $region17
    $region16: #{tpu_custom_call.1} parent=1 // pred_region
      _
    $region17: #{tpu_custom_call.1} parent=1 // pred_fallthru
      _
    // Predicated region
    $region18: #{tpu_custom_call.1} parent=1 // pred_check
      _
    $region19: #{tpu_custom_call.1} parent=1 // pred_check_branch
      %36 = sbr.rel (0) target = $region21
    $region20: #{tpu_custom_call.1} parent=1 // pred_region
      _
    $region21: #{tpu_custom_call.1} parent=1 // pred_fallthru
      _
    // Predicated region
    $region22: #{tpu_custom_call.1} parent=1 // pred_check
      _
    $region23: #{tpu_custom_call.1} parent=1 // pred_check_branch
      %38 = sbr.rel (0) target = $region25
    $region24: #{tpu_custom_call.1} parent=1 // pred_region
      _
    $region25: #{tpu_custom_call.1} parent=1 // pred_fallthru
      _
    // Predicated region
    $region26: #{tpu_custom_call.1} parent=1 // pred_check
      _
    $region27: #{tpu_custom_call.1} parent=1 // pred_check_branch
      %40 = sbr.rel (0) target = $region29
    $region28: #{tpu_custom_call.1} parent=1 // pred_region
      _
    $region29: #{tpu_custom_call.1} parent=1 // pred_fallthru
      _
    // Predicated region
    $region30: #{tpu_custom_call.1} parent=1 // pred_check
      _
    $region31: #{tpu_custom_call.1} parent=1 // pred_check_branch
      %42 = sbr.rel (0) target = $region33
    $region32: #{tpu_custom_call.1} parent=1 // pred_region
      _
    $region33: #{tpu_custom_call.1} parent=1 // pred_fallthru
      _
    // Predicated region
    $region34: #{tpu_custom_call.1} parent=1 // pred_check
      _
    $region35: #{tpu_custom_call.1} parent=1 // pred_check_branch
      %44 = sbr.rel (0) target = $region37
    $region36: #{tpu_custom_call.1} parent=1 // pred_region
      _
    $region37: #{tpu_custom_call.1} parent=1 // pred_fallthru
      _
    // Predicated region
    $region38: #{tpu_custom_call.1} parent=1 // pred_check
      _
    $region39: #{tpu_custom_call.1} parent=1 // pred_check_branch
      %46 = sbr.rel (0) target = $region41
    $region40: #{tpu_custom_call.1} parent=1 // pred_region
      _
    $region41: #{tpu_custom_call.1} parent=1 // pred_fallthru
      _
    // Predicated region
    $region42: #{tpu_custom_call.1} parent=1 // pred_check
      _
    $region43: #{tpu_custom_call.1} parent=1 // pred_check_branch
      %48 = sbr.rel (0) target = $region45
    $region44: #{tpu_custom_call.1} parent=1 // pred_region
      _
    $region45: #{tpu_custom_call.1} parent=1 // pred_fallthru
      _
    %v49 = vlaneseq
    %v50 = vand.u32 %v49, 127
    %vm51 = vcmp.lt.s32.totalorder %v50, 16
    %v52 = vld [vmem:[%s2] sm:$0xff]
    %v53 = vld [vmem:[%s2 + $0x8] sm:$0xff]
    %v54 = vld [vmem:[%s2 + $0x10] sm:$0xff]
    %v55 = vld [vmem:[%s2 + $0x18] sm:$0xff]
    %v56 = vld [vmem:[%s2 + $0x20] sm:$0xff]
    %v57 = vld [vmem:[%s2 + $0x28] sm:$0xff]
    %v58 = vld [vmem:[%s2 + $0x30] sm:$0xff]
    %v59 = vld [vmem:[%s2 + $0x38] sm:$0xff]
    %v60 = vld [vmem:[%s2 + $0x40] sm:$0xff]
    %v61 = vld [vmem:[%s2 + $0x48] sm:$0xff]
    %v62 = vld [vmem:[%s2 + $0x50] sm:$0xff]
    %v63 = vld [vmem:[%s2 + $0x58] sm:$0xff]
    %v64 = vld [vmem:[%s2 + $0x60] sm:$0xf]
    %v65 = vld [vmem:[%s4] sm:$0xff]
    %v66 = vld [vmem:[%s4 + $0x8] sm:$0xff]
    %v67 = vld [vmem:[%s4 + $0x10] sm:$0xff]
    %v68 = vld [vmem:[%s4 + $0x18] sm:$0xff]
    %v69 = vld [vmem:[%s4 + $0x20] sm:$0xff]
    %v70 = vld [vmem:[%s4 + $0x28] sm:$0xff]
    %v71 = vld [vmem:[%s4 + $0x30] sm:$0xff]
    %v72 = vld [vmem:[%s4 + $0x38] sm:$0xff]
    %v73 = vld [vmem:[%s4 + $0x40] sm:$0xff]
    %v74 = vld [vmem:[%s4 + $0x48] sm:$0xff]
    %v75 = vld [vmem:[%s4 + $0x50] sm:$0xff]
    %v76 = vld [vmem:[%s4 + $0x58] sm:$0xff]
    %v77 = vld [vmem:[%s4 + $0x60] sm:$0xff]
    %v78 = vld [vmem:[%s4 + $0x68] sm:$0xff]
    %v79 = vld [vmem:[%s4 + $0x70] sm:$0xff]
    %v80 = vld [vmem:[%s4 + $0x78] sm:$0xff]
    %v81 = vld [vmem:[%s4 + $0x80] sm:$0xff]
    %v82 = vld [vmem:[%s4 + $0x88] sm:$0xff]
    %v83 = vld [vmem:[%s4 + $0x90] sm:$0xff]
    %v84 = vld [vmem:[%s4 + $0x98] sm:$0xff]
    %v85 = vld [vmem:[%s4 + $0xa0] sm:$0xff]
    %v86 = vld [vmem:[%s4 + $0xa8] sm:$0xff]
    %v87 = vld [vmem:[%s4 + $0xb0] sm:$0xff]
    %v88 = vld [vmem:[%s4 + $0xb8] sm:$0xff]
    %v89 = vld [vmem:[%s4 + $0xc0] sm:$0xff]
    %v90 = vld [vmem:[%s4 + $0xc8] sm:$0xff]
    %v91 = vld [vmem:[%s4 + $0xd0] sm:$0xff]
    %v92 = vld [vmem:[%s4 + $0xd8] sm:$0xff]
    %v93 = vld [vmem:[%s4 + $0xe0] sm:$0xff]
    %v94 = vld [vmem:[%s4 + $0xe8] sm:$0xff]
    %v95 = vld [vmem:[%s4 + $0xf0] sm:$0xff]
    %v96 = vld [vmem:[%s4 + $0xf8] sm:$0xff]
    %v97 = vld [vmem:[%s4 + $0x100] sm:$0xff]
    %v98 = vld [vmem:[%s4 + $0x108] sm:$0xff]
    %v99 = vld [vmem:[%s4 + $0x110] sm:$0xff]
    %v100 = vld [vmem:[%s4 + $0x118] sm:$0xff]
    %v101 = vld [vmem:[%s4 + $0x120] sm:$0xf]
    %v102 = vld [vmem:[%s4 + $0x128] sm:$0xf]
    %v103 = vld [vmem:[%s4 + $0x130] sm:$0xf]
    %v104 = vld [vmem:[%s3] sm:$0xff]
    %v105 = vld [vmem:[%s3 + $0x8] sm:$0xff]
    %v106 = vld [vmem:[%s3 + $0x10] sm:$0xff]
    %v107 = vld [vmem:[%s3 + $0x18] sm:$0xff]
    %v108 = vld [vmem:[%s3 + $0x20] sm:$0xff]
    %v109 = vld [vmem:[%s3 + $0x28] sm:$0xff]
    %v110 = vld [vmem:[%s3 + $0x30] sm:$0xff]
    %v111 = vld [vmem:[%s3 + $0x38] sm:$0xff]
    %v112 = vld [vmem:[%s3 + $0x40] sm:$0xff]
    %v113 = vld [vmem:[%s3 + $0x48] sm:$0xff]
    %v114 = vld [vmem:[%s3 + $0x50] sm:$0xff]
    %v115 = vld [vmem:[%s3 + $0x58] sm:$0xff]
    %v116 = vld [vmem:[%s3 + $0x60] sm:$0xf]
    %v117 = vld [vmem:[%s5] sm:$0xff]
    %v118 = vld [vmem:[%s5 + $0x8] sm:$0xff]
    %v119 = vld [vmem:[%s5 + $0x10] sm:$0xff]
    %v120 = vld [vmem:[%s5 + $0x18] sm:$0xff]
    %v121 = vld [vmem:[%s5 + $0x20] sm:$0xff]
    %v122 = vld [vmem:[%s5 + $0x28] sm:$0xff]
    %v123 = vld [vmem:[%s5 + $0x30] sm:$0xff]
    %v124 = vld [vmem:[%s5 + $0x38] sm:$0xff]
    %v125 = vld [vmem:[%s5 + $0x40] sm:$0xff]
    %v126 = vld [vmem:[%s5 + $0x48] sm:$0xff]
    %v127 = vld [vmem:[%s5 + $0x50] sm:$0xff]
    %v128 = vld [vmem:[%s5 + $0x58] sm:$0xff]
    %v129 = vld [vmem:[%s5 + $0x60] sm:$0xf]
    %s130 = smul.u32 0, 2
    loop: start=0, step=1, limit=16
    $region46: #{tpu_custom_call.1} parent=1 // loop_pre_header
      _
    $region47: #{tpu_custom_call.1} parent=1 // loop_header
      %s132 = sphi 0, %s136
      %p133 = scmp.ge.s32.totalorder %s132, 16
    $region48: #{tpu_custom_call.1} parent=1 // loop_header_branch
      %135 = sbr.rel (%p133) target = $region52
    $region49: #{tpu_custom_call.1} parent=1 // loop_body
      %s137 = sshra.s32 %s132, 7
      %s138 = sand.u32 %s132, 127
      %s139 = sadd.s32 %s137, %s130
      %s140 = smul.u32 %s139, 128
      %s141 = sshra.s32 %s132, 7
      %s142 = sand.u32 %s132, 127
      %s143 = sadd.s32 %s140, %s142
      %s144 = sld [smem:[#allocation5 + %s143]]
      %s145 = scalar_lea.vmem %s1, %s144
      %s146 = scalar_lea.vmem [#allocation2], %s132
      %p148 = scmp.lt.u32.totalorder 1, 8
      %p149 = pneg %p148
      // Predicated region
      $region53: #{tpu_custom_call.1} parent=49 // pred_check
        _
      $region54: #{tpu_custom_call.1} parent=49 // pred_check_branch
        %151 = sbr.rel (%p148) target = $region56
      $region55: #{tpu_custom_call.1} parent=49 // pred_region
        %s166 = sand.u32 1, 7
        %p167 = scmp.eq.s32.totalorder %s166, 0
        %p168 = pneg %p167
        // Predicated region
        $region68: #{tpu_custom_call.1} parent=55 // pred_check
          _
        $region69: #{tpu_custom_call.1} parent=55 // pred_check_branch
          %170 = sbr.rel (%p167) target = $region71
        $region70: #{tpu_custom_call.1} parent=55 // pred_region
          %s171 = sand.u32 1, 7
          %s172 = ssub.s32 1, %s171
          %s173 = scalar_lea.vmem %s145, %s172
          %s174 = ssub.s32 1, %s171
          %s175 = scalar_lea.vmem %s146, %s174 [#allocation2]
          %s176 = sshllo.u32 0, %s171
          loop: start=0, step=1, limit=1
          $region72: #{tpu_custom_call.1} parent=70 // loop_pre_header
            _
          $region73: #{tpu_custom_call.1} parent=70 // loop_header
            %s178 = sphi 0, %s182
            %p179 = scmp.ge.s32.totalorder %s178, 1
            %s183 = sphi %s173, %s173
            %s184 = sphi %s175, %s175
          $region74: #{tpu_custom_call.1} parent=70 // loop_header_branch
            %181 = sbr.rel (%p179) target = $region78
          $region75: #{tpu_custom_call.1} parent=70 // loop_body
            %v185 = vld [vmem:[%s183] sm:%s176]
            %186 = vst [vmem:[%s184] sm:%s176] %v185
          $region76: #{tpu_custom_call.1} parent=70 // loop_footer
            %s182 = sadd.s32 1, %s178
          $region77: #{tpu_custom_call.1} parent=70 // loop_footer_branch
            %177 = sbr.rel target = $region73
          $region78: #{tpu_custom_call.1} parent=70 // loop_exit
            _
        $region71: #{tpu_custom_call.1} parent=55 // pred_fallthru
          _
      $region56: #{tpu_custom_call.1} parent=49 // pred_fallthru
        _
      // Predicated region
      $region57: #{tpu_custom_call.1} parent=49 // pred_check
        %p152 = pneg %p148
      $region58: #{tpu_custom_call.1} parent=49 // pred_check_branch
        %154 = sbr.rel (%p152) target = $region60
      $region59: #{tpu_custom_call.1} parent=49 // pred_region
        %s155 = sshllo.u32 0, 1
        loop: start=0, step=1, limit=1
        $region61: #{tpu_custom_call.1} parent=59 // loop_pre_header
          _
        $region62: #{tpu_custom_call.1} parent=59 // loop_header
          %s157 = sphi 0, %s161
          %p158 = scmp.ge.s32.totalorder %s157, 1
          %s162 = sphi %s145, %s145
          %s163 = sphi %s146, %s146
        $region63: #{tpu_custom_call.1} parent=59 // loop_header_branch
          %160 = sbr.rel (%p158) target = $region67
        $region64: #{tpu_custom_call.1} parent=59 // loop_body
          %v164 = vld [vmem:[%s162] sm:%s155]
          %165 = vst [vmem:[%s163] sm:%s155] %v164
        $region65: #{tpu_custom_call.1} parent=59 // loop_footer
          %s161 = sadd.s32 1, %s157
        $region66: #{tpu_custom_call.1} parent=59 // loop_footer_branch
          %156 = sbr.rel target = $region62
        $region67: #{tpu_custom_call.1} parent=59 // loop_exit
          _
      $region60: #{tpu_custom_call.1} parent=49 // pred_fallthru
        _
      // Predicated region
      $region79: #{tpu_custom_call.1} parent=49 // pred_check
        _
      $region80: #{tpu_custom_call.1} parent=49 // pred_check_branch
        %189 = sbr.rel (0) target = $region82
      $region81: #{tpu_custom_call.1} parent=49 // pred_region
        %190 = vsyncadd [#allocation3], 16
      $region82: #{tpu_custom_call.1} parent=49 // pred_fallthru
        _
    $region50: #{tpu_custom_call.1} parent=1 // loop_footer
      %s136 = sadd.s32 1, %s132
    $region51: #{tpu_custom_call.1} parent=1 // loop_footer_branch
      %131 = sbr.rel target = $region47
    $region52: #{tpu_custom_call.1} parent=1 // loop_exit
      _
    loop: start=0, step=1, limit=16
    $region83: #{tpu_custom_call.1} parent=1 // loop_pre_header
      _
    $region84: #{tpu_custom_call.1} parent=1 // loop_header
      %s192 = sphi 0, %s196
      %p193 = scmp.ge.s32.totalorder %s192, 16
    $region85: #{tpu_custom_call.1} parent=1 // loop_header_branch
      %195 = sbr.rel (%p193) target = $region89
    $region86: #{tpu_custom_call.1} parent=1 // loop_body
      %198 = dma.done [#allocation3], 16
    $region87: #{tpu_custom_call.1} parent=1 // loop_footer
      %s196 = sadd.s32 1, %s192
    $region88: #{tpu_custom_call.1} parent=1 // loop_footer_branch
      %191 = sbr.rel target = $region84
    $region89: #{tpu_custom_call.1} parent=1 // loop_exit
      _
    %v199 = vld [vmem:[#allocation2] sm:$0xff]
    %v200 = vld [vmem:[#allocation2 + $0x8] sm:$0xff]
    %v201 = vld [vmem:[#allocation2 + $0x10] sm:$0xff]
    %v202 = vld [vmem:[#allocation2 + $0x18] sm:$0xff]
    %v203 = vld [vmem:[#allocation2 + $0x20] sm:$0xff]
    %v204 = vld [vmem:[#allocation2 + $0x28] sm:$0xff]
    %v205 = vld [vmem:[#allocation2 + $0x30] sm:$0xff]
    %v206 = vld [vmem:[#allocation2 + $0x38] sm:$0xff]
    %v207 = vld [vmem:[#allocation2 + $0x40] sm:$0xff]
    %v208 = vld [vmem:[#allocation2 + $0x48] sm:$0xff]
    %v209 = vld [vmem:[#allocation2 + $0x50] sm:$0xff]
    %v210 = vld [vmem:[#allocation2 + $0x58] sm:$0xff]
    %v211 = vld [vmem:[#allocation2 + $0x60] sm:$0xff]
    %v212 = vld [vmem:[#allocation2 + $0x68] sm:$0xff]
    %v213 = vld [vmem:[#allocation2 + $0x70] sm:$0xff]
    %v214 = vld [vmem:[#allocation2 + $0x78] sm:$0xff]
    %215 = vxpose.xlu0.b32.start [1/16] %v199, 128
    %216 = vxpose.xlu0.b32.cont [2/16] %v200, 128
    %217 = vxpose.xlu0.b32.cont [3/16] %v201, 128
    %218 = vxpose.xlu0.b32.cont [4/16] %v202, 128
    %219 = vxpose.xlu0.b32.cont [5/16] %v203, 128
    %220 = vxpose.xlu0.b32.cont [6/16] %v204, 128
    %221 = vxpose.xlu0.b32.cont [7/16] %v205, 128
    %222 = vxpose.xlu0.b32.cont [8/16] %v206, 128
    %223 = vxpose.xlu0.b32.cont [9/16] %v207, 128
    %224 = vxpose.xlu0.b32.cont [10/16] %v208, 128
    %225 = vxpose.xlu0.b32.cont [11/16] %v209, 128
    %226 = vxpose.xlu0.b32.cont [12/16] %v210, 128
    %227 = vxpose.xlu0.b32.cont [13/16] %v211, 128
    %228 = vxpose.xlu0.b32.cont [14/16] %v212, 128
    %229 = vxpose.xlu0.b32.cont [15/16] %v213, 128
    %230 = vxpose.xlu0.b32.end [16/16] %v214, 128
    %v231 = vpop.trf.xlu0
    %v232 = vpop.trf.xlu0
    %v233 = vpop.trf.xlu0
    %v234 = vpop.trf.xlu0
    %v235 = vpop.trf.xlu0
    %v236 = vpop.trf.xlu0
    %v237 = vpop.trf.xlu0
    %v238 = vpop.trf.xlu0
    %v239 = vpop.trf.xlu0
    %v240 = vpop.trf.xlu0
    %v241 = vpop.trf.xlu0
    %v242 = vpop.trf.xlu0
    %v243 = vpop.trf.xlu0
    %v244 = vpop.trf.xlu0
    %v245 = vpop.trf.xlu0
    %v246 = vpop.trf.xlu0
    %v247 = vsel %vm51, 1, 0
    %vm248 = vcmp.eq.s32.totalorder %v247, 1
    %v249 = vsel %vm248, %v231, 0.0
    %v250 = vsel %vm248, %v232, 0.0
    %v251 = vsel %vm248, %v233, 0.0
    %v252 = vsel %vm248, %v234, 0.0
    %257 = vrot.lane.b32.xlu0 %v249, 1
    %v258 = vpop.permute.xlu0 %257
    %259 = vrot.lane.b32.xlu0 %v250, 1
    %v260 = vpop.permute.xlu0 %259
    %261 = vrot.lane.b32.xlu0 %v251, 1
    %v262 = vpop.permute.xlu0 %261
    %263 = vrot.lane.b32.xlu0 %v252, 1
    %v264 = vpop.permute.xlu0 %263
    %vm269 = vcmask 7168
    %v270 = vsel %vm269, 0.0, %v258
    %v271 = vsel %vm269, 0.0, %v260
    %v272 = vsel %vm269, 0.0, %v262
    %v273 = vsel %vm269, 0.0, %v264
    %274 = vrot.lane.b32.xlu0 %v249, 127
    %v275 = vpop.permute.xlu0 %274
    %276 = vrot.lane.b32.xlu0 %v250, 127
    %v277 = vpop.permute.xlu0 %276
    %278 = vrot.lane.b32.xlu0 %v251, 127
    %v279 = vpop.permute.xlu0 %278
    %280 = vrot.lane.b32.xlu0 %v252, 127
    %v281 = vpop.permute.xlu0 %280
    %vm286 = vcmask 1039360
    %v287 = vsel %vm286, %v275, 0.0
    %v288 = vsel %vm286, %v277, 0.0
    %v289 = vsel %vm286, %v279, 0.0
    %v290 = vsel %vm286, %v281, 0.0
    %292 = vset.pattern.permute.xlu0 0
    %293 = vperm.xlu0 %292, %v104
    %v294 = vpop.permute.xlu0 %293
    %297 = vset.pattern.permute.xlu0 0
    %298 = vperm.xlu0 %297, %v105
    %v299 = vpop.permute.xlu0 %298
    %302 = vset.pattern.permute.xlu0 0
    %303 = vperm.xlu0 %302, %v106
    %v304 = vpop.permute.xlu0 %303
    %307 = vset.pattern.permute.xlu0 0
    %308 = vperm.xlu0 %307, %v107
    %v309 = vpop.permute.xlu0 %308
    %312 = vset.pattern.permute.xlu0 0
    %313 = vperm.xlu0 %312, %v108
    %v314 = vpop.permute.xlu0 %313
    %317 = vset.pattern.permute.xlu0 0
    %318 = vperm.xlu0 %317, %v109
    %v319 = vpop.permute.xlu0 %318
    %322 = vset.pattern.permute.xlu0 0
    %323 = vperm.xlu0 %322, %v110
    %v324 = vpop.permute.xlu0 %323
    %327 = vset.pattern.permute.xlu0 0
    %328 = vperm.xlu0 %327, %v111
    %v329 = vpop.permute.xlu0 %328
    %332 = vset.pattern.permute.xlu0 0
    %333 = vperm.xlu0 %332, %v112
    %v334 = vpop.permute.xlu0 %333
    %337 = vset.pattern.permute.xlu0 0
    %338 = vperm.xlu0 %337, %v113
    %v339 = vpop.permute.xlu0 %338
    %342 = vset.pattern.permute.xlu0 0
    %343 = vperm.xlu0 %342, %v114
    %v344 = vpop.permute.xlu0 %343
    %347 = vset.pattern.permute.xlu0 0
    %348 = vperm.xlu0 %347, %v115
    %v349 = vpop.permute.xlu0 %348
    %352 = vset.pattern.permute.xlu0 0
    %353 = vperm.xlu0 %352, %v116
    %v354 = vpop.permute.xlu0 %353
    %vm356 = vcmask 785408
    %v358 = vsel %vm356, %v52, 0
    %v361 = vsel %vm356, %v53, 0
    %v364 = vsel %vm356, %v54, 0
    %v367 = vsel %vm356, %v55, 0
    %v370 = vsel %vm356, %v56, 0
    %v373 = vsel %vm356, %v57, 0
    %v376 = vsel %vm356, %v58, 0
    %v379 = vsel %vm356, %v59, 0
    %v382 = vsel %vm356, %v60, 0
    %v385 = vsel %vm356, %v61, 0
    %v388 = vsel %vm356, %v62, 0
    %v391 = vsel %vm356, %v63, 0
    %v394 = vsel %vm356, %v64, 0
    %396 = vmatprep.subr.mxu0 0.0
    %397 = vmatpush1.msra.mxu0 %v270
    %398 = vmatprep.subr.mxu0 0.0
    %399 = vmatpush1.msra.mxu0 %v271
    %400 = vmatprep.subr.mxu0 0.0
    %401 = vmatpush1.msra.mxu0 %v272
    %402 = vmatprep.subr.mxu0 0.0
    %403 = vmatpush1.msra.mxu0 %v273
    %404 = vmatprep.subr.mxu0 0.0
    %405 = vmatpush1.msra.mxu0 %v249
    %406 = vmatprep.subr.mxu0 0.0
    %407 = vmatpush1.msra.mxu0 %v250
    %408 = vmatprep.subr.mxu0 0.0
    %409 = vmatpush1.msra.mxu0 %v251
    %410 = vmatprep.subr.mxu0 0.0
    %411 = vmatpush1.msra.mxu0 %v252
    %412 = vmatprep.subr.mxu0 0.0
    %413 = vmatpush1.msra.mxu0 %v287
    %414 = vmatprep.subr.mxu0 0.0
    %415 = vmatpush1.msra.mxu0 %v288
    %416 = vmatprep.subr.mxu0 0.0
    %417 = vmatpush1.msra.mxu0 %v289
    %418 = vmatprep.subr.mxu0 0.0
    %419 = vmatpush1.msra.mxu0 %v290
    %420 = vmatprep.subr.mxu0 0.0
    %421 = vmatpush1.msra.mxu0 0.0
    %422 = vmatprep.subr.mxu0 0.0
    %423 = vmatpush1.msra.mxu0 0.0
    %424 = vmatprep.subr.mxu0 0.0
    %425 = vmatpush1.msra.mxu0 0.0
    %426 = vmatprep.subr.mxu0 0.0
    %427 = vmatpush1.msra.mxu0 0.0
    %428 = vmatprep.subr.mxu0 0.0
    %429 = vmatpush1.msra.mxu0 0.0
    %430 = vmatprep.subr.mxu0 0.0
    %431 = vmatpush1.msra.mxu0 0.0
    %432 = vmatprep.subr.mxu0 0.0
    %433 = vmatpush1.msra.mxu0 0.0
    %434 = vmatprep.subr.mxu0 0.0
    %435 = vmatpush1.msra.mxu0 0.0
    %436 = vmatprep.subr.mxu0 0.0
    %437 = vmatpush1.msra.mxu0 0.0
    %438 = vmatprep.subr.mxu0 0.0
    %439 = vmatpush1.msra.mxu0 0.0
    %440 = vmatprep.subr.mxu0 0.0
    %441 = vmatpush1.msra.mxu0 0.0
    %442 = vmatprep.subr.mxu0 0.0
    %443 = vmatpush1.msra.mxu0 0.0
    %444 = vmatprep.subr.mxu0 0.0
    %445 = vmatpush1.msra.mxu0 0.0
    %446 = vmatprep.subr.mxu0 0.0
    %447 = vmatpush1.msra.mxu0 0.0
    %448 = vmatprep.subr.mxu0 0.0
    %449 = vmatpush1.msra.mxu0 0.0
    %450 = vmatprep.subr.mxu0 0.0
    %451 = vmatpush1.msra.mxu0 0.0
    %452 = vmatprep.subr.mxu0 0.0
    %453 = vmatpush1.msra.mxu0 0.0
    %454 = vmatprep.subr.mxu0 0.0
    %455 = vmatpush1.msra.mxu0 0.0
    %456 = vmatprep.subr.mxu0 0.0
    %457 = vmatpush1.msra.mxu0 0.0
    %458 = vmatprep.subr.mxu0 0.0
    %459 = vmatpush1.msra.mxu0 0.0
    %460 = vmatprep.mubr.f32.mxu0 0.0
    %461 = vmatmul.mubr.f32.gmra.mrb[0].mxu0 %v358
    %v462 = vpop.f32.mrb[0].mxu0
    %v463 = vadd.f32 %v294, %v462
    %v464 = vpop.f32.mrb[0].mxu0
    %465 = vmatprep.mubr.f32.mxu0 0.0
    %466 = vmatmul.mubr.f32.gmra.mrb[0].mxu0 %v361
    %v467 = vpop.f32.mrb[0].mxu0
    %v468 = vadd.f32 %v299, %v467
    %v469 = vpop.f32.mrb[0].mxu0
    %470 = vmatprep.mubr.f32.mxu0 0.0
    %471 = vmatmul.mubr.f32.gmra.mrb[0].mxu0 %v364
    %v472 = vpop.f32.mrb[0].mxu0
    %v473 = vadd.f32 %v304, %v472
    %v474 = vpop.f32.mrb[0].mxu0
    %475 = vmatprep.mubr.f32.mxu0 0.0
    %476 = vmatmul.mubr.f32.gmra.mrb[0].mxu0 %v367
    %v477 = vpop.f32.mrb[0].mxu0
    %v478 = vadd.f32 %v309, %v477
    %v479 = vpop.f32.mrb[0].mxu0
    %480 = vmatprep.mubr.f32.mxu0 0.0
    %481 = vmatmul.mubr.f32.gmra.mrb[0].mxu0 %v370
    %v482 = vpop.f32.mrb[0].mxu0
    %v483 = vadd.f32 %v314, %v482
    %v484 = vpop.f32.mrb[0].mxu0
    %485 = vmatprep.mubr.f32.mxu0 0.0
    %486 = vmatmul.mubr.f32.gmra.mrb[0].mxu0 %v373
    %v487 = vpop.f32.mrb[0].mxu0
    %v488 = vadd.f32 %v319, %v487
    %v489 = vpop.f32.mrb[0].mxu0
    %490 = vmatprep.mubr.f32.mxu0 0.0
    %491 = vmatmul.mubr.f32.gmra.mrb[0].mxu0 %v376
    %v492 = vpop.f32.mrb[0].mxu0
    %v493 = vadd.f32 %v324, %v492
    %v494 = vpop.f32.mrb[0].mxu0
    %495 = vmatprep.mubr.f32.mxu0 0.0
    %496 = vmatmul.mubr.f32.gmra.mrb[0].mxu0 %v379
    %v497 = vpop.f32.mrb[0].mxu0
    %v498 = vadd.f32 %v329, %v497
    %v499 = vpop.f32.mrb[0].mxu0
    %500 = vmatprep.mubr.f32.mxu0 0.0
    %501 = vmatmul.mubr.f32.gmra.mrb[0].mxu0 %v382
    %v502 = vpop.f32.mrb[0].mxu0
    %v503 = vadd.f32 %v334, %v502
    %v504 = vpop.f32.mrb[0].mxu0
    %505 = vmatprep.mubr.f32.mxu0 0.0
    %506 = vmatmul.mubr.f32.gmra.mrb[0].mxu0 %v385
    %v507 = vpop.f32.mrb[0].mxu0
    %v508 = vadd.f32 %v339, %v507
    %v509 = vpop.f32.mrb[0].mxu0
    %510 = vmatprep.mubr.f32.mxu0 0.0
    %511 = vmatmul.mubr.f32.gmra.mrb[0].mxu0 %v388
    %v512 = vpop.f32.mrb[0].mxu0
    %v513 = vadd.f32 %v344, %v512
    %v514 = vpop.f32.mrb[0].mxu0
    %515 = vmatprep.mubr.f32.mxu0 0.0
    %516 = vmatmul.mubr.f32.gmra.mrb[0].mxu0 %v391
    %v517 = vpop.f32.mrb[0].mxu0
    %v518 = vadd.f32 %v349, %v517
    %v519 = vpop.f32.mrb[0].mxu0
    %520 = vmatprep.mubr.f32.mxu0 0.0
    %521 = vmatmul.mubr.f32.gmra.mrb[0].mxu0 %v394
    %v522 = vpop.f32.mrb[0].mxu0
    %v523 = vadd.f32 %v354, %v522
    %v524 = vpop.f32.mrb[0].mxu0
    %525 = vdwg.mxu0
    %v526 = vmax.f32 %v463, 0.0
    %v527 = vmax.f32 %v468, 0.0
    %v528 = vmax.f32 %v473, 0.0
    %v529 = vmax.f32 %v478, 0.0
    %v530 = vmax.f32 %v483, 0.0
    %v531 = vmax.f32 %v488, 0.0
    %v532 = vmax.f32 %v493, 0.0
    %v533 = vmax.f32 %v498, 0.0
    %v534 = vmax.f32 %v503, 0.0
    %v535 = vmax.f32 %v508, 0.0
    %v536 = vmax.f32 %v513, 0.0
    %v537 = vmax.f32 %v518, 0.0
    %v538 = vmax.f32 %v523, 0.0
    %v539 = vsel %vm248, %v526, 0.0
    %v540 = vsel %vm248, %v527, 0.0
    %v541 = vsel %vm248, %v528, 0.0
    %v542 = vsel %vm248, %v529, 0.0
    %v543 = vsel %vm248, %v530, 0.0
    %v544 = vsel %vm248, %v531, 0.0
    %v545 = vsel %vm248, %v532, 0.0
    %v546 = vsel %vm248, %v533, 0.0
    %v547 = vsel %vm248, %v534, 0.0
    %v548 = vsel %vm248, %v535, 0.0
    %v549 = vsel %vm248, %v536, 0.0
    %v550 = vsel %vm248, %v537, 0.0
    %v551 = vsel %vm248, %v538, 0.0
    %552 = vmax.xlane.f32.xlu0 %v539
    %v553 = vpop.xlane.xlu0 %552
    %554 = vmax.xlane.f32.xlu0 %v540
    %v555 = vpop.xlane.xlu0 %554
    %556 = vmax.xlane.f32.xlu0 %v541
    %v557 = vpop.xlane.xlu0 %556
    %558 = vmax.xlane.f32.xlu0 %v542
    %v559 = vpop.xlane.xlu0 %558
    %560 = vmax.xlane.f32.xlu0 %v543
    %v561 = vpop.xlane.xlu0 %560
    %562 = vmax.xlane.f32.xlu0 %v544
    %v563 = vpop.xlane.xlu0 %562
    %564 = vmax.xlane.f32.xlu0 %v545
    %v565 = vpop.xlane.xlu0 %564
    %566 = vmax.xlane.f32.xlu0 %v546
    %v567 = vpop.xlane.xlu0 %566
    %568 = vmax.xlane.f32.xlu0 %v547
    %v569 = vpop.xlane.xlu0 %568
    %570 = vmax.xlane.f32.xlu0 %v548
    %v571 = vpop.xlane.xlu0 %570
    %572 = vmax.xlane.f32.xlu0 %v549
    %v573 = vpop.xlane.xlu0 %572
    %574 = vmax.xlane.f32.xlu0 %v550
    %v575 = vpop.xlane.xlu0 %574
    %vm576 = vcmask 1043456
    %v577 = vsel %vm576, %v551, -inf
    %578 = vmax.xlane.f32.xlu0 %v577
    %v579 = vpop.xlane.xlu0 %578
    %v580 = vld [vmem:[%s6] sm:$0xff]
    %v581 = vld [vmem:[%s6 + $0x8] sm:$0xff]
    %v582 = vld [vmem:[%s6 + $0x10] sm:$0xff]
    %v583 = vld [vmem:[%s6 + $0x18] sm:$0xff]
    %v584 = vld [vmem:[%s6 + $0x20] sm:$0xff]
    %v585 = vld [vmem:[%s6 + $0x28] sm:$0xff]
    %v586 = vld [vmem:[%s6 + $0x30] sm:$0xff]
    %v587 = vld [vmem:[%s6 + $0x38] sm:$0xff]
    %v588 = vld [vmem:[%s6 + $0x40] sm:$0xff]
    %v589 = vld [vmem:[%s6 + $0x48] sm:$0xff]
    %v590 = vld [vmem:[%s6 + $0x50] sm:$0xff]
    %v591 = vld [vmem:[%s6 + $0x58] sm:$0xff]
    %v592 = vld [vmem:[%s6 + $0x60] sm:$0xf]
    %v593 = vld [vmem:[%s7] sm:$0xff]
    %v594 = vld [vmem:[%s7 + $0x8] sm:$0xff]
    %v595 = vld [vmem:[%s7 + $0x10] sm:$0xff]
    %v596 = vld [vmem:[%s7 + $0x18] sm:$0xff]
    %v597 = vld [vmem:[%s7 + $0x20] sm:$0xff]
    %v598 = vld [vmem:[%s7 + $0x28] sm:$0xff]
    %v599 = vld [vmem:[%s7 + $0x30] sm:$0xff]
    %v600 = vld [vmem:[%s7 + $0x38] sm:$0xff]
    %v601 = vld [vmem:[%s7 + $0x40] sm:$0xff]
    %v602 = vld [vmem:[%s7 + $0x48] sm:$0xff]
    %v603 = vld [vmem:[%s7 + $0x50] sm:$0xff]
    %v604 = vld [vmem:[%s7 + $0x58] sm:$0xff]
    %v605 = vld [vmem:[%s7 + $0x60] sm:$0xf]
    %vm606 = vcmask 818176
    %v608 = vsel %vm606, %v580, 0
    %v611 = vsel %vm606, %v581, 0
    %v614 = vsel %vm606, %v582, 0
    %v617 = vsel %vm606, %v583, 0
    %v620 = vsel %vm606, %v584, 0
    %v623 = vsel %vm606, %v585, 0
    %v626 = vsel %vm606, %v586, 0
    %v629 = vsel %vm606, %v587, 0
    %v632 = vsel %vm606, %v588, 0
    %v635 = vsel %vm606, %v589, 0
    %v638 = vsel %vm606, %v590, 0
    %v641 = vsel %vm606, %v591, 0
    %v644 = vsel %vm606, %v592, 0
    %v647 = vsel %vm576, %v579, 0
    %649 = vmatprep.subr.mxu0 0.0
    %650 = vmatpush1.msra.mxu0 %v553
    %651 = vmatprep.subr.mxu0 0.0
    %652 = vmatpush1.msra.mxu0 %v555
    %653 = vmatprep.subr.mxu0 0.0
    %654 = vmatpush1.msra.mxu0 %v557
    %655 = vmatprep.subr.mxu0 0.0
    %656 = vmatpush1.msra.mxu0 %v559
    %657 = vmatprep.subr.mxu0 0.0
    %658 = vmatpush1.msra.mxu0 %v561
    %659 = vmatprep.subr.mxu0 0.0
    %660 = vmatpush1.msra.mxu0 %v563
    %661 = vmatprep.subr.mxu0 0.0
    %662 = vmatpush1.msra.mxu0 %v565
    %663 = vmatprep.subr.mxu0 0.0
    %664 = vmatpush1.msra.mxu0 %v567
    %665 = vmatprep.subr.mxu0 0.0
    %666 = vmatpush1.msra.mxu0 %v569
    %667 = vmatprep.subr.mxu0 0.0
    %668 = vmatpush1.msra.mxu0 %v571
    %669 = vmatprep.subr.mxu0 0.0
    %670 = vmatpush1.msra.mxu0 %v573
    %671 = vmatprep.subr.mxu0 0.0
    %672 = vmatpush1.msra.mxu0 %v575
    %673 = vmatprep.subr.mxu0 0.0
    %674 = vmatpush1.msra.mxu0 %v647
    %675 = vmatprep.subr.mxu0 0.0
    %676 = vmatpush1.msra.mxu0 0.0
    %677 = vmatprep.subr.mxu0 0.0
    %678 = vmatpush1.msra.mxu0 0.0
    %679 = vmatprep.subr.mxu0 0.0
    %680 = vmatpush1.msra.mxu0 0.0
    %681 = vmatprep.subr.mxu0 0.0
    %682 = vmatpush1.msra.mxu0 0.0
    %683 = vmatprep.subr.mxu0 0.0
    %684 = vmatpush1.msra.mxu0 0.0
    %685 = vmatprep.subr.mxu0 0.0
    %686 = vmatpush1.msra.mxu0 0.0
    %687 = vmatprep.subr.mxu0 0.0
    %688 = vmatpush1.msra.mxu0 0.0
    %689 = vmatprep.subr.mxu0 0.0
    %690 = vmatpush1.msra.mxu0 0.0
    %691 = vmatprep.subr.mxu0 0.0
    %692 = vmatpush1.msra.mxu0 0.0
    %693 = vmatprep.subr.mxu0 0.0
    %694 = vmatpush1.msra.mxu0 0.0
    %695 = vmatprep.subr.mxu0 0.0
    %696 = vmatpush1.msra.mxu0 0.0
    %697 = vmatprep.subr.mxu0 0.0
    %698 = vmatpush1.msra.mxu0 0.0
    %699 = vmatprep.subr.mxu0 0.0
    %700 = vmatpush1.msra.mxu0 0.0
    %701 = vmatprep.subr.mxu0 0.0
    %702 = vmatpush1.msra.mxu0 0.0
    %703 = vmatprep.subr.mxu0 0.0
    %704 = vmatpush1.msra.mxu0 0.0
    %705 = vmatprep.subr.mxu0 0.0
    %706 = vmatpush1.msra.mxu0 0.0
    %707 = vmatprep.subr.mxu0 0.0
    %708 = vmatpush1.msra.mxu0 0.0
    %709 = vmatprep.subr.mxu0 0.0
    %710 = vmatpush1.msra.mxu0 0.0
    %711 = vmatprep.subr.mxu0 0.0
    %712 = vmatpush1.msra.mxu0 0.0
    %713 = vmatprep.mubr.f32.mxu0 0.0
    %714 = vmatmul.mubr.f32.gmra.mrb[0].mxu0 %v608
    %v715 = vpop.f32.mrb[0].mxu0
    %v716 = vadd.f32 %v593, %v715
    %v717 = vpop.f32.mrb[0].mxu0
    %718 = vmatprep.mubr.f32.mxu0 0.0
    %719 = vmatmul.mubr.f32.gmra.mrb[0].mxu0 %v611
    %v720 = vpop.f32.mrb[0].mxu0
    %v721 = vadd.f32 %v594, %v720
    %v722 = vpop.f32.mrb[0].mxu0
    %723 = vmatprep.mubr.f32.mxu0 0.0
    %724 = vmatmul.mubr.f32.gmra.mrb[0].mxu0 %v614
    %v725 = vpop.f32.mrb[0].mxu0
    %v726 = vadd.f32 %v595, %v725
    %v727 = vpop.f32.mrb[0].mxu0
    %728 = vmatprep.mubr.f32.mxu0 0.0
    %729 = vmatmul.mubr.f32.gmra.mrb[0].mxu0 %v617
    %v730 = vpop.f32.mrb[0].mxu0
    %v731 = vadd.f32 %v596, %v730
    %v732 = vpop.f32.mrb[0].mxu0
    %733 = vmatprep.mubr.f32.mxu0 0.0
    %734 = vmatmul.mubr.f32.gmra.mrb[0].mxu0 %v620
    %v735 = vpop.f32.mrb[0].mxu0
    %v736 = vadd.f32 %v597, %v735
    %v737 = vpop.f32.mrb[0].mxu0
    %738 = vmatprep.mubr.f32.mxu0 0.0
    %739 = vmatmul.mubr.f32.gmra.mrb[0].mxu0 %v623
    %v740 = vpop.f32.mrb[0].mxu0
    %v741 = vadd.f32 %v598, %v740
    %v742 = vpop.f32.mrb[0].mxu0
    %743 = vmatprep.mubr.f32.mxu0 0.0
    %744 = vmatmul.mubr.f32.gmra.mrb[0].mxu0 %v626
    %v745 = vpop.f32.mrb[0].mxu0
    %v746 = vadd.f32 %v599, %v745
    %v747 = vpop.f32.mrb[0].mxu0
    %748 = vmatprep.mubr.f32.mxu0 0.0
    %749 = vmatmul.mubr.f32.gmra.mrb[0].mxu0 %v629
    %v750 = vpop.f32.mrb[0].mxu0
    %v751 = vadd.f32 %v600, %v750
    %v752 = vpop.f32.mrb[0].mxu0
    %753 = vmatprep.mubr.f32.mxu0 0.0
    %754 = vmatmul.mubr.f32.gmra.mrb[0].mxu0 %v632
    %v755 = vpop.f32.mrb[0].mxu0
    %v756 = vadd.f32 %v601, %v755
    %v757 = vpop.f32.mrb[0].mxu0
    %758 = vmatprep.mubr.f32.mxu0 0.0
    %759 = vmatmul.mubr.f32.gmra.mrb[0].mxu0 %v635
    %v760 = vpop.f32.mrb[0].mxu0
    %v761 = vadd.f32 %v602, %v760
    %v762 = vpop.f32.mrb[0].mxu0
    %763 = vmatprep.mubr.f32.mxu0 0.0
    %764 = vmatmul.mubr.f32.gmra.mrb[0].mxu0 %v638
    %v765 = vpop.f32.mrb[0].mxu0
    %v766 = vadd.f32 %v603, %v765
    %v767 = vpop.f32.mrb[0].mxu0
    %768 = vmatprep.mubr.f32.mxu0 0.0
    %769 = vmatmul.mubr.f32.gmra.mrb[0].mxu0 %v641
    %v770 = vpop.f32.mrb[0].mxu0
    %v771 = vadd.f32 %v604, %v770
    %v772 = vpop.f32.mrb[0].mxu0
    %773 = vmatprep.mubr.f32.mxu0 0.0
    %774 = vmatmul.mubr.f32.gmra.mrb[0].mxu0 %v644
    %v775 = vpop.f32.mrb[0].mxu0
    %v776 = vadd.f32 %v605, %v775
    %v777 = vpop.f32.mrb[0].mxu0
    %778 = vdwg.mxu0
    %792 = vrot.lane.b32.xlu0 %v539, 1
    %v793 = vpop.permute.xlu0 %792
    %794 = vrot.lane.b32.xlu0 %v540, 1
    %v795 = vpop.permute.xlu0 %794
    %796 = vrot.lane.b32.xlu0 %v541, 1
    %v797 = vpop.permute.xlu0 %796
    %798 = vrot.lane.b32.xlu0 %v542, 1
    %v799 = vpop.permute.xlu0 %798
    %800 = vrot.lane.b32.xlu0 %v543, 1
    %v801 = vpop.permute.xlu0 %800
    %802 = vrot.lane.b32.xlu0 %v544, 1
    %v803 = vpop.permute.xlu0 %802
    %804 = vrot.lane.b32.xlu0 %v545, 1
    %v805 = vpop.permute.xlu0 %804
    %806 = vrot.lane.b32.xlu0 %v546, 1
    %v807 = vpop.permute.xlu0 %806
    %808 = vrot.lane.b32.xlu0 %v547, 1
    %v809 = vpop.permute.xlu0 %808
    %810 = vrot.lane.b32.xlu0 %v548, 1
    %v811 = vpop.permute.xlu0 %810
    %812 = vrot.lane.b32.xlu0 %v549, 1
    %v813 = vpop.permute.xlu0 %812
    %814 = vrot.lane.b32.xlu0 %v550, 1
    %v815 = vpop.permute.xlu0 %814
    %816 = vrot.lane.b32.xlu0 %v551, 1
    %v817 = vpop.permute.xlu0 %816
    %v831 = vsel %vm269, 0.0, %v793
    %v832 = vsel %vm269, 0.0, %v795
    %v833 = vsel %vm269, 0.0, %v797
    %v834 = vsel %vm269, 0.0, %v799
    %v835 = vsel %vm269, 0.0, %v801
    %v836 = vsel %vm269, 0.0, %v803
    %v837 = vsel %vm269, 0.0, %v805
    %v838 = vsel %vm269, 0.0, %v807
    %v839 = vsel %vm269, 0.0, %v809
    %v840 = vsel %vm269, 0.0, %v811
    %v841 = vsel %vm269, 0.0, %v813
    %v842 = vsel %vm269, 0.0, %v815
    %v843 = vsel %vm269, 0.0, %v817
    %844 = vrot.lane.b32.xlu0 %v539, 127
    %v845 = vpop.permute.xlu0 %844
    %846 = vrot.lane.b32.xlu0 %v540, 127
    %v847 = vpop.permute.xlu0 %846
    %848 = vrot.lane.b32.xlu0 %v541, 127
    %v849 = vpop.permute.xlu0 %848
    %850 = vrot.lane.b32.xlu0 %v542, 127
    %v851 = vpop.permute.xlu0 %850
    %852 = vrot.lane.b32.xlu0 %v543, 127
    %v853 = vpop.permute.xlu0 %852
    %854 = vrot.lane.b32.xlu0 %v544, 127
    %v855 = vpop.permute.xlu0 %854
    %856 = vrot.lane.b32.xlu0 %v545, 127
    %v857 = vpop.permute.xlu0 %856
    %858 = vrot.lane.b32.xlu0 %v546, 127
    %v859 = vpop.permute.xlu0 %858
    %860 = vrot.lane.b32.xlu0 %v547, 127
    %v861 = vpop.permute.xlu0 %860
    %862 = vrot.lane.b32.xlu0 %v548, 127
    %v863 = vpop.permute.xlu0 %862
    %864 = vrot.lane.b32.xlu0 %v549, 127
    %v865 = vpop.permute.xlu0 %864
    %866 = vrot.lane.b32.xlu0 %v550, 127
    %v867 = vpop.permute.xlu0 %866
    %868 = vrot.lane.b32.xlu0 %v551, 127
    %v869 = vpop.permute.xlu0 %868
    %v883 = vsel %vm286, %v845, 0.0
    %v884 = vsel %vm286, %v847, 0.0
    %v885 = vsel %vm286, %v849, 0.0
    %v886 = vsel %vm286, %v851, 0.0
    %v887 = vsel %vm286, %v853, 0.0
    %v888 = vsel %vm286, %v855, 0.0
    %v889 = vsel %vm286, %v857, 0.0
    %v890 = vsel %vm286, %v859, 0.0
    %v891 = vsel %vm286, %v861, 0.0
    %v892 = vsel %vm286, %v863, 0.0
    %v893 = vsel %vm286, %v865, 0.0
    %v894 = vsel %vm286, %v867, 0.0
    %v895 = vsel %vm286, %v869, 0.0
    %v896 = vrot.slane %v539, 4
    %v897 = vrot.slane %v540, 4
    %v898 = vsel %vm576, %v896, %v897
    %v899 = vrot.slane %v541, 4
    %v900 = vsel %vm576, %v897, %v899
    %v901 = vrot.slane %v542, 4
    %v902 = vsel %vm576, %v899, %v901
    %v903 = vrot.slane %v543, 4
    %v904 = vsel %vm576, %v901, %v903
    %v905 = vrot.slane %v544, 4
    %v906 = vsel %vm576, %v903, %v905
    %v907 = vrot.slane %v545, 4
    %v908 = vsel %vm576, %v905, %v907
    %v909 = vrot.slane %v546, 4
    %v910 = vsel %vm576, %v907, %v909
    %v911 = vrot.slane %v547, 4
    %v912 = vsel %vm576, %v909, %v911
    %v913 = vrot.slane %v548, 4
    %v914 = vsel %vm576, %v911, %v913
    %v915 = vrot.slane %v549, 4
    %v916 = vsel %vm576, %v913, %v915
    %v917 = vrot.slane %v550, 4
    %v918 = vsel %vm576, %v915, %v917
    %v919 = vrot.slane %v551, 4
    %v920 = vsel %vm576, %v917, %v919
    %v934 = vsel %vm576, %v843, %v896
    %936 = vset.pattern.permute.xlu0 0
    %937 = vperm.xlu0 %936, %v117
    %v938 = vpop.permute.xlu0 %937
    %941 = vset.pattern.permute.xlu0 0
    %942 = vperm.xlu0 %941, %v118
    %v943 = vpop.permute.xlu0 %942
    %946 = vset.pattern.permute.xlu0 0
    %947 = vperm.xlu0 %946, %v119
    %v948 = vpop.permute.xlu0 %947
    %951 = vset.pattern.permute.xlu0 0
    %952 = vperm.xlu0 %951, %v120
    %v953 = vpop.permute.xlu0 %952
    %956 = vset.pattern.permute.xlu0 0
    %957 = vperm.xlu0 %956, %v121
    %v958 = vpop.permute.xlu0 %957
    %961 = vset.pattern.permute.xlu0 0
    %962 = vperm.xlu0 %961, %v122
    %v963 = vpop.permute.xlu0 %962
    %966 = vset.pattern.permute.xlu0 0
    %967 = vperm.xlu0 %966, %v123
    %v968 = vpop.permute.xlu0 %967
    %971 = vset.pattern.permute.xlu0 0
    %972 = vperm.xlu0 %971, %v124
    %v973 = vpop.permute.xlu0 %972
    %976 = vset.pattern.permute.xlu0 0
    %977 = vperm.xlu0 %976, %v125
    %v978 = vpop.permute.xlu0 %977
    %981 = vset.pattern.permute.xlu0 0
    %982 = vperm.xlu0 %981, %v126
    %v983 = vpop.permute.xlu0 %982
    %986 = vset.pattern.permute.xlu0 0
    %987 = vperm.xlu0 %986, %v127
    %v988 = vpop.permute.xlu0 %987
    %991 = vset.pattern.permute.xlu0 0
    %992 = vperm.xlu0 %991, %v128
    %v993 = vpop.permute.xlu0 %992
    %996 = vset.pattern.permute.xlu0 0
    %997 = vperm.xlu0 %996, %v129
    %v998 = vpop.permute.xlu0 %997
    %vm1000 = vcmask 359424
    %v1002 = vsel %vm1000, %v67, 0
    %v1005 = vsel %vm1000, %v70, 0
    %v1008 = vsel %vm1000, %v73, 0
    %v1011 = vsel %vm1000, %v76, 0
    %v1014 = vsel %vm1000, %v79, 0
    %v1017 = vsel %vm1000, %v82, 0
    %v1020 = vsel %vm1000, %v85, 0
    %v1023 = vsel %vm1000, %v88, 0
    %v1026 = vsel %vm1000, %v91, 0
    %v1029 = vsel %vm1000, %v94, 0
    %v1032 = vsel %vm1000, %v97, 0
    %v1035 = vsel %vm1000, %v100, 0
    %v1038 = vsel %vm1000, %v103, 0
    %v1041 = vsel %vm576, %v895, 0
    %1043 = vmatprep.subr.mxu0 0.0
    %1044 = vmatpush1.msra.mxu0 %v831
    %1045 = vmatprep.subr.mxu0 0.0
    %1046 = vmatpush1.msra.mxu0 %v832
    %1047 = vmatprep.subr.mxu0 0.0
    %1048 = vmatpush1.msra.mxu0 %v833
    %1049 = vmatprep.subr.mxu0 0.0
    %1050 = vmatpush1.msra.mxu0 %v834
    %1051 = vmatprep.subr.mxu0 0.0
    %1052 = vmatpush1.msra.mxu0 %v835
    %1053 = vmatprep.subr.mxu0 0.0
    %1054 = vmatpush1.msra.mxu0 %v836
    %1055 = vmatprep.subr.mxu0 0.0
    %1056 = vmatpush1.msra.mxu0 %v837
    %1057 = vmatprep.subr.mxu0 0.0
    %1058 = vmatpush1.msra.mxu0 %v838
    %1059 = vmatprep.subr.mxu0 0.0
    %1060 = vmatpush1.msra.mxu0 %v839
    %1061 = vmatprep.subr.mxu0 0.0
    %1062 = vmatpush1.msra.mxu0 %v840
    %1063 = vmatprep.subr.mxu0 0.0
    %1064 = vmatpush1.msra.mxu0 %v841
    %1065 = vmatprep.subr.mxu0 0.0
    %1066 = vmatpush1.msra.mxu0 %v842
    %1067 = vmatprep.subr.mxu0 0.0
    %1068 = vmatpush1.msra.mxu0 %v934
    %1069 = vmatprep.subr.mxu0 0.0
    %1070 = vmatpush1.msra.mxu0 %v898
    %1071 = vmatprep.subr.mxu0 0.0
    %1072 = vmatpush1.msra.mxu0 %v900
    %1073 = vmatprep.subr.mxu0 0.0
    %1074 = vmatpush1.msra.mxu0 %v902
    %1075 = vmatprep.subr.mxu0 0.0
    %1076 = vmatpush1.msra.mxu0 %v904
    %1077 = vmatprep.subr.mxu0 0.0
    %1078 = vmatpush1.msra.mxu0 %v906
    %1079 = vmatprep.subr.mxu0 0.0
    %1080 = vmatpush1.msra.mxu0 %v908
    %1081 = vmatprep.subr.mxu0 0.0
    %1082 = vmatpush1.msra.mxu0 %v910
    %1083 = vmatprep.subr.mxu0 0.0
    %1084 = vmatpush1.msra.mxu0 %v912
    %1085 = vmatprep.subr.mxu0 0.0
    %1086 = vmatpush1.msra.mxu0 %v914
    %1087 = vmatprep.subr.mxu0 0.0
    %1088 = vmatpush1.msra.mxu0 %v916
    %1089 = vmatprep.subr.mxu0 0.0
    %1090 = vmatpush1.msra.mxu0 %v918
    %1091 = vmatprep.subr.mxu0 0.0
    %1092 = vmatpush1.msra.mxu0 %v920
    %1093 = vmatprep.subr.mxu0 0.0
    %1094 = vmatpush1.msra.mxu0 %v883
    %1095 = vmatprep.subr.mxu0 0.0
    %1096 = vmatpush1.msra.mxu0 %v884
    %1097 = vmatprep.subr.mxu0 0.0
    %1098 = vmatpush1.msra.mxu0 %v885
    %1099 = vmatprep.subr.mxu0 0.0
    %1100 = vmatpush1.msra.mxu0 %v886
    %1101 = vmatprep.subr.mxu0 0.0
    %1102 = vmatpush1.msra.mxu0 %v887
    %1103 = vmatprep.subr.mxu0 0.0
    %1104 = vmatpush1.msra.mxu0 %v888
    %1105 = vmatprep.subr.mxu0 0.0
    %1106 = vmatpush1.msra.mxu0 %v889
    %1107 = vmatprep.mubr.f32.mxu0 %v66
    %1108 = vmatmul.mubr.f32.gmra.mrb[0].mxu0 %v65
    %v1109 = vpop.f32.mrb[0].mxu0
    %v1110 = vadd.f32 %v938, %v1109
    %v1111 = vpop.f32.mrb[0].mxu0
    %1112 = vmatprep.mubr.f32.mxu0 %v69
    %1113 = vmatmul.mubr.f32.gmra.mrb[0].mxu0 %v68
    %v1114 = vpop.f32.mrb[0].mxu0
    %v1115 = vadd.f32 %v943, %v1114
    %v1116 = vpop.f32.mrb[0].mxu0
    %1117 = vmatprep.mubr.f32.mxu0 %v72
    %1118 = vmatmul.mubr.f32.gmra.mrb[0].mxu0 %v71
    %v1119 = vpop.f32.mrb[0].mxu0
    %v1120 = vadd.f32 %v948, %v1119
    %v1121 = vpop.f32.mrb[0].mxu0
    %1122 = vmatprep.mubr.f32.mxu0 %v75
    %1123 = vmatmul.mubr.f32.gmra.mrb[0].mxu0 %v74
    %v1124 = vpop.f32.mrb[0].mxu0
    %v1125 = vadd.f32 %v953, %v1124
    %v1126 = vpop.f32.mrb[0].mxu0
    %1127 = vmatprep.mubr.f32.mxu0 %v78
    %1128 = vmatmul.mubr.f32.gmra.mrb[0].mxu0 %v77
    %v1129 = vpop.f32.mrb[0].mxu0
    %v1130 = vadd.f32 %v958, %v1129
    %v1131 = vpop.f32.mrb[0].mxu0
    %1132 = vmatprep.mubr.f32.mxu0 %v81
    %1133 = vmatmul.mubr.f32.gmra.mrb[0].mxu0 %v80
    %v1134 = vpop.f32.mrb[0].mxu0
    %v1135 = vadd.f32 %v963, %v1134
    %v1136 = vpop.f32.mrb[0].mxu0
    %1137 = vmatprep.mubr.f32.mxu0 %v84
    %1138 = vmatmul.mubr.f32.gmra.mrb[0].mxu0 %v83
    %v1139 = vpop.f32.mrb[0].mxu0
    %v1140 = vadd.f32 %v968, %v1139
    %v1141 = vpop.f32.mrb[0].mxu0
    %1142 = vmatprep.mubr.f32.mxu0 %v87
    %1143 = vmatmul.mubr.f32.gmra.mrb[0].mxu0 %v86
    %v1144 = vpop.f32.mrb[0].mxu0
    %v1145 = vadd.f32 %v973, %v1144
    %v1146 = vpop.f32.mrb[0].mxu0
    %1147 = vmatprep.mubr.f32.mxu0 %v90
    %1148 = vmatmul.mubr.f32.gmra.mrb[0].mxu0 %v89
    %v1149 = vpop.f32.mrb[0].mxu0
    %v1150 = vadd.f32 %v978, %v1149
    %v1151 = vpop.f32.mrb[0].mxu0
    %1152 = vmatprep.mubr.f32.mxu0 %v93
    %1153 = vmatmul.mubr.f32.gmra.mrb[0].mxu0 %v92
    %v1154 = vpop.f32.mrb[0].mxu0
    %v1155 = vadd.f32 %v983, %v1154
    %v1156 = vpop.f32.mrb[0].mxu0
    %1157 = vmatprep.mubr.f32.mxu0 %v96
    %1158 = vmatmul.mubr.f32.gmra.mrb[0].mxu0 %v95
    %v1159 = vpop.f32.mrb[0].mxu0
    %v1160 = vadd.f32 %v988, %v1159
    %v1161 = vpop.f32.mrb[0].mxu0
    %1162 = vmatprep.mubr.f32.mxu0 %v99
    %1163 = vmatmul.mubr.f32.gmra.mrb[0].mxu0 %v98
    %v1164 = vpop.f32.mrb[0].mxu0
    %v1165 = vadd.f32 %v993, %v1164
    %v1166 = vpop.f32.mrb[0].mxu0
    %1167 = vmatprep.mubr.f32.mxu0 %v102
    %1168 = vmatmul.mubr.f32.gmra.mrb[0].mxu0 %v101
    %v1169 = vpop.f32.mrb[0].mxu0
    %v1170 = vadd.f32 %v998, %v1169
    %v1171 = vpop.f32.mrb[0].mxu0
    %1172 = vdwg.mxu0
    %1173 = vmatprep.subr.mxu0 0.0
    %1174 = vmatpush1.msra.mxu0 %v890
    %1175 = vmatprep.subr.mxu0 0.0
    %1176 = vmatpush1.msra.mxu0 %v891
    %1177 = vmatprep.subr.mxu0 0.0
    %1178 = vmatpush1.msra.mxu0 %v892
    %1179 = vmatprep.subr.mxu0 0.0
    %1180 = vmatpush1.msra.mxu0 %v893
    %1181 = vmatprep.subr.mxu0 0.0
    %1182 = vmatpush1.msra.mxu0 %v894
    %1183 = vmatprep.subr.mxu0 0.0
    %1184 = vmatpush1.msra.mxu0 %v1041
    %1185 = vmatprep.subr.mxu0 0.0
    %1186 = vmatpush1.msra.mxu0 0.0
    %1187 = vmatprep.subr.mxu0 0.0
    %1188 = vmatpush1.msra.mxu0 0.0
    %1189 = vmatprep.subr.mxu0 0.0
    %1190 = vmatpush1.msra.mxu0 0.0
    %1191 = vmatprep.subr.mxu0 0.0
    %1192 = vmatpush1.msra.mxu0 0.0
    %1193 = vmatprep.subr.mxu0 0.0
    %1194 = vmatpush1.msra.mxu0 0.0
    %1195 = vmatprep.subr.mxu0 0.0
    %1196 = vmatpush1.msra.mxu0 0.0
    %1197 = vmatprep.subr.mxu0 0.0
    %1198 = vmatpush1.msra.mxu0 0.0
    %1199 = vmatprep.subr.mxu0 0.0
    %1200 = vmatpush1.msra.mxu0 0.0
    %1201 = vmatprep.subr.mxu0 0.0
    %1202 = vmatpush1.msra.mxu0 0.0
    %1203 = vmatprep.subr.mxu0 0.0
    %1204 = vmatpush1.msra.mxu0 0.0
    %1205 = vmatprep.subr.mxu0 0.0
    %1206 = vmatpush1.msra.mxu0 0.0
    %1207 = vmatprep.subr.mxu0 0.0
    %1208 = vmatpush1.msra.mxu0 0.0
    %1209 = vmatprep.subr.mxu0 0.0
    %1210 = vmatpush1.msra.mxu0 0.0
    %1211 = vmatprep.subr.mxu0 0.0
    %1212 = vmatpush1.msra.mxu0 0.0
    %1213 = vmatprep.subr.mxu0 0.0
    %1214 = vmatpush1.msra.mxu0 0.0
    %1215 = vmatprep.subr.mxu0 0.0
    %1216 = vmatpush1.msra.mxu0 0.0
    %1217 = vmatprep.subr.mxu0 0.0
    %1218 = vmatpush1.msra.mxu0 0.0
    %1219 = vmatprep.subr.mxu0 0.0
    %1220 = vmatpush1.msra.mxu0 0.0
    %1221 = vmatprep.subr.mxu0 0.0
    %1222 = vmatpush1.msra.mxu0 0.0
    %1223 = vmatprep.subr.mxu0 0.0
    %1224 = vmatpush1.msra.mxu0 0.0
    %1225 = vmatprep.subr.mxu0 0.0
    %1226 = vmatpush1.msra.mxu0 0.0
    %1227 = vmatprep.subr.mxu0 0.0
    %1228 = vmatpush1.msra.mxu0 0.0
    %1229 = vmatprep.subr.mxu0 0.0
    %1230 = vmatpush1.msra.mxu0 0.0
    %1231 = vmatprep.subr.mxu0 0.0
    %1232 = vmatpush1.msra.mxu0 0.0
    %1233 = vmatprep.subr.mxu0 0.0
    %1234 = vmatpush1.msra.mxu0 0.0
    %1235 = vmatprep.subr.mxu0 0.0
    %1236 = vmatpush1.msra.mxu0 0.0
    %1237 = vmatprep.mubr.f32.mxu0 0.0
    %1238 = vmatmul.mubr.f32.gmra.mrb[0].mxu0 %v1002
    %v1239 = vpop.f32.mrb[0].mxu0
    %v1240 = vadd.f32 %v1110, %v1239
    %v1241 = vpop.f32.mrb[0].mxu0
    %1242 = vmatprep.mubr.f32.mxu0 0.0
    %1243 = vmatmul.mubr.f32.gmra.mrb[0].mxu0 %v1005
    %v1244 = vpop.f32.mrb[0].mxu0
    %v1245 = vadd.f32 %v1115, %v1244
    %v1246 = vpop.f32.mrb[0].mxu0
    %1247 = vmatprep.mubr.f32.mxu0 0.0
    %1248 = vmatmul.mubr.f32.gmra.mrb[0].mxu0 %v1008
    %v1249 = vpop.f32.mrb[0].mxu0
    %v1250 = vadd.f32 %v1120, %v1249
    %v1251 = vpop.f32.mrb[0].mxu0
    %1252 = vmatprep.mubr.f32.mxu0 0.0
    %1253 = vmatmul.mubr.f32.gmra.mrb[0].mxu0 %v1011
    %v1254 = vpop.f32.mrb[0].mxu0
    %v1255 = vadd.f32 %v1125, %v1254
    %v1256 = vpop.f32.mrb[0].mxu0
    %1257 = vmatprep.mubr.f32.mxu0 0.0
    %1258 = vmatmul.mubr.f32.gmra.mrb[0].mxu0 %v1014
    %v1259 = vpop.f32.mrb[0].mxu0
    %v1260 = vadd.f32 %v1130, %v1259
    %v1261 = vpop.f32.mrb[0].mxu0
    %1262 = vmatprep.mubr.f32.mxu0 0.0
    %1263 = vmatmul.mubr.f32.gmra.mrb[0].mxu0 %v1017
    %v1264 = vpop.f32.mrb[0].mxu0
    %v1265 = vadd.f32 %v1135, %v1264
    %v1266 = vpop.f32.mrb[0].mxu0
    %1267 = vmatprep.mubr.f32.mxu0 0.0
    %1268 = vmatmul.mubr.f32.gmra.mrb[0].mxu0 %v1020
    %v1269 = vpop.f32.mrb[0].mxu0
    %v1270 = vadd.f32 %v1140, %v1269
    %v1271 = vpop.f32.mrb[0].mxu0
    %1272 = vmatprep.mubr.f32.mxu0 0.0
    %1273 = vmatmul.mubr.f32.gmra.mrb[0].mxu0 %v1023
    %v1274 = vpop.f32.mrb[0].mxu0
    %v1275 = vadd.f32 %v1145, %v1274
    %v1276 = vpop.f32.mrb[0].mxu0
    %1277 = vmatprep.mubr.f32.mxu0 0.0
    %1278 = vmatmul.mubr.f32.gmra.mrb[0].mxu0 %v1026
    %v1279 = vpop.f32.mrb[0].mxu0
    %v1280 = vadd.f32 %v1150, %v1279
    %v1281 = vpop.f32.mrb[0].mxu0
    %1282 = vmatprep.mubr.f32.mxu0 0.0
    %1283 = vmatmul.mubr.f32.gmra.mrb[0].mxu0 %v1029
    %v1284 = vpop.f32.mrb[0].mxu0
    %v1285 = vadd.f32 %v1155, %v1284
    %v1286 = vpop.f32.mrb[0].mxu0
    %1287 = vmatprep.mubr.f32.mxu0 0.0
    %1288 = vmatmul.mubr.f32.gmra.mrb[0].mxu0 %v1032
    %v1289 = vpop.f32.mrb[0].mxu0
    %v1290 = vadd.f32 %v1160, %v1289
    %v1291 = vpop.f32.mrb[0].mxu0
    %1292 = vmatprep.mubr.f32.mxu0 0.0
    %1293 = vmatmul.mubr.f32.gmra.mrb[0].mxu0 %v1035
    %v1294 = vpop.f32.mrb[0].mxu0
    %v1295 = vadd.f32 %v1165, %v1294
    %v1296 = vpop.f32.mrb[0].mxu0
    %1297 = vmatprep.mubr.f32.mxu0 0.0
    %1298 = vmatmul.mubr.f32.gmra.mrb[0].mxu0 %v1038
    %v1299 = vpop.f32.mrb[0].mxu0
    %v1300 = vadd.f32 %v1170, %v1299
    %v1301 = vpop.f32.mrb[0].mxu0
    %1302 = vdwg.mxu0
    %v1303 = vmax.f32 %v1240, 0.0
    %v1304 = vmax.f32 %v1245, 0.0
    %v1305 = vmax.f32 %v1250, 0.0
    %v1306 = vmax.f32 %v1255, 0.0
    %v1307 = vmax.f32 %v1260, 0.0
    %v1308 = vmax.f32 %v1265, 0.0
    %v1309 = vmax.f32 %v1270, 0.0
    %v1310 = vmax.f32 %v1275, 0.0
    %v1311 = vmax.f32 %v1280, 0.0
    %v1312 = vmax.f32 %v1285, 0.0
    %v1313 = vmax.f32 %v1290, 0.0
    %v1314 = vmax.f32 %v1295, 0.0
    %v1315 = vmax.f32 %v1300, 0.0
    %v1316 = vsel %vm248, %v1303, 0.0
    %v1317 = vsel %vm248, %v1304, 0.0
    %v1318 = vsel %vm248, %v1305, 0.0
    %v1319 = vsel %vm248, %v1306, 0.0
    %v1320 = vsel %vm248, %v1307, 0.0
    %v1321 = vsel %vm248, %v1308, 0.0
    %v1322 = vsel %vm248, %v1309, 0.0
    %v1323 = vsel %vm248, %v1310, 0.0
    %v1324 = vsel %vm248, %v1311, 0.0
    %v1325 = vsel %vm248, %v1312, 0.0
    %v1326 = vsel %vm248, %v1313, 0.0
    %v1327 = vsel %vm248, %v1314, 0.0
    %v1328 = vsel %vm248, %v1315, 0.0
    %1342 = vrot.lane.b32.xlu0 %v1316, 1
    %v1343 = vpop.permute.xlu0 %1342
    %1344 = vrot.lane.b32.xlu0 %v1317, 1
    %v1345 = vpop.permute.xlu0 %1344
    %1346 = vrot.lane.b32.xlu0 %v1318, 1
    %v1347 = vpop.permute.xlu0 %1346
    %1348 = vrot.lane.b32.xlu0 %v1319, 1
    %v1349 = vpop.permute.xlu0 %1348
    %1350 = vrot.lane.b32.xlu0 %v1320, 1
    %v1351 = vpop.permute.xlu0 %1350
    %1352 = vrot.lane.b32.xlu0 %v1321, 1
    %v1353 = vpop.permute.xlu0 %1352
    %1354 = vrot.lane.b32.xlu0 %v1322, 1
    %v1355 = vpop.permute.xlu0 %1354
    %1356 = vrot.lane.b32.xlu0 %v1323, 1
    %v1357 = vpop.permute.xlu0 %1356
    %1358 = vrot.lane.b32.xlu0 %v1324, 1
    %v1359 = vpop.permute.xlu0 %1358
    %1360 = vrot.lane.b32.xlu0 %v1325, 1
    %v1361 = vpop.permute.xlu0 %1360
    %1362 = vrot.lane.b32.xlu0 %v1326, 1
    %v1363 = vpop.permute.xlu0 %1362
    %1364 = vrot.lane.b32.xlu0 %v1327, 1
    %v1365 = vpop.permute.xlu0 %1364
    %1366 = vrot.lane.b32.xlu0 %v1328, 1
    %v1367 = vpop.permute.xlu0 %1366
    %v1381 = vsel %vm269, 0.0, %v1343
    %v1382 = vsel %vm269, 0.0, %v1345
    %v1383 = vsel %vm269, 0.0, %v1347
    %v1384 = vsel %vm269, 0.0, %v1349
    %v1385 = vsel %vm269, 0.0, %v1351
    %v1386 = vsel %vm269, 0.0, %v1353
    %v1387 = vsel %vm269, 0.0, %v1355
    %v1388 = vsel %vm269, 0.0, %v1357
    %v1389 = vsel %vm269, 0.0, %v1359
    %v1390 = vsel %vm269, 0.0, %v1361
    %v1391 = vsel %vm269, 0.0, %v1363
    %v1392 = vsel %vm269, 0.0, %v1365
    %v1393 = vsel %vm269, 0.0, %v1367
    %1394 = vrot.lane.b32.xlu0 %v1316, 127
    %v1395 = vpop.permute.xlu0 %1394
    %1396 = vrot.lane.b32.xlu0 %v1317, 127
    %v1397 = vpop.permute.xlu0 %1396
    %1398 = vrot.lane.b32.xlu0 %v1318, 127
    %v1399 = vpop.permute.xlu0 %1398
    %1400 = vrot.lane.b32.xlu0 %v1319, 127
    %v1401 = vpop.permute.xlu0 %1400
    %1402 = vrot.lane.b32.xlu0 %v1320, 127
    %v1403 = vpop.permute.xlu0 %1402
    %1404 = vrot.lane.b32.xlu0 %v1321, 127
    %v1405 = vpop.permute.xlu0 %1404
    %1406 = vrot.lane.b32.xlu0 %v1322, 127
    %v1407 = vpop.permute.xlu0 %1406
    %1408 = vrot.lane.b32.xlu0 %v1323, 127
    %v1409 = vpop.permute.xlu0 %1408
    %1410 = vrot.lane.b32.xlu0 %v1324, 127
    %v1411 = vpop.permute.xlu0 %1410
    %1412 = vrot.lane.b32.xlu0 %v1325, 127
    %v1413 = vpop.permute.xlu0 %1412
    %1414 = vrot.lane.b32.xlu0 %v1326, 127
    %v1415 = vpop.permute.xlu0 %1414
    %1416 = vrot.lane.b32.xlu0 %v1327, 127
    %v1417 = vpop.permute.xlu0 %1416
    %1418 = vrot.lane.b32.xlu0 %v1328, 127
    %v1419 = vpop.permute.xlu0 %1418
    %v1433 = vsel %vm286, %v1395, 0.0
    %v1434 = vsel %vm286, %v1397, 0.0
    %v1435 = vsel %vm286, %v1399, 0.0
    %v1436 = vsel %vm286, %v1401, 0.0
    %v1437 = vsel %vm286, %v1403, 0.0
    %v1438 = vsel %vm286, %v1405, 0.0
    %v1439 = vsel %vm286, %v1407, 0.0
    %v1440 = vsel %vm286, %v1409, 0.0
    %v1441 = vsel %vm286, %v1411, 0.0
    %v1442 = vsel %vm286, %v1413, 0.0
    %v1443 = vsel %vm286, %v1415, 0.0
    %v1444 = vsel %vm286, %v1417, 0.0
    %v1445 = vsel %vm286, %v1419, 0.0
    %v1446 = vrot.slane %v1316, 4
    %v1447 = vrot.slane %v1317, 4
    %v1448 = vsel %vm576, %v1446, %v1447
    %v1449 = vrot.slane %v1318, 4
    %v1450 = vsel %vm576, %v1447, %v1449
    %v1451 = vrot.slane %v1319, 4
    %v1452 = vsel %vm576, %v1449, %v1451
    %v1453 = vrot.slane %v1320, 4
    %v1454 = vsel %vm576, %v1451, %v1453
    %v1455 = vrot.slane %v1321, 4
    %v1456 = vsel %vm576, %v1453, %v1455
    %v1457 = vrot.slane %v1322, 4
    %v1458 = vsel %vm576, %v1455, %v1457
    %v1459 = vrot.slane %v1323, 4
    %v1460 = vsel %vm576, %v1457, %v1459
    %v1461 = vrot.slane %v1324, 4
    %v1462 = vsel %vm576, %v1459, %v1461
    %v1463 = vrot.slane %v1325, 4
    %v1464 = vsel %vm576, %v1461, %v1463
    %v1465 = vrot.slane %v1326, 4
    %v1466 = vsel %vm576, %v1463, %v1465
    %v1467 = vrot.slane %v1327, 4
    %v1468 = vsel %vm576, %v1465, %v1467
    %v1469 = vrot.slane %v1328, 4
    %v1470 = vsel %vm576, %v1467, %v1469
    %v1484 = vsel %vm576, %v1393, %v1446
    %v1486 = vsel %vm576, %v1445, 0
    %1488 = vmatprep.subr.mxu0 0.0
    %1489 = vmatpush1.msra.mxu0 %v1381
    %1490 = vmatprep.subr.mxu0 0.0
    %1491 = vmatpush1.msra.mxu0 %v1382
    %1492 = vmatprep.subr.mxu0 0.0
    %1493 = vmatpush1.msra.mxu0 %v1383
    %1494 = vmatprep.subr.mxu0 0.0
    %1495 = vmatpush1.msra.mxu0 %v1384
    %1496 = vmatprep.subr.mxu0 0.0
    %1497 = vmatpush1.msra.mxu0 %v1385
    %1498 = vmatprep.subr.mxu0 0.0
    %1499 = vmatpush1.msra.mxu0 %v1386
    %1500 = vmatprep.subr.mxu0 0.0
    %1501 = vmatpush1.msra.mxu0 %v1387
    %1502 = vmatprep.subr.mxu0 0.0
    %1503 = vmatpush1.msra.mxu0 %v1388
    %1504 = vmatprep.subr.mxu0 0.0
    %1505 = vmatpush1.msra.mxu0 %v1389
    %1506 = vmatprep.subr.mxu0 0.0
    %1507 = vmatpush1.msra.mxu0 %v1390
    %1508 = vmatprep.subr.mxu0 0.0
    %1509 = vmatpush1.msra.mxu0 %v1391
    %1510 = vmatprep.subr.mxu0 0.0
    %1511 = vmatpush1.msra.mxu0 %v1392
    %1512 = vmatprep.subr.mxu0 0.0
    %1513 = vmatpush1.msra.mxu0 %v1484
    %1514 = vmatprep.subr.mxu0 0.0
    %1515 = vmatpush1.msra.mxu0 %v1448
    %1516 = vmatprep.subr.mxu0 0.0
    %1517 = vmatpush1.msra.mxu0 %v1450
    %1518 = vmatprep.subr.mxu0 0.0
    %1519 = vmatpush1.msra.mxu0 %v1452
    %1520 = vmatprep.subr.mxu0 0.0
    %1521 = vmatpush1.msra.mxu0 %v1454
    %1522 = vmatprep.subr.mxu0 0.0
    %1523 = vmatpush1.msra.mxu0 %v1456
    %1524 = vmatprep.subr.mxu0 0.0
    %1525 = vmatpush1.msra.mxu0 %v1458
    %1526 = vmatprep.subr.mxu0 0.0
    %1527 = vmatpush1.msra.mxu0 %v1460
    %1528 = vmatprep.subr.mxu0 0.0
    %1529 = vmatpush1.msra.mxu0 %v1462
    %1530 = vmatprep.subr.mxu0 0.0
    %1531 = vmatpush1.msra.mxu0 %v1464
    %1532 = vmatprep.subr.mxu0 0.0
    %1533 = vmatpush1.msra.mxu0 %v1466
    %1534 = vmatprep.subr.mxu0 0.0
    %1535 = vmatpush1.msra.mxu0 %v1468
    %1536 = vmatprep.subr.mxu0 0.0
    %1537 = vmatpush1.msra.mxu0 %v1470
    %1538 = vmatprep.subr.mxu0 0.0
    %1539 = vmatpush1.msra.mxu0 %v1433
    %1540 = vmatprep.subr.mxu0 0.0
    %1541 = vmatpush1.msra.mxu0 %v1434
    %1542 = vmatprep.subr.mxu0 0.0
    %1543 = vmatpush1.msra.mxu0 %v1435
    %1544 = vmatprep.subr.mxu0 0.0
    %1545 = vmatpush1.msra.mxu0 %v1436
    %1546 = vmatprep.subr.mxu0 0.0
    %1547 = vmatpush1.msra.mxu0 %v1437
    %1548 = vmatprep.subr.mxu0 0.0
    %1549 = vmatpush1.msra.mxu0 %v1438
    %1550 = vmatprep.subr.mxu0 0.0
    %1551 = vmatpush1.msra.mxu0 %v1439
    %1552 = vmatprep.mubr.f32.mxu0 %v66
    %1553 = vmatmul.mubr.f32.gmra.mrb[0].mxu0 %v65
    %v1554 = vpop.f32.mrb[0].mxu0
    %v1555 = vadd.f32 %v938, %v1554
    %v1556 = vpop.f32.mrb[0].mxu0
    %1557 = vmatprep.mubr.f32.mxu0 %v69
    %1558 = vmatmul.mubr.f32.gmra.mrb[0].mxu0 %v68
    %v1559 = vpop.f32.mrb[0].mxu0
    %v1560 = vadd.f32 %v943, %v1559
    %v1561 = vpop.f32.mrb[0].mxu0
    %1562 = vmatprep.mubr.f32.mxu0 %v72
    %1563 = vmatmul.mubr.f32.gmra.mrb[0].mxu0 %v71
    %v1564 = vpop.f32.mrb[0].mxu0
    %v1565 = vadd.f32 %v948, %v1564
    %v1566 = vpop.f32.mrb[0].mxu0
    %1567 = vmatprep.mubr.f32.mxu0 %v75
    %1568 = vmatmul.mubr.f32.gmra.mrb[0].mxu0 %v74
    %v1569 = vpop.f32.mrb[0].mxu0
    %v1570 = vadd.f32 %v953, %v1569
    %v1571 = vpop.f32.mrb[0].mxu0
    %1572 = vmatprep.mubr.f32.mxu0 %v78
    %1573 = vmatmul.mubr.f32.gmra.mrb[0].mxu0 %v77
    %v1574 = vpop.f32.mrb[0].mxu0
    %v1575 = vadd.f32 %v958, %v1574
    %v1576 = vpop.f32.mrb[0].mxu0
    %1577 = vmatprep.mubr.f32.mxu0 %v81
    %1578 = vmatmul.mubr.f32.gmra.mrb[0].mxu0 %v80
    %v1579 = vpop.f32.mrb[0].mxu0
    %v1580 = vadd.f32 %v963, %v1579
    %v1581 = vpop.f32.mrb[0].mxu0
    %1582 = vmatprep.mubr.f32.mxu0 %v84
    %1583 = vmatmul.mubr.f32.gmra.mrb[0].mxu0 %v83
    %v1584 = vpop.f32.mrb[0].mxu0
    %v1585 = vadd.f32 %v968, %v1584
    %v1586 = vpop.f32.mrb[0].mxu0
    %1587 = vmatprep.mubr.f32.mxu0 %v87
    %1588 = vmatmul.mubr.f32.gmra.mrb[0].mxu0 %v86
    %v1589 = vpop.f32.mrb[0].mxu0
    %v1590 = vadd.f32 %v973, %v1589
    %v1591 = vpop.f32.mrb[0].mxu0
    %1592 = vmatprep.mubr.f32.mxu0 %v90
    %1593 = vmatmul.mubr.f32.gmra.mrb[0].mxu0 %v89
    %v1594 = vpop.f32.mrb[0].mxu0
    %v1595 = vadd.f32 %v978, %v1594
    %v1596 = vpop.f32.mrb[0].mxu0
    %1597 = vmatprep.mubr.f32.mxu0 %v93
    %1598 = vmatmul.mubr.f32.gmra.mrb[0].mxu0 %v92
    %v1599 = vpop.f32.mrb[0].mxu0
    %v1600 = vadd.f32 %v983, %v1599
    %v1601 = vpop.f32.mrb[0].mxu0
    %1602 = vmatprep.mubr.f32.mxu0 %v96
    %1603 = vmatmul.mubr.f32.gmra.mrb[0].mxu0 %v95
    %v1604 = vpop.f32.mrb[0].mxu0
    %v1605 = vadd.f32 %v988, %v1604
    %v1606 = vpop.f32.mrb[0].mxu0
    %1607 = vmatprep.mubr.f32.mxu0 %v99
    %1608 = vmatmul.mubr.f32.gmra.mrb[0].mxu0 %v98
    %v1609 = vpop.f32.mrb[0].mxu0
    %v1610 = vadd.f32 %v993, %v1609
    %v1611 = vpop.f32.mrb[0].mxu0
    %1612 = vmatprep.mubr.f32.mxu0 %v102
    %1613 = vmatmul.mubr.f32.gmra.mrb[0].mxu0 %v101
    %v1614 = vpop.f32.mrb[0].mxu0
    %v1615 = vadd.f32 %v998, %v1614
    %v1616 = vpop.f32.mrb[0].mxu0
    %1617 = vdwg.mxu0
    %1618 = vmatprep.subr.mxu0 0.0
    %1619 = vmatpush1.msra.mxu0 %v1440
    %1620 = vmatprep.subr.mxu0 0.0
    %1621 = vmatpush1.msra.mxu0 %v1441
    %1622 = vmatprep.subr.mxu0 0.0
    %1623 = vmatpush1.msra.mxu0 %v1442
    %1624 = vmatprep.subr.mxu0 0.0
    %1625 = vmatpush1.msra.mxu0 %v1443
    %1626 = vmatprep.subr.mxu0 0.0
    %1627 = vmatpush1.msra.mxu0 %v1444
    %1628 = vmatprep.subr.mxu0 0.0
    %1629 = vmatpush1.msra.mxu0 %v1486
    %1630 = vmatprep.subr.mxu0 0.0
    %1631 = vmatpush1.msra.mxu0 0.0
    %1632 = vmatprep.subr.mxu0 0.0
    %1633 = vmatpush1.msra.mxu0 0.0
    %1634 = vmatprep.subr.mxu0 0.0
    %1635 = vmatpush1.msra.mxu0 0.0
    %1636 = vmatprep.subr.mxu0 0.0
    %1637 = vmatpush1.msra.mxu0 0.0
    %1638 = vmatprep.subr.mxu0 0.0
    %1639 = vmatpush1.msra.mxu0 0.0
    %1640 = vmatprep.subr.mxu0 0.0
    %1641 = vmatpush1.msra.mxu0 0.0
    %1642 = vmatprep.subr.mxu0 0.0
    %1643 = vmatpush1.msra.mxu0 0.0
    %1644 = vmatprep.subr.mxu0 0.0
    %1645 = vmatpush1.msra.mxu0 0.0
    %1646 = vmatprep.subr.mxu0 0.0
    %1647 = vmatpush1.msra.mxu0 0.0
    %1648 = vmatprep.subr.mxu0 0.0
    %1649 = vmatpush1.msra.mxu0 0.0
    %1650 = vmatprep.subr.mxu0 0.0
    %1651 = vmatpush1.msra.mxu0 0.0
    %1652 = vmatprep.subr.mxu0 0.0
    %1653 = vmatpush1.msra.mxu0 0.0
    %1654 = vmatprep.subr.mxu0 0.0
    %1655 = vmatpush1.msra.mxu0 0.0
    %1656 = vmatprep.subr.mxu0 0.0
    %1657 = vmatpush1.msra.mxu0 0.0
    %1658 = vmatprep.subr.mxu0 0.0
    %1659 = vmatpush1.msra.mxu0 0.0
    %1660 = vmatprep.subr.mxu0 0.0
    %1661 = vmatpush1.msra.mxu0 0.0
    %1662 = vmatprep.subr.mxu0 0.0
    %1663 = vmatpush1.msra.mxu0 0.0
    %1664 = vmatprep.subr.mxu0 0.0
    %1665 = vmatpush1.msra.mxu0 0.0
    %1666 = vmatprep.subr.mxu0 0.0
    %1667 = vmatpush1.msra.mxu0 0.0
    %1668 = vmatprep.subr.mxu0 0.0
    %1669 = vmatpush1.msra.mxu0 0.0
    %1670 = vmatprep.subr.mxu0 0.0
    %1671 = vmatpush1.msra.mxu0 0.0
    %1672 = vmatprep.subr.mxu0 0.0
    %1673 = vmatpush1.msra.mxu0 0.0
    %1674 = vmatprep.subr.mxu0 0.0
    %1675 = vmatpush1.msra.mxu0 0.0
    %1676 = vmatprep.subr.mxu0 0.0
    %1677 = vmatpush1.msra.mxu0 0.0
    %1678 = vmatprep.subr.mxu0 0.0
    %1679 = vmatpush1.msra.mxu0 0.0
    %1680 = vmatprep.subr.mxu0 0.0
    %1681 = vmatpush1.msra.mxu0 0.0
    %1682 = vmatprep.mubr.f32.mxu0 0.0
    %1683 = vmatmul.mubr.f32.gmra.mrb[0].mxu0 %v1002
    %v1684 = vpop.f32.mrb[0].mxu0
    %v1685 = vadd.f32 %v1555, %v1684
    %v1686 = vpop.f32.mrb[0].mxu0
    %1687 = vmatprep.mubr.f32.mxu0 0.0
    %1688 = vmatmul.mubr.f32.gmra.mrb[0].mxu0 %v1005
    %v1689 = vpop.f32.mrb[0].mxu0
    %v1690 = vadd.f32 %v1560, %v1689
    %v1691 = vpop.f32.mrb[0].mxu0
    %1692 = vmatprep.mubr.f32.mxu0 0.0
    %1693 = vmatmul.mubr.f32.gmra.mrb[0].mxu0 %v1008
    %v1694 = vpop.f32.mrb[0].mxu0
    %v1695 = vadd.f32 %v1565, %v1694
    %v1696 = vpop.f32.mrb[0].mxu0
    %1697 = vmatprep.mubr.f32.mxu0 0.0
    %1698 = vmatmul.mubr.f32.gmra.mrb[0].mxu0 %v1011
    %v1699 = vpop.f32.mrb[0].mxu0
    %v1700 = vadd.f32 %v1570, %v1699
    %v1701 = vpop.f32.mrb[0].mxu0
    %1702 = vmatprep.mubr.f32.mxu0 0.0
    %1703 = vmatmul.mubr.f32.gmra.mrb[0].mxu0 %v1014
    %v1704 = vpop.f32.mrb[0].mxu0
    %v1705 = vadd.f32 %v1575, %v1704
    %v1706 = vpop.f32.mrb[0].mxu0
    %1707 = vmatprep.mubr.f32.mxu0 0.0
    %1708 = vmatmul.mubr.f32.gmra.mrb[0].mxu0 %v1017
    %v1709 = vpop.f32.mrb[0].mxu0
    %v1710 = vadd.f32 %v1580, %v1709
    %v1711 = vpop.f32.mrb[0].mxu0
    %1712 = vmatprep.mubr.f32.mxu0 0.0
    %1713 = vmatmul.mubr.f32.gmra.mrb[0].mxu0 %v1020
    %v1714 = vpop.f32.mrb[0].mxu0
    %v1715 = vadd.f32 %v1585, %v1714
    %v1716 = vpop.f32.mrb[0].mxu0
    %1717 = vmatprep.mubr.f32.mxu0 0.0
    %1718 = vmatmul.mubr.f32.gmra.mrb[0].mxu0 %v1023
    %v1719 = vpop.f32.mrb[0].mxu0
    %v1720 = vadd.f32 %v1590, %v1719
    %v1721 = vpop.f32.mrb[0].mxu0
    %1722 = vmatprep.mubr.f32.mxu0 0.0
    %1723 = vmatmul.mubr.f32.gmra.mrb[0].mxu0 %v1026
    %v1724 = vpop.f32.mrb[0].mxu0
    %v1725 = vadd.f32 %v1595, %v1724
    %v1726 = vpop.f32.mrb[0].mxu0
    %1727 = vmatprep.mubr.f32.mxu0 0.0
    %1728 = vmatmul.mubr.f32.gmra.mrb[0].mxu0 %v1029
    %v1729 = vpop.f32.mrb[0].mxu0
    %v1730 = vadd.f32 %v1600, %v1729
    %v1731 = vpop.f32.mrb[0].mxu0
    %1732 = vmatprep.mubr.f32.mxu0 0.0
    %1733 = vmatmul.mubr.f32.gmra.mrb[0].mxu0 %v1032
    %v1734 = vpop.f32.mrb[0].mxu0
    %v1735 = vadd.f32 %v1605, %v1734
    %v1736 = vpop.f32.mrb[0].mxu0
    %1737 = vmatprep.mubr.f32.mxu0 0.0
    %1738 = vmatmul.mubr.f32.gmra.mrb[0].mxu0 %v1035
    %v1739 = vpop.f32.mrb[0].mxu0
    %v1740 = vadd.f32 %v1610, %v1739
    %v1741 = vpop.f32.mrb[0].mxu0
    %1742 = vmatprep.mubr.f32.mxu0 0.0
    %1743 = vmatmul.mubr.f32.gmra.mrb[0].mxu0 %v1038
    %v1744 = vpop.f32.mrb[0].mxu0
    %v1745 = vadd.f32 %v1615, %v1744
    %v1746 = vpop.f32.mrb[0].mxu0
    %1747 = vdwg.mxu0
    %v1748 = vmax.f32 %v1685, 0.0
    %v1749 = vmax.f32 %v1690, 0.0
    %v1750 = vmax.f32 %v1695, 0.0
    %v1751 = vmax.f32 %v1700, 0.0
    %v1752 = vmax.f32 %v1705, 0.0
    %v1753 = vmax.f32 %v1710, 0.0
    %v1754 = vmax.f32 %v1715, 0.0
    %v1755 = vmax.f32 %v1720, 0.0
    %v1756 = vmax.f32 %v1725, 0.0
    %v1757 = vmax.f32 %v1730, 0.0
    %v1758 = vmax.f32 %v1735, 0.0
    %v1759 = vmax.f32 %v1740, 0.0
    %v1760 = vmax.f32 %v1745, 0.0
    %v1761 = vld [vmem:[%s8] sm:$0xff]
    %v1762 = vld [vmem:[%s8 + $0x8] sm:$0xff]
    %v1763 = vld [vmem:[%s8 + $0x10] sm:$0xff]
    %v1764 = vld [vmem:[%s8 + $0x18] sm:$0xff]
    %v1765 = vld [vmem:[%s8 + $0x20] sm:$0xff]
    %v1766 = vld [vmem:[%s8 + $0x28] sm:$0xff]
    %v1767 = vld [vmem:[%s8 + $0x30] sm:$0xff]
    %v1768 = vld [vmem:[%s8 + $0x38] sm:$0xff]
    %v1769 = vld [vmem:[%s8 + $0x40] sm:$0xff]
    %v1770 = vld [vmem:[%s8 + $0x48] sm:$0xff]
    %v1771 = vld [vmem:[%s8 + $0x50] sm:$0xff]
    %v1772 = vld [vmem:[%s8 + $0x58] sm:$0xff]
    %v1773 = vld [vmem:[%s8 + $0x60] sm:$0xf]
    %v1775 = vsel %vm606, %v1761, 0
    %v1778 = vsel %vm606, %v1762, 0
    %v1781 = vsel %vm606, %v1763, 0
    %v1784 = vsel %vm606, %v1764, 0
    %v1787 = vsel %vm606, %v1765, 0
    %v1790 = vsel %vm606, %v1766, 0
    %v1793 = vsel %vm606, %v1767, 0
    %v1796 = vsel %vm606, %v1768, 0
    %v1799 = vsel %vm606, %v1769, 0
    %v1802 = vsel %vm606, %v1770, 0
    %v1805 = vsel %vm606, %v1771, 0
    %v1808 = vsel %vm606, %v1772, 0
    %v1811 = vsel %vm606, %v1773, 0
    %v1814 = vsel %vm576, %v776, 0
    %1816 = vmatprep.subr.mxu0 0.0
    %1817 = vmatpush1.msra.mxu0 %v716
    %1818 = vmatprep.subr.mxu0 0.0
    %1819 = vmatpush1.msra.mxu0 %v721
    %1820 = vmatprep.subr.mxu0 0.0
    %1821 = vmatpush1.msra.mxu0 %v726
    %1822 = vmatprep.subr.mxu0 0.0
    %1823 = vmatpush1.msra.mxu0 %v731
    %1824 = vmatprep.subr.mxu0 0.0
    %1825 = vmatpush1.msra.mxu0 %v736
    %1826 = vmatprep.subr.mxu0 0.0
    %1827 = vmatpush1.msra.mxu0 %v741
    %1828 = vmatprep.subr.mxu0 0.0
    %1829 = vmatpush1.msra.mxu0 %v746
    %1830 = vmatprep.subr.mxu0 0.0
    %1831 = vmatpush1.msra.mxu0 %v751
    %1832 = vmatprep.subr.mxu0 0.0
    %1833 = vmatpush1.msra.mxu0 %v756
    %1834 = vmatprep.subr.mxu0 0.0
    %1835 = vmatpush1.msra.mxu0 %v761
    %1836 = vmatprep.subr.mxu0 0.0
    %1837 = vmatpush1.msra.mxu0 %v766
    %1838 = vmatprep.subr.mxu0 0.0
    %1839 = vmatpush1.msra.mxu0 %v771
    %1840 = vmatprep.subr.mxu0 0.0
    %1841 = vmatpush1.msra.mxu0 %v1814
    %1842 = vmatprep.subr.mxu0 0.0
    %1843 = vmatpush1.msra.mxu0 0.0
    %1844 = vmatprep.subr.mxu0 0.0
    %1845 = vmatpush1.msra.mxu0 0.0
    %1846 = vmatprep.subr.mxu0 0.0
    %1847 = vmatpush1.msra.mxu0 0.0
    %1848 = vmatprep.subr.mxu0 0.0
    %1849 = vmatpush1.msra.mxu0 0.0
    %1850 = vmatprep.subr.mxu0 0.0
    %1851 = vmatpush1.msra.mxu0 0.0
    %1852 = vmatprep.subr.mxu0 0.0
    %1853 = vmatpush1.msra.mxu0 0.0
    %1854 = vmatprep.subr.mxu0 0.0
    %1855 = vmatpush1.msra.mxu0 0.0
    %1856 = vmatprep.subr.mxu0 0.0
    %1857 = vmatpush1.msra.mxu0 0.0
    %1858 = vmatprep.subr.mxu0 0.0
    %1859 = vmatpush1.msra.mxu0 0.0
    %1860 = vmatprep.subr.mxu0 0.0
    %1861 = vmatpush1.msra.mxu0 0.0
    %1862 = vmatprep.subr.mxu0 0.0
    %1863 = vmatpush1.msra.mxu0 0.0
    %1864 = vmatprep.subr.mxu0 0.0
    %1865 = vmatpush1.msra.mxu0 0.0
    %1866 = vmatprep.subr.mxu0 0.0
    %1867 = vmatpush1.msra.mxu0 0.0
    %1868 = vmatprep.subr.mxu0 0.0
    %1869 = vmatpush1.msra.mxu0 0.0
    %1870 = vmatprep.subr.mxu0 0.0
    %1871 = vmatpush1.msra.mxu0 0.0
    %1872 = vmatprep.subr.mxu0 0.0
    %1873 = vmatpush1.msra.mxu0 0.0
    %1874 = vmatprep.subr.mxu0 0.0
    %1875 = vmatpush1.msra.mxu0 0.0
    %1876 = vmatprep.subr.mxu0 0.0
    %1877 = vmatpush1.msra.mxu0 0.0
    %1878 = vmatprep.subr.mxu0 0.0
    %1879 = vmatpush1.msra.mxu0 0.0
    %1880 = vmatprep.mubr.f32.mxu0 0.0
    %1881 = vmatmul.mubr.f32.gmra.mrb[0].mxu0 %v1775
    %v1882 = vpop.f32.mrb[0].mxu0
    %v1883 = vadd.f32 0.0, %v1882
    %v1884 = vpop.f32.mrb[0].mxu0
    %1885 = vmatprep.mubr.f32.mxu0 0.0
    %1886 = vmatmul.mubr.f32.gmra.mrb[0].mxu0 %v1778
    %v1887 = vpop.f32.mrb[0].mxu0
    %v1888 = vadd.f32 0.0, %v1887
    %v1889 = vpop.f32.mrb[0].mxu0
    %1890 = vmatprep.mubr.f32.mxu0 0.0
    %1891 = vmatmul.mubr.f32.gmra.mrb[0].mxu0 %v1781
    %v1892 = vpop.f32.mrb[0].mxu0
    %v1893 = vadd.f32 0.0, %v1892
    %v1894 = vpop.f32.mrb[0].mxu0
    %1895 = vmatprep.mubr.f32.mxu0 0.0
    %1896 = vmatmul.mubr.f32.gmra.mrb[0].mxu0 %v1784
    %v1897 = vpop.f32.mrb[0].mxu0
    %v1898 = vadd.f32 0.0, %v1897
    %v1899 = vpop.f32.mrb[0].mxu0
    %1900 = vmatprep.mubr.f32.mxu0 0.0
    %1901 = vmatmul.mubr.f32.gmra.mrb[0].mxu0 %v1787
    %v1902 = vpop.f32.mrb[0].mxu0
    %v1903 = vadd.f32 0.0, %v1902
    %v1904 = vpop.f32.mrb[0].mxu0
    %1905 = vmatprep.mubr.f32.mxu0 0.0
    %1906 = vmatmul.mubr.f32.gmra.mrb[0].mxu0 %v1790
    %v1907 = vpop.f32.mrb[0].mxu0
    %v1908 = vadd.f32 0.0, %v1907
    %v1909 = vpop.f32.mrb[0].mxu0
    %1910 = vmatprep.mubr.f32.mxu0 0.0
    %1911 = vmatmul.mubr.f32.gmra.mrb[0].mxu0 %v1793
    %v1912 = vpop.f32.mrb[0].mxu0
    %v1913 = vadd.f32 0.0, %v1912
    %v1914 = vpop.f32.mrb[0].mxu0
    %1915 = vmatprep.mubr.f32.mxu0 0.0
    %1916 = vmatmul.mubr.f32.gmra.mrb[0].mxu0 %v1796
    %v1917 = vpop.f32.mrb[0].mxu0
    %v1918 = vadd.f32 0.0, %v1917
    %v1919 = vpop.f32.mrb[0].mxu0
    %1920 = vmatprep.mubr.f32.mxu0 0.0
    %1921 = vmatmul.mubr.f32.gmra.mrb[0].mxu0 %v1799
    %v1922 = vpop.f32.mrb[0].mxu0
    %v1923 = vadd.f32 0.0, %v1922
    %v1924 = vpop.f32.mrb[0].mxu0
    %1925 = vmatprep.mubr.f32.mxu0 0.0
    %1926 = vmatmul.mubr.f32.gmra.mrb[0].mxu0 %v1802
    %v1927 = vpop.f32.mrb[0].mxu0
    %v1928 = vadd.f32 0.0, %v1927
    %v1929 = vpop.f32.mrb[0].mxu0
    %1930 = vmatprep.mubr.f32.mxu0 0.0
    %1931 = vmatmul.mubr.f32.gmra.mrb[0].mxu0 %v1805
    %v1932 = vpop.f32.mrb[0].mxu0
    %v1933 = vadd.f32 0.0, %v1932
    %v1934 = vpop.f32.mrb[0].mxu0
    %1935 = vmatprep.mubr.f32.mxu0 0.0
    %1936 = vmatmul.mubr.f32.gmra.mrb[0].mxu0 %v1808
    %v1937 = vpop.f32.mrb[0].mxu0
    %v1938 = vadd.f32 0.0, %v1937
    %v1939 = vpop.f32.mrb[0].mxu0
    %1940 = vmatprep.mubr.f32.mxu0 0.0
    %1941 = vmatmul.mubr.f32.gmra.mrb[0].mxu0 %v1811
    %v1942 = vpop.f32.mrb[0].mxu0
    %v1943 = vadd.f32 0.0, %v1942
    %v1944 = vpop.f32.mrb[0].mxu0
    %1945 = vdwg.mxu0
    %v1946 = vld [vmem:[%s9] sm:$0xff]
    %v1947 = vld [vmem:[%s9 + $0x8] sm:$0xff]
    %v1948 = vld [vmem:[%s9 + $0x10] sm:$0xff]
    %v1949 = vld [vmem:[%s9 + $0x18] sm:$0xff]
    %v1950 = vld [vmem:[%s9 + $0x20] sm:$0xff]
    %v1951 = vld [vmem:[%s9 + $0x28] sm:$0xff]
    %v1952 = vld [vmem:[%s9 + $0x30] sm:$0xff]
    %v1953 = vld [vmem:[%s9 + $0x38] sm:$0xff]
    %v1954 = vld [vmem:[%s9 + $0x40] sm:$0xff]
    %v1955 = vld [vmem:[%s9 + $0x48] sm:$0xff]
    %v1956 = vld [vmem:[%s9 + $0x50] sm:$0xff]
    %v1957 = vld [vmem:[%s9 + $0x58] sm:$0xff]
    %v1958 = vld [vmem:[%s9 + $0x60] sm:$0xf]
    %1960 = vset.pattern.permute.xlu0 0
    %1961 = vperm.xlu0 %1960, %v1883
    %v1962 = vpop.permute.xlu0 %1961
    %1965 = vset.pattern.permute.xlu0 0
    %1966 = vperm.xlu0 %1965, %v1888
    %v1967 = vpop.permute.xlu0 %1966
    %1970 = vset.pattern.permute.xlu0 0
    %1971 = vperm.xlu0 %1970, %v1893
    %v1972 = vpop.permute.xlu0 %1971
    %1975 = vset.pattern.permute.xlu0 0
    %1976 = vperm.xlu0 %1975, %v1898
    %v1977 = vpop.permute.xlu0 %1976
    %1980 = vset.pattern.permute.xlu0 0
    %1981 = vperm.xlu0 %1980, %v1903
    %v1982 = vpop.permute.xlu0 %1981
    %1985 = vset.pattern.permute.xlu0 0
    %1986 = vperm.xlu0 %1985, %v1908
    %v1987 = vpop.permute.xlu0 %1986
    %1990 = vset.pattern.permute.xlu0 0
    %1991 = vperm.xlu0 %1990, %v1913
    %v1992 = vpop.permute.xlu0 %1991
    %1995 = vset.pattern.permute.xlu0 0
    %1996 = vperm.xlu0 %1995, %v1918
    %v1997 = vpop.permute.xlu0 %1996
    %2000 = vset.pattern.permute.xlu0 0
    %2001 = vperm.xlu0 %2000, %v1923
    %v2002 = vpop.permute.xlu0 %2001
    %2005 = vset.pattern.permute.xlu0 0
    %2006 = vperm.xlu0 %2005, %v1928
    %v2007 = vpop.permute.xlu0 %2006
    %2010 = vset.pattern.permute.xlu0 0
    %2011 = vperm.xlu0 %2010, %v1933
    %v2012 = vpop.permute.xlu0 %2011
    %2015 = vset.pattern.permute.xlu0 0
    %2016 = vperm.xlu0 %2015, %v1938
    %v2017 = vpop.permute.xlu0 %2016
    %2020 = vset.pattern.permute.xlu0 0
    %2021 = vperm.xlu0 %2020, %v1943
    %v2022 = vpop.permute.xlu0 %2021
    %v2025 = vsel %vm606, %v1946, 0
    %v2028 = vsel %vm606, %v1947, 0
    %v2031 = vsel %vm606, %v1948, 0
    %v2034 = vsel %vm606, %v1949, 0
    %v2037 = vsel %vm606, %v1950, 0
    %v2040 = vsel %vm606, %v1951, 0
    %v2043 = vsel %vm606, %v1952, 0
    %v2046 = vsel %vm606, %v1953, 0
    %v2049 = vsel %vm606, %v1954, 0
    %v2052 = vsel %vm606, %v1955, 0
    %v2055 = vsel %vm606, %v1956, 0
    %v2058 = vsel %vm606, %v1957, 0
    %v2061 = vsel %vm606, %v1958, 0
    %v2064 = vsel %vm576, %v1760, 0
    %2066 = vmatprep.subr.mxu0 0.0
    %2067 = vmatpush1.msra.mxu0 %v1748
    %2068 = vmatprep.subr.mxu0 0.0
    %2069 = vmatpush1.msra.mxu0 %v1749
    %2070 = vmatprep.subr.mxu0 0.0
    %2071 = vmatpush1.msra.mxu0 %v1750
    %2072 = vmatprep.subr.mxu0 0.0
    %2073 = vmatpush1.msra.mxu0 %v1751
    %2074 = vmatprep.subr.mxu0 0.0
    %2075 = vmatpush1.msra.mxu0 %v1752
    %2076 = vmatprep.subr.mxu0 0.0
    %2077 = vmatpush1.msra.mxu0 %v1753
    %2078 = vmatprep.subr.mxu0 0.0
    %2079 = vmatpush1.msra.mxu0 %v1754
    %2080 = vmatprep.subr.mxu0 0.0
    %2081 = vmatpush1.msra.mxu0 %v1755
    %2082 = vmatprep.subr.mxu0 0.0
    %2083 = vmatpush1.msra.mxu0 %v1756
    %2084 = vmatprep.subr.mxu0 0.0
    %2085 = vmatpush1.msra.mxu0 %v1757
    %2086 = vmatprep.subr.mxu0 0.0
    %2087 = vmatpush1.msra.mxu0 %v1758
    %2088 = vmatprep.subr.mxu0 0.0
    %2089 = vmatpush1.msra.mxu0 %v1759
    %2090 = vmatprep.subr.mxu0 0.0
    %2091 = vmatpush1.msra.mxu0 %v2064
    %2092 = vmatprep.subr.mxu0 0.0
    %2093 = vmatpush1.msra.mxu0 0.0
    %2094 = vmatprep.subr.mxu0 0.0
    %2095 = vmatpush1.msra.mxu0 0.0
    %2096 = vmatprep.subr.mxu0 0.0
    %2097 = vmatpush1.msra.mxu0 0.0
    %2098 = vmatprep.subr.mxu0 0.0
    %2099 = vmatpush1.msra.mxu0 0.0
    %2100 = vmatprep.subr.mxu0 0.0
    %2101 = vmatpush1.msra.mxu0 0.0
    %2102 = vmatprep.subr.mxu0 0.0
    %2103 = vmatpush1.msra.mxu0 0.0
    %2104 = vmatprep.subr.mxu0 0.0
    %2105 = vmatpush1.msra.mxu0 0.0
    %2106 = vmatprep.subr.mxu0 0.0
    %2107 = vmatpush1.msra.mxu0 0.0
    %2108 = vmatprep.subr.mxu0 0.0
    %2109 = vmatpush1.msra.mxu0 0.0
    %2110 = vmatprep.subr.mxu0 0.0
    %2111 = vmatpush1.msra.mxu0 0.0
    %2112 = vmatprep.subr.mxu0 0.0
    %2113 = vmatpush1.msra.mxu0 0.0
    %2114 = vmatprep.subr.mxu0 0.0
    %2115 = vmatpush1.msra.mxu0 0.0
    %2116 = vmatprep.subr.mxu0 0.0
    %2117 = vmatpush1.msra.mxu0 0.0
    %2118 = vmatprep.subr.mxu0 0.0
    %2119 = vmatpush1.msra.mxu0 0.0
    %2120 = vmatprep.subr.mxu0 0.0
    %2121 = vmatpush1.msra.mxu0 0.0
    %2122 = vmatprep.subr.mxu0 0.0
    %2123 = vmatpush1.msra.mxu0 0.0
    %2124 = vmatprep.subr.mxu0 0.0
    %2125 = vmatpush1.msra.mxu0 0.0
    %2126 = vmatprep.subr.mxu0 0.0
    %2127 = vmatpush1.msra.mxu0 0.0
    %2128 = vmatprep.subr.mxu0 0.0
    %2129 = vmatpush1.msra.mxu0 0.0
    %2130 = vmatprep.mubr.f32.mxu0 0.0
    %2131 = vmatmul.mubr.f32.gmra.mrb[0].mxu0 %v2025
    %v2132 = vpop.f32.mrb[0].mxu0
    %v2133 = vadd.f32 %v1962, %v2132
    %v2134 = vpop.f32.mrb[0].mxu0
    %2135 = vmatprep.mubr.f32.mxu0 0.0
    %2136 = vmatmul.mubr.f32.gmra.mrb[0].mxu0 %v2028
    %v2137 = vpop.f32.mrb[0].mxu0
    %v2138 = vadd.f32 %v1967, %v2137
    %v2139 = vpop.f32.mrb[0].mxu0
    %2140 = vmatprep.mubr.f32.mxu0 0.0
    %2141 = vmatmul.mubr.f32.gmra.mrb[0].mxu0 %v2031
    %v2142 = vpop.f32.mrb[0].mxu0
    %v2143 = vadd.f32 %v1972, %v2142
    %v2144 = vpop.f32.mrb[0].mxu0
    %2145 = vmatprep.mubr.f32.mxu0 0.0
    %2146 = vmatmul.mubr.f32.gmra.mrb[0].mxu0 %v2034
    %v2147 = vpop.f32.mrb[0].mxu0
    %v2148 = vadd.f32 %v1977, %v2147
    %v2149 = vpop.f32.mrb[0].mxu0
    %2150 = vmatprep.mubr.f32.mxu0 0.0
    %2151 = vmatmul.mubr.f32.gmra.mrb[0].mxu0 %v2037
    %v2152 = vpop.f32.mrb[0].mxu0
    %v2153 = vadd.f32 %v1982, %v2152
    %v2154 = vpop.f32.mrb[0].mxu0
    %2155 = vmatprep.mubr.f32.mxu0 0.0
    %2156 = vmatmul.mubr.f32.gmra.mrb[0].mxu0 %v2040
    %v2157 = vpop.f32.mrb[0].mxu0
    %v2158 = vadd.f32 %v1987, %v2157
    %v2159 = vpop.f32.mrb[0].mxu0
    %2160 = vmatprep.mubr.f32.mxu0 0.0
    %2161 = vmatmul.mubr.f32.gmra.mrb[0].mxu0 %v2043
    %v2162 = vpop.f32.mrb[0].mxu0
    %v2163 = vadd.f32 %v1992, %v2162
    %v2164 = vpop.f32.mrb[0].mxu0
    %2165 = vmatprep.mubr.f32.mxu0 0.0
    %2166 = vmatmul.mubr.f32.gmra.mrb[0].mxu0 %v2046
    %v2167 = vpop.f32.mrb[0].mxu0
    %v2168 = vadd.f32 %v1997, %v2167
    %v2169 = vpop.f32.mrb[0].mxu0
    %2170 = vmatprep.mubr.f32.mxu0 0.0
    %2171 = vmatmul.mubr.f32.gmra.mrb[0].mxu0 %v2049
    %v2172 = vpop.f32.mrb[0].mxu0
    %v2173 = vadd.f32 %v2002, %v2172
    %v2174 = vpop.f32.mrb[0].mxu0
    %2175 = vmatprep.mubr.f32.mxu0 0.0
    %2176 = vmatmul.mubr.f32.gmra.mrb[0].mxu0 %v2052
    %v2177 = vpop.f32.mrb[0].mxu0
    %v2178 = vadd.f32 %v2007, %v2177
    %v2179 = vpop.f32.mrb[0].mxu0
    %2180 = vmatprep.mubr.f32.mxu0 0.0
    %2181 = vmatmul.mubr.f32.gmra.mrb[0].mxu0 %v2055
    %v2182 = vpop.f32.mrb[0].mxu0
    %v2183 = vadd.f32 %v2012, %v2182
    %v2184 = vpop.f32.mrb[0].mxu0
    %2185 = vmatprep.mubr.f32.mxu0 0.0
    %2186 = vmatmul.mubr.f32.gmra.mrb[0].mxu0 %v2058
    %v2187 = vpop.f32.mrb[0].mxu0
    %v2188 = vadd.f32 %v2017, %v2187
    %v2189 = vpop.f32.mrb[0].mxu0
    %2190 = vmatprep.mubr.f32.mxu0 0.0
    %2191 = vmatmul.mubr.f32.gmra.mrb[0].mxu0 %v2061
    %v2192 = vpop.f32.mrb[0].mxu0
    %v2193 = vadd.f32 %v2022, %v2192
    %v2194 = vpop.f32.mrb[0].mxu0
    %2195 = vdwg.mxu0
    %v2196 = vld [vmem:[%s10] sm:$0xff]
    %v2197 = vld [vmem:[%s10 + $0x8] sm:$0xff]
    %v2198 = vld [vmem:[%s10 + $0x10] sm:$0xff]
    %v2199 = vld [vmem:[%s10 + $0x18] sm:$0xff]
    %v2200 = vld [vmem:[%s10 + $0x20] sm:$0xff]
    %v2201 = vld [vmem:[%s10 + $0x28] sm:$0xff]
    %v2202 = vld [vmem:[%s10 + $0x30] sm:$0xff]
    %v2203 = vld [vmem:[%s10 + $0x38] sm:$0xff]
    %v2204 = vld [vmem:[%s10 + $0x40] sm:$0xff]
    %v2205 = vld [vmem:[%s10 + $0x48] sm:$0xff]
    %v2206 = vld [vmem:[%s10 + $0x50] sm:$0xff]
    %v2207 = vld [vmem:[%s10 + $0x58] sm:$0xff]
    %v2208 = vld [vmem:[%s10 + $0x60] sm:$0xf]
    %2210 = vset.pattern.permute.xlu0 0
    %2211 = vperm.xlu0 %2210, %v2196
    %v2212 = vpop.permute.xlu0 %2211
    %2215 = vset.pattern.permute.xlu0 0
    %2216 = vperm.xlu0 %2215, %v2197
    %v2217 = vpop.permute.xlu0 %2216
    %2220 = vset.pattern.permute.xlu0 0
    %2221 = vperm.xlu0 %2220, %v2198
    %v2222 = vpop.permute.xlu0 %2221
    %2225 = vset.pattern.permute.xlu0 0
    %2226 = vperm.xlu0 %2225, %v2199
    %v2227 = vpop.permute.xlu0 %2226
    %2230 = vset.pattern.permute.xlu0 0
    %2231 = vperm.xlu0 %2230, %v2200
    %v2232 = vpop.permute.xlu0 %2231
    %2235 = vset.pattern.permute.xlu0 0
    %2236 = vperm.xlu0 %2235, %v2201
    %v2237 = vpop.permute.xlu0 %2236
    %2240 = vset.pattern.permute.xlu0 0
    %2241 = vperm.xlu0 %2240, %v2202
    %v2242 = vpop.permute.xlu0 %2241
    %2245 = vset.pattern.permute.xlu0 0
    %2246 = vperm.xlu0 %2245, %v2203
    %v2247 = vpop.permute.xlu0 %2246
    %2250 = vset.pattern.permute.xlu0 0
    %2251 = vperm.xlu0 %2250, %v2204
    %v2252 = vpop.permute.xlu0 %2251
    %2255 = vset.pattern.permute.xlu0 0
    %2256 = vperm.xlu0 %2255, %v2205
    %v2257 = vpop.permute.xlu0 %2256
    %2260 = vset.pattern.permute.xlu0 0
    %2261 = vperm.xlu0 %2260, %v2206
    %v2262 = vpop.permute.xlu0 %2261
    %2265 = vset.pattern.permute.xlu0 0
    %2266 = vperm.xlu0 %2265, %v2207
    %v2267 = vpop.permute.xlu0 %2266
    %2270 = vset.pattern.permute.xlu0 0
    %2271 = vperm.xlu0 %2270, %v2208
    %v2272 = vpop.permute.xlu0 %2271
    %v2274 = vadd.f32 %v2133, %v2212
    %v2275 = vadd.f32 %v2138, %v2217
    %v2276 = vadd.f32 %v2143, %v2222
    %v2277 = vadd.f32 %v2148, %v2227
    %v2278 = vadd.f32 %v2153, %v2232
    %v2279 = vadd.f32 %v2158, %v2237
    %v2280 = vadd.f32 %v2163, %v2242
    %v2281 = vadd.f32 %v2168, %v2247
    %v2282 = vadd.f32 %v2173, %v2252
    %v2283 = vadd.f32 %v2178, %v2257
    %v2284 = vadd.f32 %v2183, %v2262
    %v2285 = vadd.f32 %v2188, %v2267
    %v2286 = vadd.f32 %v2193, %v2272
    %v2287 = vmax.f32 %v2274, 0.0
    %v2288 = vmax.f32 %v2275, 0.0
    %v2289 = vmax.f32 %v2276, 0.0
    %v2290 = vmax.f32 %v2277, 0.0
    %v2291 = vmax.f32 %v2278, 0.0
    %v2292 = vmax.f32 %v2279, 0.0
    %v2293 = vmax.f32 %v2280, 0.0
    %v2294 = vmax.f32 %v2281, 0.0
    %v2295 = vmax.f32 %v2282, 0.0
    %v2296 = vmax.f32 %v2283, 0.0
    %v2297 = vmax.f32 %v2284, 0.0
    %v2298 = vmax.f32 %v2285, 0.0
    %v2299 = vmax.f32 %v2286, 0.0
    %v2300 = vld [vmem:[%s11] sm:$0x1]
    %v2301 = vld [vmem:[#allocation6] sm:$0x1]
    %2303 = vset.pattern.permute.xlu0 0
    %2304 = vperm.xlu0 %2303, %v2301
    %v2305 = vpop.permute.xlu0 %2304
    %v2307 = vlaneseq
    %v2308 = vshrl.u32 %v2307, 7
    %v2309 = vsub.s32 0, %v2308
    %v2310 = vrot.slane %v2305, %v2309
    %v2312 = vsel %vm606, %v2300, 0
    %v2315 = vsel %vm576, %v2299, 0
    %2317 = vmatprep.subr.mxu0 0.0
    %2318 = vmatpush1.msra.mxu0 %v2287
    %2319 = vmatprep.subr.mxu0 0.0
    %2320 = vmatpush1.msra.mxu0 %v2288
    %2321 = vmatprep.subr.mxu0 0.0
    %2322 = vmatpush1.msra.mxu0 %v2289
    %2323 = vmatprep.subr.mxu0 0.0
    %2324 = vmatpush1.msra.mxu0 %v2290
    %2325 = vmatprep.subr.mxu0 0.0
    %2326 = vmatpush1.msra.mxu0 %v2291
    %2327 = vmatprep.subr.mxu0 0.0
    %2328 = vmatpush1.msra.mxu0 %v2292
    %2329 = vmatprep.subr.mxu0 0.0
    %2330 = vmatpush1.msra.mxu0 %v2293
    %2331 = vmatprep.subr.mxu0 0.0
    %2332 = vmatpush1.msra.mxu0 %v2294
    %2333 = vmatprep.subr.mxu0 0.0
    %2334 = vmatpush1.msra.mxu0 %v2295
    %2335 = vmatprep.subr.mxu0 0.0
    %2336 = vmatpush1.msra.mxu0 %v2296
    %2337 = vmatprep.subr.mxu0 0.0
    %2338 = vmatpush1.msra.mxu0 %v2297
    %2339 = vmatprep.subr.mxu0 0.0
    %2340 = vmatpush1.msra.mxu0 %v2298
    %2341 = vmatprep.subr.mxu0 0.0
    %2342 = vmatpush1.msra.mxu0 %v2315
    %2343 = vmatprep.subr.mxu0 0.0
    %2344 = vmatpush1.msra.mxu0 0.0
    %2345 = vmatprep.subr.mxu0 0.0
    %2346 = vmatpush1.msra.mxu0 0.0
    %2347 = vmatprep.subr.mxu0 0.0
    %2348 = vmatpush1.msra.mxu0 0.0
    %2349 = vmatprep.subr.mxu0 0.0
    %2350 = vmatpush1.msra.mxu0 0.0
    %2351 = vmatprep.subr.mxu0 0.0
    %2352 = vmatpush1.msra.mxu0 0.0
    %2353 = vmatprep.subr.mxu0 0.0
    %2354 = vmatpush1.msra.mxu0 0.0
    %2355 = vmatprep.subr.mxu0 0.0
    %2356 = vmatpush1.msra.mxu0 0.0
    %2357 = vmatprep.subr.mxu0 0.0
    %2358 = vmatpush1.msra.mxu0 0.0
    %2359 = vmatprep.subr.mxu0 0.0
    %2360 = vmatpush1.msra.mxu0 0.0
    %2361 = vmatprep.subr.mxu0 0.0
    %2362 = vmatpush1.msra.mxu0 0.0
    %2363 = vmatprep.subr.mxu0 0.0
    %2364 = vmatpush1.msra.mxu0 0.0
    %2365 = vmatprep.subr.mxu0 0.0
    %2366 = vmatpush1.msra.mxu0 0.0
    %2367 = vmatprep.subr.mxu0 0.0
    %2368 = vmatpush1.msra.mxu0 0.0
    %2369 = vmatprep.subr.mxu0 0.0
    %2370 = vmatpush1.msra.mxu0 0.0
    %2371 = vmatprep.subr.mxu0 0.0
    %2372 = vmatpush1.msra.mxu0 0.0
    %2373 = vmatprep.subr.mxu0 0.0
    %2374 = vmatpush1.msra.mxu0 0.0
    %2375 = vmatprep.subr.mxu0 0.0
    %2376 = vmatpush1.msra.mxu0 0.0
    %2377 = vmatprep.subr.mxu0 0.0
    %2378 = vmatpush1.msra.mxu0 0.0
    %2379 = vmatprep.subr.mxu0 0.0
    %2380 = vmatpush1.msra.mxu0 0.0
    %2381 = vmatprep.mubr.f32.mxu0 0.0
    %2382 = vmatmul.mubr.f32.gmra.mrb[0].mxu0 %v2312
    %v2383 = vpop.f32.mrb[0].mxu0
    %v2384 = vadd.f32 %v2310, %v2383
    %v2385 = vpop.f32.mrb[0].mxu0
    %2386 = vdwg.mxu0
    %2387 = vst [vmem:[#allocation7] sm:$0x1] %v2384
    %s2388 = sadd.s32 %s130, 1
    loop: start=0, step=1, limit=16
    $region90: #{tpu_custom_call.1} parent=1 // loop_pre_header
      _
    $region91: #{tpu_custom_call.1} parent=1 // loop_header
      %s2390 = sphi 0, %s2394
      %p2391 = scmp.ge.s32.totalorder %s2390, 16
    $region92: #{tpu_custom_call.1} parent=1 // loop_header_branch
      %2393 = sbr.rel (%p2391) target = $region96
    $region93: #{tpu_custom_call.1} parent=1 // loop_body
      %s2395 = sshra.s32 %s2390, 7
      %s2396 = sand.u32 %s2390, 127
      %s2397 = sadd.s32 %s2395, %s2388
      %s2398 = smul.u32 %s2397, 128
      %s2399 = sshra.s32 %s2390, 7
      %s2400 = sand.u32 %s2390, 127
      %s2401 = sadd.s32 %s2398, %s2400
      %s2402 = sld [smem:[#allocation5 + %s2401]]
      %s2403 = scalar_lea.vmem %s1, %s2402
      %s2404 = scalar_lea.vmem [#allocation2], %s2390
      %p2406 = scmp.lt.u32.totalorder 1, 8
      %p2407 = pneg %p2406
      // Predicated region
      $region97: #{tpu_custom_call.1} parent=93 // pred_check
        _
      $region98: #{tpu_custom_call.1} parent=93 // pred_check_branch
        %2409 = sbr.rel (%p2406) target = $region100
      $region99: #{tpu_custom_call.1} parent=93 // pred_region
        %s2424 = sand.u32 1, 7
        %p2425 = scmp.eq.s32.totalorder %s2424, 0
        %p2426 = pneg %p2425
        // Predicated region
        $region112: #{tpu_custom_call.1} parent=99 // pred_check
          _
        $region113: #{tpu_custom_call.1} parent=99 // pred_check_branch
          %2428 = sbr.rel (%p2425) target = $region115
        $region114: #{tpu_custom_call.1} parent=99 // pred_region
          %s2429 = sand.u32 1, 7
          %s2430 = ssub.s32 1, %s2429
          %s2431 = scalar_lea.vmem %s2403, %s2430
          %s2432 = ssub.s32 1, %s2429
          %s2433 = scalar_lea.vmem %s2404, %s2432 [#allocation2]
          %s2434 = sshllo.u32 0, %s2429
          loop: start=0, step=1, limit=1
          $region116: #{tpu_custom_call.1} parent=114 // loop_pre_header
            _
          $region117: #{tpu_custom_call.1} parent=114 // loop_header
            %s2436 = sphi 0, %s2440
            %p2437 = scmp.ge.s32.totalorder %s2436, 1
            %s2441 = sphi %s2431, %s2431
            %s2442 = sphi %s2433, %s2433
          $region118: #{tpu_custom_call.1} parent=114 // loop_header_branch
            %2439 = sbr.rel (%p2437) target = $region122
          $region119: #{tpu_custom_call.1} parent=114 // loop_body
            %v2443 = vld [vmem:[%s2441] sm:%s2434]
            %2444 = vst [vmem:[%s2442] sm:%s2434] %v2443
          $region120: #{tpu_custom_call.1} parent=114 // loop_footer
            %s2440 = sadd.s32 1, %s2436
          $region121: #{tpu_custom_call.1} parent=114 // loop_footer_branch
            %2435 = sbr.rel target = $region117
          $region122: #{tpu_custom_call.1} parent=114 // loop_exit
            _
        $region115: #{tpu_custom_call.1} parent=99 // pred_fallthru
          _
      $region100: #{tpu_custom_call.1} parent=93 // pred_fallthru
        _
      // Predicated region
      $region101: #{tpu_custom_call.1} parent=93 // pred_check
        %p2410 = pneg %p2406
      $region102: #{tpu_custom_call.1} parent=93 // pred_check_branch
        %2412 = sbr.rel (%p2410) target = $region104
      $region103: #{tpu_custom_call.1} parent=93 // pred_region
        %s2413 = sshllo.u32 0, 1
        loop: start=0, step=1, limit=1
        $region105: #{tpu_custom_call.1} parent=103 // loop_pre_header
          _
        $region106: #{tpu_custom_call.1} parent=103 // loop_header
          %s2415 = sphi 0, %s2419
          %p2416 = scmp.ge.s32.totalorder %s2415, 1
          %s2420 = sphi %s2403, %s2403
          %s2421 = sphi %s2404, %s2404
        $region107: #{tpu_custom_call.1} parent=103 // loop_header_branch
          %2418 = sbr.rel (%p2416) target = $region111
        $region108: #{tpu_custom_call.1} parent=103 // loop_body
          %v2422 = vld [vmem:[%s2420] sm:%s2413]
          %2423 = vst [vmem:[%s2421] sm:%s2413] %v2422
        $region109: #{tpu_custom_call.1} parent=103 // loop_footer
          %s2419 = sadd.s32 1, %s2415
        $region110: #{tpu_custom_call.1} parent=103 // loop_footer_branch
          %2414 = sbr.rel target = $region106
        $region111: #{tpu_custom_call.1} parent=103 // loop_exit
          _
      $region104: #{tpu_custom_call.1} parent=93 // pred_fallthru
        _
      // Predicated region
      $region123: #{tpu_custom_call.1} parent=93 // pred_check
        _
      $region124: #{tpu_custom_call.1} parent=93 // pred_check_branch
        %2447 = sbr.rel (0) target = $region126
      $region125: #{tpu_custom_call.1} parent=93 // pred_region
        %2448 = vsyncadd [#allocation3], 16
      $region126: #{tpu_custom_call.1} parent=93 // pred_fallthru
        _
    $region94: #{tpu_custom_call.1} parent=1 // loop_footer
      %s2394 = sadd.s32 1, %s2390
    $region95: #{tpu_custom_call.1} parent=1 // loop_footer_branch
      %2389 = sbr.rel target = $region91
    $region96: #{tpu_custom_call.1} parent=1 // loop_exit
      _
    loop: start=0, step=1, limit=16
    $region127: #{tpu_custom_call.1} parent=1 // loop_pre_header
      _
    $region128: #{tpu_custom_call.1} parent=1 // loop_header
      %s2450 = sphi 0, %s2454
      %p2451 = scmp.ge.s32.totalorder %s2450, 16
    $region129: #{tpu_custom_call.1} parent=1 // loop_header_branch
      %2453 = sbr.rel (%p2451) target = $region133
    $region130: #{tpu_custom_call.1} parent=1 // loop_body
      %2456 = dma.done [#allocation3], 16
    $region131: #{tpu_custom_call.1} parent=1 // loop_footer
      %s2454 = sadd.s32 1, %s2450
    $region132: #{tpu_custom_call.1} parent=1 // loop_footer_branch
      %2449 = sbr.rel target = $region128
    $region133: #{tpu_custom_call.1} parent=1 // loop_exit
      _
    %v2457 = vld [vmem:[#allocation2] sm:$0xff]
    %v2458 = vld [vmem:[#allocation2 + $0x8] sm:$0xff]
    %v2459 = vld [vmem:[#allocation2 + $0x10] sm:$0xff]
    %v2460 = vld [vmem:[#allocation2 + $0x18] sm:$0xff]
    %v2461 = vld [vmem:[#allocation2 + $0x20] sm:$0xff]
    %v2462 = vld [vmem:[#allocation2 + $0x28] sm:$0xff]
    %v2463 = vld [vmem:[#allocation2 + $0x30] sm:$0xff]
    %v2464 = vld [vmem:[#allocation2 + $0x38] sm:$0xff]
    %v2465 = vld [vmem:[#allocation2 + $0x40] sm:$0xff]
    %v2466 = vld [vmem:[#allocation2 + $0x48] sm:$0xff]
    %v2467 = vld [vmem:[#allocation2 + $0x50] sm:$0xff]
    %v2468 = vld [vmem:[#allocation2 + $0x58] sm:$0xff]
    %v2469 = vld [vmem:[#allocation2 + $0x60] sm:$0xff]
    %v2470 = vld [vmem:[#allocation2 + $0x68] sm:$0xff]
    %v2471 = vld [vmem:[#allocation2 + $0x70] sm:$0xff]
    %v2472 = vld [vmem:[#allocation2 + $0x78] sm:$0xff]
    %2473 = vxpose.xlu0.b32.start [1/16] %v2457, 128
    %2474 = vxpose.xlu0.b32.cont [2/16] %v2458, 128
    %2475 = vxpose.xlu0.b32.cont [3/16] %v2459, 128
    %2476 = vxpose.xlu0.b32.cont [4/16] %v2460, 128
    %2477 = vxpose.xlu0.b32.cont [5/16] %v2461, 128
    %2478 = vxpose.xlu0.b32.cont [6/16] %v2462, 128
    %2479 = vxpose.xlu0.b32.cont [7/16] %v2463, 128
    %2480 = vxpose.xlu0.b32.cont [8/16] %v2464, 128
    %2481 = vxpose.xlu0.b32.cont [9/16] %v2465, 128
    %2482 = vxpose.xlu0.b32.cont [10/16] %v2466, 128
    %2483 = vxpose.xlu0.b32.cont [11/16] %v2467, 128
    %2484 = vxpose.xlu0.b32.cont [12/16] %v2468, 128
    %2485 = vxpose.xlu0.b32.cont [13/16] %v2469, 128
    %2486 = vxpose.xlu0.b32.cont [14/16] %v2470, 128
    %2487 = vxpose.xlu0.b32.cont [15/16] %v2471, 128
    %2488 = vxpose.xlu0.b32.end [16/16] %v2472, 128
    %v2489 = vpop.trf.xlu0
    %v2490 = vpop.trf.xlu0
    %v2491 = vpop.trf.xlu0
    %v2492 = vpop.trf.xlu0
    %v2493 = vpop.trf.xlu0
    %v2494 = vpop.trf.xlu0
    %v2495 = vpop.trf.xlu0
    %v2496 = vpop.trf.xlu0
    %v2497 = vpop.trf.xlu0
    %v2498 = vpop.trf.xlu0
    %v2499 = vpop.trf.xlu0
    %v2500 = vpop.trf.xlu0
    %v2501 = vpop.trf.xlu0
    %v2502 = vpop.trf.xlu0
    %v2503 = vpop.trf.xlu0
    %v2504 = vpop.trf.xlu0
    %v2505 = vsel %vm248, %v2489, 0.0
    %v2506 = vsel %vm248, %v2490, 0.0
    %v2507 = vsel %vm248, %v2491, 0.0
    %v2508 = vsel %vm248, %v2492, 0.0
    %2513 = vrot.lane.b32.xlu0 %v2505, 1
    %v2514 = vpop.permute.xlu0 %2513
    %2515 = vrot.lane.b32.xlu0 %v2506, 1
    %v2516 = vpop.permute.xlu0 %2515
    %2517 = vrot.lane.b32.xlu0 %v2507, 1
    %v2518 = vpop.permute.xlu0 %2517
    %2519 = vrot.lane.b32.xlu0 %v2508, 1
    %v2520 = vpop.permute.xlu0 %2519
    %v2525 = vsel %vm269, 0.0, %v2514
    %v2526 = vsel %vm269, 0.0, %v2516
    %v2527 = vsel %vm269, 0.0, %v2518
    %v2528 = vsel %vm269, 0.0, %v2520
    %2529 = vrot.lane.b32.xlu0 %v2505, 127
    %v2530 = vpop.permute.xlu0 %2529
    %2531 = vrot.lane.b32.xlu0 %v2506, 127
    %v2532 = vpop.permute.xlu0 %2531
    %2533 = vrot.lane.b32.xlu0 %v2507, 127
    %v2534 = vpop.permute.xlu0 %2533
    %2535 = vrot.lane.b32.xlu0 %v2508, 127
    %v2536 = vpop.permute.xlu0 %2535
    %v2541 = vsel %vm286, %v2530, 0.0
    %v2542 = vsel %vm286, %v2532, 0.0
    %v2543 = vsel %vm286, %v2534, 0.0
    %v2544 = vsel %vm286, %v2536, 0.0
    %2545 = vmatprep.subr.mxu0 0.0
    %2546 = vmatpush1.msra.mxu0 %v2525
    %2547 = vmatprep.subr.mxu0 0.0
    %2548 = vmatpush1.msra.mxu0 %v2526
    %2549 = vmatprep.subr.mxu0 0.0
    %2550 = vmatpush1.msra.mxu0 %v2527
    %2551 = vmatprep.subr.mxu0 0.0
    %2552 = vmatpush1.msra.mxu0 %v2528
    %2553 = vmatprep.subr.mxu0 0.0
    %2554 = vmatpush1.msra.mxu0 %v2505
    %2555 = vmatprep.subr.mxu0 0.0
    %2556 = vmatpush1.msra.mxu0 %v2506
    %2557 = vmatprep.subr.mxu0 0.0
    %2558 = vmatpush1.msra.mxu0 %v2507
    %2559 = vmatprep.subr.mxu0 0.0
    %2560 = vmatpush1.msra.mxu0 %v2508
    %2561 = vmatprep.subr.mxu0 0.0
    %2562 = vmatpush1.msra.mxu0 %v2541
    %2563 = vmatprep.subr.mxu0 0.0
    %2564 = vmatpush1.msra.mxu0 %v2542
    %2565 = vmatprep.subr.mxu0 0.0
    %2566 = vmatpush1.msra.mxu0 %v2543
    %2567 = vmatprep.subr.mxu0 0.0
    %2568 = vmatpush1.msra.mxu0 %v2544
    %2569 = vmatprep.subr.mxu0 0.0
    %2570 = vmatpush1.msra.mxu0 0.0
    %2571 = vmatprep.subr.mxu0 0.0
    %2572 = vmatpush1.msra.mxu0 0.0
    %2573 = vmatprep.subr.mxu0 0.0
    %2574 = vmatpush1.msra.mxu0 0.0
    %2575 = vmatprep.subr.mxu0 0.0
    %2576 = vmatpush1.msra.mxu0 0.0
    %2577 = vmatprep.subr.mxu0 0.0
    %2578 = vmatpush1.msra.mxu0 0.0
    %2579 = vmatprep.subr.mxu0 0.0
    %2580 = vmatpush1.msra.mxu0 0.0
    %2581 = vmatprep.subr.mxu0 0.0
    %2582 = vmatpush1.msra.mxu0 0.0
    %2583 = vmatprep.subr.mxu0 0.0
    %2584 = vmatpush1.msra.mxu0 0.0
    %2585 = vmatprep.subr.mxu0 0.0
    %2586 = vmatpush1.msra.mxu0 0.0
    %2587 = vmatprep.subr.mxu0 0.0
    %2588 = vmatpush1.msra.mxu0 0.0
    %2589 = vmatprep.subr.mxu0 0.0
    %2590 = vmatpush1.msra.mxu0 0.0
    %2591 = vmatprep.subr.mxu0 0.0
    %2592 = vmatpush1.msra.mxu0 0.0
    %2593 = vmatprep.subr.mxu0 0.0
    %2594 = vmatpush1.msra.mxu0 0.0
    %2595 = vmatprep.subr.mxu0 0.0
    %2596 = vmatpush1.msra.mxu0 0.0
    %2597 = vmatprep.subr.mxu0 0.0
    %2598 = vmatpush1.msra.mxu0 0.0
    %2599 = vmatprep.subr.mxu0 0.0
    %2600 = vmatpush1.msra.mxu0 0.0
    %2601 = vmatprep.subr.mxu0 0.0
    %2602 = vmatpush1.msra.mxu0 0.0
    %2603 = vmatprep.subr.mxu0 0.0
    %2604 = vmatpush1.msra.mxu0 0.0
    %2605 = vmatprep.subr.mxu0 0.0
    %2606 = vmatpush1.msra.mxu0 0.0
    %2607 = vmatprep.subr.mxu0 0.0
    %2608 = vmatpush1.msra.mxu0 0.0
    %2609 = vmatprep.mubr.f32.mxu0 0.0
    %2610 = vmatmul.mubr.f32.gmra.mrb[0].mxu0 %v358
    %v2611 = vpop.f32.mrb[0].mxu0
    %v2612 = vadd.f32 %v294, %v2611
    %v2613 = vpop.f32.mrb[0].mxu0
    %2614 = vmatprep.mubr.f32.mxu0 0.0
    %2615 = vmatmul.mubr.f32.gmra.mrb[0].mxu0 %v361
    %v2616 = vpop.f32.mrb[0].mxu0
    %v2617 = vadd.f32 %v299, %v2616
    %v2618 = vpop.f32.mrb[0].mxu0
    %2619 = vmatprep.mubr.f32.mxu0 0.0
    %2620 = vmatmul.mubr.f32.gmra.mrb[0].mxu0 %v364
    %v2621 = vpop.f32.mrb[0].mxu0
    %v2622 = vadd.f32 %v304, %v2621
    %v2623 = vpop.f32.mrb[0].mxu0
    %2624 = vmatprep.mubr.f32.mxu0 0.0
    %2625 = vmatmul.mubr.f32.gmra.mrb[0].mxu0 %v367
    %v2626 = vpop.f32.mrb[0].mxu0
    %v2627 = vadd.f32 %v309, %v2626
    %v2628 = vpop.f32.mrb[0].mxu0
    %2629 = vmatprep.mubr.f32.mxu0 0.0
    %2630 = vmatmul.mubr.f32.gmra.mrb[0].mxu0 %v370
    %v2631 = vpop.f32.mrb[0].mxu0
    %v2632 = vadd.f32 %v314, %v2631
    %v2633 = vpop.f32.mrb[0].mxu0
    %2634 = vmatprep.mubr.f32.mxu0 0.0
    %2635 = vmatmul.mubr.f32.gmra.mrb[0].mxu0 %v373
    %v2636 = vpop.f32.mrb[0].mxu0
    %v2637 = vadd.f32 %v319, %v2636
    %v2638 = vpop.f32.mrb[0].mxu0
    %2639 = vmatprep.mubr.f32.mxu0 0.0
    %2640 = vmatmul.mubr.f32.gmra.mrb[0].mxu0 %v376
    %v2641 = vpop.f32.mrb[0].mxu0
    %v2642 = vadd.f32 %v324, %v2641
    %v2643 = vpop.f32.mrb[0].mxu0
    %2644 = vmatprep.mubr.f32.mxu0 0.0
    %2645 = vmatmul.mubr.f32.gmra.mrb[0].mxu0 %v379
    %v2646 = vpop.f32.mrb[0].mxu0
    %v2647 = vadd.f32 %v329, %v2646
    %v2648 = vpop.f32.mrb[0].mxu0
    %2649 = vmatprep.mubr.f32.mxu0 0.0
    %2650 = vmatmul.mubr.f32.gmra.mrb[0].mxu0 %v382
    %v2651 = vpop.f32.mrb[0].mxu0
    %v2652 = vadd.f32 %v334, %v2651
    %v2653 = vpop.f32.mrb[0].mxu0
    %2654 = vmatprep.mubr.f32.mxu0 0.0
    %2655 = vmatmul.mubr.f32.gmra.mrb[0].mxu0 %v385
    %v2656 = vpop.f32.mrb[0].mxu0
    %v2657 = vadd.f32 %v339, %v2656
    %v2658 = vpop.f32.mrb[0].mxu0
    %2659 = vmatprep.mubr.f32.mxu0 0.0
    %2660 = vmatmul.mubr.f32.gmra.mrb[0].mxu0 %v388
    %v2661 = vpop.f32.mrb[0].mxu0
    %v2662 = vadd.f32 %v344, %v2661
    %v2663 = vpop.f32.mrb[0].mxu0
    %2664 = vmatprep.mubr.f32.mxu0 0.0
    %2665 = vmatmul.mubr.f32.gmra.mrb[0].mxu0 %v391
    %v2666 = vpop.f32.mrb[0].mxu0
    %v2667 = vadd.f32 %v349, %v2666
    %v2668 = vpop.f32.mrb[0].mxu0
    %2669 = vmatprep.mubr.f32.mxu0 0.0
    %2670 = vmatmul.mubr.f32.gmra.mrb[0].mxu0 %v394
    %v2671 = vpop.f32.mrb[0].mxu0
    %v2672 = vadd.f32 %v354, %v2671
    %v2673 = vpop.f32.mrb[0].mxu0
    %2674 = vdwg.mxu0
    %v2675 = vmax.f32 %v2612, 0.0
    %v2676 = vmax.f32 %v2617, 0.0
    %v2677 = vmax.f32 %v2622, 0.0
    %v2678 = vmax.f32 %v2627, 0.0
    %v2679 = vmax.f32 %v2632, 0.0
    %v2680 = vmax.f32 %v2637, 0.0
    %v2681 = vmax.f32 %v2642, 0.0
    %v2682 = vmax.f32 %v2647, 0.0
    %v2683 = vmax.f32 %v2652, 0.0
    %v2684 = vmax.f32 %v2657, 0.0
    %v2685 = vmax.f32 %v2662, 0.0
    %v2686 = vmax.f32 %v2667, 0.0
    %v2687 = vmax.f32 %v2672, 0.0
    %v2688 = vsel %vm248, %v2675, 0.0
    %v2689 = vsel %vm248, %v2676, 0.0
    %v2690 = vsel %vm248, %v2677, 0.0
    %v2691 = vsel %vm248, %v2678, 0.0
    %v2692 = vsel %vm248, %v2679, 0.0
    %v2693 = vsel %vm248, %v2680, 0.0
    %v2694 = vsel %vm248, %v2681, 0.0
    %v2695 = vsel %vm248, %v2682, 0.0
    %v2696 = vsel %vm248, %v2683, 0.0
    %v2697 = vsel %vm248, %v2684, 0.0
    %v2698 = vsel %vm248, %v2685, 0.0
    %v2699 = vsel %vm248, %v2686, 0.0
    %v2700 = vsel %vm248, %v2687, 0.0
    %2701 = vmax.xlane.f32.xlu0 %v2688
    %v2702 = vpop.xlane.xlu0 %2701
    %2703 = vmax.xlane.f32.xlu0 %v2689
    %v2704 = vpop.xlane.xlu0 %2703
    %2705 = vmax.xlane.f32.xlu0 %v2690
    %v2706 = vpop.xlane.xlu0 %2705
    %2707 = vmax.xlane.f32.xlu0 %v2691
    %v2708 = vpop.xlane.xlu0 %2707
    %2709 = vmax.xlane.f32.xlu0 %v2692
    %v2710 = vpop.xlane.xlu0 %2709
    %2711 = vmax.xlane.f32.xlu0 %v2693
    %v2712 = vpop.xlane.xlu0 %2711
    %2713 = vmax.xlane.f32.xlu0 %v2694
    %v2714 = vpop.xlane.xlu0 %2713
    %2715 = vmax.xlane.f32.xlu0 %v2695
    %v2716 = vpop.xlane.xlu0 %2715
    %2717 = vmax.xlane.f32.xlu0 %v2696
    %v2718 = vpop.xlane.xlu0 %2717
    %2719 = vmax.xlane.f32.xlu0 %v2697
    %v2720 = vpop.xlane.xlu0 %2719
    %2721 = vmax.xlane.f32.xlu0 %v2698
    %v2722 = vpop.xlane.xlu0 %2721
    %2723 = vmax.xlane.f32.xlu0 %v2699
    %v2724 = vpop.xlane.xlu0 %2723
    %v2725 = vsel %vm576, %v2700, -inf
    %2726 = vmax.xlane.f32.xlu0 %v2725
    %v2727 = vpop.xlane.xlu0 %2726
    %v2728 = vld [vmem:[%s6] sm:$0xff]
    %v2729 = vld [vmem:[%s6 + $0x8] sm:$0xff]
    %v2730 = vld [vmem:[%s6 + $0x10] sm:$0xff]
    %v2731 = vld [vmem:[%s6 + $0x18] sm:$0xff]
    %v2732 = vld [vmem:[%s6 + $0x20] sm:$0xff]
    %v2733 = vld [vmem:[%s6 + $0x28] sm:$0xff]
    %v2734 = vld [vmem:[%s6 + $0x30] sm:$0xff]
    %v2735 = vld [vmem:[%s6 + $0x38] sm:$0xff]
    %v2736 = vld [vmem:[%s6 + $0x40] sm:$0xff]
    %v2737 = vld [vmem:[%s6 + $0x48] sm:$0xff]
    %v2738 = vld [vmem:[%s6 + $0x50] sm:$0xff]
    %v2739 = vld [vmem:[%s6 + $0x58] sm:$0xff]
    %v2740 = vld [vmem:[%s6 + $0x60] sm:$0xf]
    %v2741 = vld [vmem:[%s7] sm:$0xff]
    %v2742 = vld [vmem:[%s7 + $0x8] sm:$0xff]
    %v2743 = vld [vmem:[%s7 + $0x10] sm:$0xff]
    %v2744 = vld [vmem:[%s7 + $0x18] sm:$0xff]
    %v2745 = vld [vmem:[%s7 + $0x20] sm:$0xff]
    %v2746 = vld [vmem:[%s7 + $0x28] sm:$0xff]
    %v2747 = vld [vmem:[%s7 + $0x30] sm:$0xff]
    %v2748 = vld [vmem:[%s7 + $0x38] sm:$0xff]
    %v2749 = vld [vmem:[%s7 + $0x40] sm:$0xff]
    %v2750 = vld [vmem:[%s7 + $0x48] sm:$0xff]
    %v2751 = vld [vmem:[%s7 + $0x50] sm:$0xff]
    %v2752 = vld [vmem:[%s7 + $0x58] sm:$0xff]
    %v2753 = vld [vmem:[%s7 + $0x60] sm:$0xf]
    %v2755 = vsel %vm606, %v2728, 0
    %v2758 = vsel %vm606, %v2729, 0
    %v2761 = vsel %vm606, %v2730, 0
    %v2764 = vsel %vm606, %v2731, 0
    %v2767 = vsel %vm606, %v2732, 0
    %v2770 = vsel %vm606, %v2733, 0
    %v2773 = vsel %vm606, %v2734, 0
    %v2776 = vsel %vm606, %v2735, 0
    %v2779 = vsel %vm606, %v2736, 0
    %v2782 = vsel %vm606, %v2737, 0
    %v2785 = vsel %vm606, %v2738, 0
    %v2788 = vsel %vm606, %v2739, 0
    %v2791 = vsel %vm606, %v2740, 0
    %v2794 = vsel %vm576, %v2727, 0
    %2796 = vmatprep.subr.mxu0 0.0
    %2797 = vmatpush1.msra.mxu0 %v2702
    %2798 = vmatprep.subr.mxu0 0.0
    %2799 = vmatpush1.msra.mxu0 %v2704
    %2800 = vmatprep.subr.mxu0 0.0
    %2801 = vmatpush1.msra.mxu0 %v2706
    %2802 = vmatprep.subr.mxu0 0.0
    %2803 = vmatpush1.msra.mxu0 %v2708
    %2804 = vmatprep.subr.mxu0 0.0
    %2805 = vmatpush1.msra.mxu0 %v2710
    %2806 = vmatprep.subr.mxu0 0.0
    %2807 = vmatpush1.msra.mxu0 %v2712
    %2808 = vmatprep.subr.mxu0 0.0
    %2809 = vmatpush1.msra.mxu0 %v2714
    %2810 = vmatprep.subr.mxu0 0.0
    %2811 = vmatpush1.msra.mxu0 %v2716
    %2812 = vmatprep.subr.mxu0 0.0
    %2813 = vmatpush1.msra.mxu0 %v2718
    %2814 = vmatprep.subr.mxu0 0.0
    %2815 = vmatpush1.msra.mxu0 %v2720
    %2816 = vmatprep.subr.mxu0 0.0
    %2817 = vmatpush1.msra.mxu0 %v2722
    %2818 = vmatprep.subr.mxu0 0.0
    %2819 = vmatpush1.msra.mxu0 %v2724
    %2820 = vmatprep.subr.mxu0 0.0
    %2821 = vmatpush1.msra.mxu0 %v2794
    %2822 = vmatprep.subr.mxu0 0.0
    %2823 = vmatpush1.msra.mxu0 0.0
    %2824 = vmatprep.subr.mxu0 0.0
    %2825 = vmatpush1.msra.mxu0 0.0
    %2826 = vmatprep.subr.mxu0 0.0
    %2827 = vmatpush1.msra.mxu0 0.0
    %2828 = vmatprep.subr.mxu0 0.0
    %2829 = vmatpush1.msra.mxu0 0.0
    %2830 = vmatprep.subr.mxu0 0.0
    %2831 = vmatpush1.msra.mxu0 0.0
    %2832 = vmatprep.subr.mxu0 0.0
    %2833 = vmatpush1.msra.mxu0 0.0
    %2834 = vmatprep.subr.mxu0 0.0
    %2835 = vmatpush1.msra.mxu0 0.0
    %2836 = vmatprep.subr.mxu0 0.0
    %2837 = vmatpush1.msra.mxu0 0.0
    %2838 = vmatprep.subr.mxu0 0.0
    %2839 = vmatpush1.msra.mxu0 0.0
    %2840 = vmatprep.subr.mxu0 0.0
    %2841 = vmatpush1.msra.mxu0 0.0
    %2842 = vmatprep.subr.mxu0 0.0
    %2843 = vmatpush1.msra.mxu0 0.0
    %2844 = vmatprep.subr.mxu0 0.0
    %2845 = vmatpush1.msra.mxu0 0.0
    %2846 = vmatprep.subr.mxu0 0.0
    %2847 = vmatpush1.msra.mxu0 0.0
    %2848 = vmatprep.subr.mxu0 0.0
    %2849 = vmatpush1.msra.mxu0 0.0
    %2850 = vmatprep.subr.mxu0 0.0
    %2851 = vmatpush1.msra.mxu0 0.0
    %2852 = vmatprep.subr.mxu0 0.0
    %2853 = vmatpush1.msra.mxu0 0.0
    %2854 = vmatprep.subr.mxu0 0.0
    %2855 = vmatpush1.msra.mxu0 0.0
    %2856 = vmatprep.subr.mxu0 0.0
    %2857 = vmatpush1.msra.mxu0 0.0
    %2858 = vmatprep.subr.mxu0 0.0
    %2859 = vmatpush1.msra.mxu0 0.0
    %2860 = vmatprep.mubr.f32.mxu0 0.0
    %2861 = vmatmul.mubr.f32.gmra.mrb[0].mxu0 %v2755
    %v2862 = vpop.f32.mrb[0].mxu0
    %v2863 = vadd.f32 %v2741, %v2862
    %v2864 = vpop.f32.mrb[0].mxu0
    %2865 = vmatprep.mubr.f32.mxu0 0.0
    %2866 = vmatmul.mubr.f32.gmra.mrb[0].mxu0 %v2758
    %v2867 = vpop.f32.mrb[0].mxu0
    %v2868 = vadd.f32 %v2742, %v2867
    %v2869 = vpop.f32.mrb[0].mxu0
    %2870 = vmatprep.mubr.f32.mxu0 0.0
    %2871 = vmatmul.mubr.f32.gmra.mrb[0].mxu0 %v2761
    %v2872 = vpop.f32.mrb[0].mxu0
    %v2873 = vadd.f32 %v2743, %v2872
    %v2874 = vpop.f32.mrb[0].mxu0
    %2875 = vmatprep.mubr.f32.mxu0 0.0
    %2876 = vmatmul.mubr.f32.gmra.mrb[0].mxu0 %v2764
    %v2877 = vpop.f32.mrb[0].mxu0
    %v2878 = vadd.f32 %v2744, %v2877
    %v2879 = vpop.f32.mrb[0].mxu0
    %2880 = vmatprep.mubr.f32.mxu0 0.0
    %2881 = vmatmul.mubr.f32.gmra.mrb[0].mxu0 %v2767
    %v2882 = vpop.f32.mrb[0].mxu0
    %v2883 = vadd.f32 %v2745, %v2882
    %v2884 = vpop.f32.mrb[0].mxu0
    %2885 = vmatprep.mubr.f32.mxu0 0.0
    %2886 = vmatmul.mubr.f32.gmra.mrb[0].mxu0 %v2770
    %v2887 = vpop.f32.mrb[0].mxu0
    %v2888 = vadd.f32 %v2746, %v2887
    %v2889 = vpop.f32.mrb[0].mxu0
    %2890 = vmatprep.mubr.f32.mxu0 0.0
    %2891 = vmatmul.mubr.f32.gmra.mrb[0].mxu0 %v2773
    %v2892 = vpop.f32.mrb[0].mxu0
    %v2893 = vadd.f32 %v2747, %v2892
    %v2894 = vpop.f32.mrb[0].mxu0
    %2895 = vmatprep.mubr.f32.mxu0 0.0
    %2896 = vmatmul.mubr.f32.gmra.mrb[0].mxu0 %v2776
    %v2897 = vpop.f32.mrb[0].mxu0
    %v2898 = vadd.f32 %v2748, %v2897
    %v2899 = vpop.f32.mrb[0].mxu0
    %2900 = vmatprep.mubr.f32.mxu0 0.0
    %2901 = vmatmul.mubr.f32.gmra.mrb[0].mxu0 %v2779
    %v2902 = vpop.f32.mrb[0].mxu0
    %v2903 = vadd.f32 %v2749, %v2902
    %v2904 = vpop.f32.mrb[0].mxu0
    %2905 = vmatprep.mubr.f32.mxu0 0.0
    %2906 = vmatmul.mubr.f32.gmra.mrb[0].mxu0 %v2782
    %v2907 = vpop.f32.mrb[0].mxu0
    %v2908 = vadd.f32 %v2750, %v2907
    %v2909 = vpop.f32.mrb[0].mxu0
    %2910 = vmatprep.mubr.f32.mxu0 0.0
    %2911 = vmatmul.mubr.f32.gmra.mrb[0].mxu0 %v2785
    %v2912 = vpop.f32.mrb[0].mxu0
    %v2913 = vadd.f32 %v2751, %v2912
    %v2914 = vpop.f32.mrb[0].mxu0
    %2915 = vmatprep.mubr.f32.mxu0 0.0
    %2916 = vmatmul.mubr.f32.gmra.mrb[0].mxu0 %v2788
    %v2917 = vpop.f32.mrb[0].mxu0
    %v2918 = vadd.f32 %v2752, %v2917
    %v2919 = vpop.f32.mrb[0].mxu0
    %2920 = vmatprep.mubr.f32.mxu0 0.0
    %2921 = vmatmul.mubr.f32.gmra.mrb[0].mxu0 %v2791
    %v2922 = vpop.f32.mrb[0].mxu0
    %v2923 = vadd.f32 %v2753, %v2922
    %v2924 = vpop.f32.mrb[0].mxu0
    %2925 = vdwg.mxu0
    %2939 = vrot.lane.b32.xlu0 %v2688, 1
    %v2940 = vpop.permute.xlu0 %2939
    %2941 = vrot.lane.b32.xlu0 %v2689, 1
    %v2942 = vpop.permute.xlu0 %2941
    %2943 = vrot.lane.b32.xlu0 %v2690, 1
    %v2944 = vpop.permute.xlu0 %2943
    %2945 = vrot.lane.b32.xlu0 %v2691, 1
    %v2946 = vpop.permute.xlu0 %2945
    %2947 = vrot.lane.b32.xlu0 %v2692, 1
    %v2948 = vpop.permute.xlu0 %2947
    %2949 = vrot.lane.b32.xlu0 %v2693, 1
    %v2950 = vpop.permute.xlu0 %2949
    %2951 = vrot.lane.b32.xlu0 %v2694, 1
    %v2952 = vpop.permute.xlu0 %2951
    %2953 = vrot.lane.b32.xlu0 %v2695, 1
    %v2954 = vpop.permute.xlu0 %2953
    %2955 = vrot.lane.b32.xlu0 %v2696, 1
    %v2956 = vpop.permute.xlu0 %2955
    %2957 = vrot.lane.b32.xlu0 %v2697, 1
    %v2958 = vpop.permute.xlu0 %2957
    %2959 = vrot.lane.b32.xlu0 %v2698, 1
    %v2960 = vpop.permute.xlu0 %2959
    %2961 = vrot.lane.b32.xlu0 %v2699, 1
    %v2962 = vpop.permute.xlu0 %2961
    %2963 = vrot.lane.b32.xlu0 %v2700, 1
    %v2964 = vpop.permute.xlu0 %2963
    %v2978 = vsel %vm269, 0.0, %v2940
    %v2979 = vsel %vm269, 0.0, %v2942
    %v2980 = vsel %vm269, 0.0, %v2944
    %v2981 = vsel %vm269, 0.0, %v2946
    %v2982 = vsel %vm269, 0.0, %v2948
    %v2983 = vsel %vm269, 0.0, %v2950
    %v2984 = vsel %vm269, 0.0, %v2952
    %v2985 = vsel %vm269, 0.0, %v2954
    %v2986 = vsel %vm269, 0.0, %v2956
    %v2987 = vsel %vm269, 0.0, %v2958
    %v2988 = vsel %vm269, 0.0, %v2960
    %v2989 = vsel %vm269, 0.0, %v2962
    %v2990 = vsel %vm269, 0.0, %v2964
    %2991 = vrot.lane.b32.xlu0 %v2688, 127
    %v2992 = vpop.permute.xlu0 %2991
    %2993 = vrot.lane.b32.xlu0 %v2689, 127
    %v2994 = vpop.permute.xlu0 %2993
    %2995 = vrot.lane.b32.xlu0 %v2690, 127
    %v2996 = vpop.permute.xlu0 %2995
    %2997 = vrot.lane.b32.xlu0 %v2691, 127
    %v2998 = vpop.permute.xlu0 %2997
    %2999 = vrot.lane.b32.xlu0 %v2692, 127
    %v3000 = vpop.permute.xlu0 %2999
    %3001 = vrot.lane.b32.xlu0 %v2693, 127
    %v3002 = vpop.permute.xlu0 %3001
    %3003 = vrot.lane.b32.xlu0 %v2694, 127
    %v3004 = vpop.permute.xlu0 %3003
    %3005 = vrot.lane.b32.xlu0 %v2695, 127
    %v3006 = vpop.permute.xlu0 %3005
    %3007 = vrot.lane.b32.xlu0 %v2696, 127
    %v3008 = vpop.permute.xlu0 %3007
    %3009 = vrot.lane.b32.xlu0 %v2697, 127
    %v3010 = vpop.permute.xlu0 %3009
    %3011 = vrot.lane.b32.xlu0 %v2698, 127
    %v3012 = vpop.permute.xlu0 %3011
    %3013 = vrot.lane.b32.xlu0 %v2699, 127
    %v3014 = vpop.permute.xlu0 %3013
    %3015 = vrot.lane.b32.xlu0 %v2700, 127
    %v3016 = vpop.permute.xlu0 %3015
    %v3030 = vsel %vm286, %v2992, 0.0
    %v3031 = vsel %vm286, %v2994, 0.0
    %v3032 = vsel %vm286, %v2996, 0.0
    %v3033 = vsel %vm286, %v2998, 0.0
    %v3034 = vsel %vm286, %v3000, 0.0
    %v3035 = vsel %vm286, %v3002, 0.0
    %v3036 = vsel %vm286, %v3004, 0.0
    %v3037 = vsel %vm286, %v3006, 0.0
    %v3038 = vsel %vm286, %v3008, 0.0
    %v3039 = vsel %vm286, %v3010, 0.0
    %v3040 = vsel %vm286, %v3012, 0.0
    %v3041 = vsel %vm286, %v3014, 0.0
    %v3042 = vsel %vm286, %v3016, 0.0
    %v3043 = vrot.slane %v2688, 4
    %v3044 = vrot.slane %v2689, 4
    %v3045 = vsel %vm576, %v3043, %v3044
    %v3046 = vrot.slane %v2690, 4
    %v3047 = vsel %vm576, %v3044, %v3046
    %v3048 = vrot.slane %v2691, 4
    %v3049 = vsel %vm576, %v3046, %v3048
    %v3050 = vrot.slane %v2692, 4
    %v3051 = vsel %vm576, %v3048, %v3050
    %v3052 = vrot.slane %v2693, 4
    %v3053 = vsel %vm576, %v3050, %v3052
    %v3054 = vrot.slane %v2694, 4
    %v3055 = vsel %vm576, %v3052, %v3054
    %v3056 = vrot.slane %v2695, 4
    %v3057 = vsel %vm576, %v3054, %v3056
    %v3058 = vrot.slane %v2696, 4
    %v3059 = vsel %vm576, %v3056, %v3058
    %v3060 = vrot.slane %v2697, 4
    %v3061 = vsel %vm576, %v3058, %v3060
    %v3062 = vrot.slane %v2698, 4
    %v3063 = vsel %vm576, %v3060, %v3062
    %v3064 = vrot.slane %v2699, 4
    %v3065 = vsel %vm576, %v3062, %v3064
    %v3066 = vrot.slane %v2700, 4
    %v3067 = vsel %vm576, %v3064, %v3066
    %v3081 = vsel %vm576, %v2990, %v3043
    %v3083 = vsel %vm576, %v3042, 0
    %3085 = vmatprep.subr.mxu0 0.0
    %3086 = vmatpush1.msra.mxu0 %v2978
    %3087 = vmatprep.subr.mxu0 0.0
    %3088 = vmatpush1.msra.mxu0 %v2979
    %3089 = vmatprep.subr.mxu0 0.0
    %3090 = vmatpush1.msra.mxu0 %v2980
    %3091 = vmatprep.subr.mxu0 0.0
    %3092 = vmatpush1.msra.mxu0 %v2981
    %3093 = vmatprep.subr.mxu0 0.0
    %3094 = vmatpush1.msra.mxu0 %v2982
    %3095 = vmatprep.subr.mxu0 0.0
    %3096 = vmatpush1.msra.mxu0 %v2983
    %3097 = vmatprep.subr.mxu0 0.0
    %3098 = vmatpush1.msra.mxu0 %v2984
    %3099 = vmatprep.subr.mxu0 0.0
    %3100 = vmatpush1.msra.mxu0 %v2985
    %3101 = vmatprep.subr.mxu0 0.0
    %3102 = vmatpush1.msra.mxu0 %v2986
    %3103 = vmatprep.subr.mxu0 0.0
    %3104 = vmatpush1.msra.mxu0 %v2987
    %3105 = vmatprep.subr.mxu0 0.0
    %3106 = vmatpush1.msra.mxu0 %v2988
    %3107 = vmatprep.subr.mxu0 0.0
    %3108 = vmatpush1.msra.mxu0 %v2989
    %3109 = vmatprep.subr.mxu0 0.0
    %3110 = vmatpush1.msra.mxu0 %v3081
    %3111 = vmatprep.subr.mxu0 0.0
    %3112 = vmatpush1.msra.mxu0 %v3045
    %3113 = vmatprep.subr.mxu0 0.0
    %3114 = vmatpush1.msra.mxu0 %v3047
    %3115 = vmatprep.subr.mxu0 0.0
    %3116 = vmatpush1.msra.mxu0 %v3049
    %3117 = vmatprep.subr.mxu0 0.0
    %3118 = vmatpush1.msra.mxu0 %v3051
    %3119 = vmatprep.subr.mxu0 0.0
    %3120 = vmatpush1.msra.mxu0 %v3053
    %3121 = vmatprep.subr.mxu0 0.0
    %3122 = vmatpush1.msra.mxu0 %v3055
    %3123 = vmatprep.subr.mxu0 0.0
    %3124 = vmatpush1.msra.mxu0 %v3057
    %3125 = vmatprep.subr.mxu0 0.0
    %3126 = vmatpush1.msra.mxu0 %v3059
    %3127 = vmatprep.subr.mxu0 0.0
    %3128 = vmatpush1.msra.mxu0 %v3061
    %3129 = vmatprep.subr.mxu0 0.0
    %3130 = vmatpush1.msra.mxu0 %v3063
    %3131 = vmatprep.subr.mxu0 0.0
    %3132 = vmatpush1.msra.mxu0 %v3065
    %3133 = vmatprep.subr.mxu0 0.0
    %3134 = vmatpush1.msra.mxu0 %v3067
    %3135 = vmatprep.subr.mxu0 0.0
    %3136 = vmatpush1.msra.mxu0 %v3030
    %3137 = vmatprep.subr.mxu0 0.0
    %3138 = vmatpush1.msra.mxu0 %v3031
    %3139 = vmatprep.subr.mxu0 0.0
    %3140 = vmatpush1.msra.mxu0 %v3032
    %3141 = vmatprep.subr.mxu0 0.0
    %3142 = vmatpush1.msra.mxu0 %v3033
    %3143 = vmatprep.subr.mxu0 0.0
    %3144 = vmatpush1.msra.mxu0 %v3034
    %3145 = vmatprep.subr.mxu0 0.0
    %3146 = vmatpush1.msra.mxu0 %v3035
    %3147 = vmatprep.subr.mxu0 0.0
    %3148 = vmatpush1.msra.mxu0 %v3036
    %3149 = vmatprep.mubr.f32.mxu0 %v66
    %3150 = vmatmul.mubr.f32.gmra.mrb[0].mxu0 %v65
    %v3151 = vpop.f32.mrb[0].mxu0
    %v3152 = vadd.f32 %v938, %v3151
    %v3153 = vpop.f32.mrb[0].mxu0
    %3154 = vmatprep.mubr.f32.mxu0 %v69
    %3155 = vmatmul.mubr.f32.gmra.mrb[0].mxu0 %v68
    %v3156 = vpop.f32.mrb[0].mxu0
    %v3157 = vadd.f32 %v943, %v3156
    %v3158 = vpop.f32.mrb[0].mxu0
    %3159 = vmatprep.mubr.f32.mxu0 %v72
    %3160 = vmatmul.mubr.f32.gmra.mrb[0].mxu0 %v71
    %v3161 = vpop.f32.mrb[0].mxu0
    %v3162 = vadd.f32 %v948, %v3161
    %v3163 = vpop.f32.mrb[0].mxu0
    %3164 = vmatprep.mubr.f32.mxu0 %v75
    %3165 = vmatmul.mubr.f32.gmra.mrb[0].mxu0 %v74
    %v3166 = vpop.f32.mrb[0].mxu0
    %v3167 = vadd.f32 %v953, %v3166
    %v3168 = vpop.f32.mrb[0].mxu0
    %3169 = vmatprep.mubr.f32.mxu0 %v78
    %3170 = vmatmul.mubr.f32.gmra.mrb[0].mxu0 %v77
    %v3171 = vpop.f32.mrb[0].mxu0
    %v3172 = vadd.f32 %v958, %v3171
    %v3173 = vpop.f32.mrb[0].mxu0
    %3174 = vmatprep.mubr.f32.mxu0 %v81
    %3175 = vmatmul.mubr.f32.gmra.mrb[0].mxu0 %v80
    %v3176 = vpop.f32.mrb[0].mxu0
    %v3177 = vadd.f32 %v963, %v3176
    %v3178 = vpop.f32.mrb[0].mxu0
    %3179 = vmatprep.mubr.f32.mxu0 %v84
    %3180 = vmatmul.mubr.f32.gmra.mrb[0].mxu0 %v83
    %v3181 = vpop.f32.mrb[0].mxu0
    %v3182 = vadd.f32 %v968, %v3181
    %v3183 = vpop.f32.mrb[0].mxu0
    %3184 = vmatprep.mubr.f32.mxu0 %v87
    %3185 = vmatmul.mubr.f32.gmra.mrb[0].mxu0 %v86
    %v3186 = vpop.f32.mrb[0].mxu0
    %v3187 = vadd.f32 %v973, %v3186
    %v3188 = vpop.f32.mrb[0].mxu0
    %3189 = vmatprep.mubr.f32.mxu0 %v90
    %3190 = vmatmul.mubr.f32.gmra.mrb[0].mxu0 %v89
    %v3191 = vpop.f32.mrb[0].mxu0
    %v3192 = vadd.f32 %v978, %v3191
    %v3193 = vpop.f32.mrb[0].mxu0
    %3194 = vmatprep.mubr.f32.mxu0 %v93
    %3195 = vmatmul.mubr.f32.gmra.mrb[0].mxu0 %v92
    %v3196 = vpop.f32.mrb[0].mxu0
    %v3197 = vadd.f32 %v983, %v3196
    %v3198 = vpop.f32.mrb[0].mxu0
    %3199 = vmatprep.mubr.f32.mxu0 %v96
    %3200 = vmatmul.mubr.f32.gmra.mrb[0].mxu0 %v95
    %v3201 = vpop.f32.mrb[0].mxu0
    %v3202 = vadd.f32 %v988, %v3201
    %v3203 = vpop.f32.mrb[0].mxu0
    %3204 = vmatprep.mubr.f32.mxu0 %v99
    %3205 = vmatmul.mubr.f32.gmra.mrb[0].mxu0 %v98
    %v3206 = vpop.f32.mrb[0].mxu0
    %v3207 = vadd.f32 %v993, %v3206
    %v3208 = vpop.f32.mrb[0].mxu0
    %3209 = vmatprep.mubr.f32.mxu0 %v102
    %3210 = vmatmul.mubr.f32.gmra.mrb[0].mxu0 %v101
    %v3211 = vpop.f32.mrb[0].mxu0
    %v3212 = vadd.f32 %v998, %v3211
    %v3213 = vpop.f32.mrb[0].mxu0
    %3214 = vdwg.mxu0
    %3215 = vmatprep.subr.mxu0 0.0
    %3216 = vmatpush1.msra.mxu0 %v3037
    %3217 = vmatprep.subr.mxu0 0.0
    %3218 = vmatpush1.msra.mxu0 %v3038
    %3219 = vmatprep.subr.mxu0 0.0
    %3220 = vmatpush1.msra.mxu0 %v3039
    %3221 = vmatprep.subr.mxu0 0.0
    %3222 = vmatpush1.msra.mxu0 %v3040
    %3223 = vmatprep.subr.mxu0 0.0
    %3224 = vmatpush1.msra.mxu0 %v3041
    %3225 = vmatprep.subr.mxu0 0.0
    %3226 = vmatpush1.msra.mxu0 %v3083
    %3227 = vmatprep.subr.mxu0 0.0
    %3228 = vmatpush1.msra.mxu0 0.0
    %3229 = vmatprep.subr.mxu0 0.0
    %3230 = vmatpush1.msra.mxu0 0.0
    %3231 = vmatprep.subr.mxu0 0.0
    %3232 = vmatpush1.msra.mxu0 0.0
    %3233 = vmatprep.subr.mxu0 0.0
    %3234 = vmatpush1.msra.mxu0 0.0
    %3235 = vmatprep.subr.mxu0 0.0
    %3236 = vmatpush1.msra.mxu0 0.0
    %3237 = vmatprep.subr.mxu0 0.0
    %3238 = vmatpush1.msra.mxu0 0.0
    %3239 = vmatprep.subr.mxu0 0.0
    %3240 = vmatpush1.msra.mxu0 0.0
    %3241 = vmatprep.subr.mxu0 0.0
    %3242 = vmatpush1.msra.mxu0 0.0
    %3243 = vmatprep.subr.mxu0 0.0
    %3244 = vmatpush1.msra.mxu0 0.0
    %3245 = vmatprep.subr.mxu0 0.0
    %3246 = vmatpush1.msra.mxu0 0.0
    %3247 = vmatprep.subr.mxu0 0.0
    %3248 = vmatpush1.msra.mxu0 0.0
    %3249 = vmatprep.subr.mxu0 0.0
    %3250 = vmatpush1.msra.mxu0 0.0
    %3251 = vmatprep.subr.mxu0 0.0
    %3252 = vmatpush1.msra.mxu0 0.0
    %3253 = vmatprep.subr.mxu0 0.0
    %3254 = vmatpush1.msra.mxu0 0.0
    %3255 = vmatprep.subr.mxu0 0.0
    %3256 = vmatpush1.msra.mxu0 0.0
    %3257 = vmatprep.subr.mxu0 0.0
    %3258 = vmatpush1.msra.mxu0 0.0
    %3259 = vmatprep.subr.mxu0 0.0
    %3260 = vmatpush1.msra.mxu0 0.0
    %3261 = vmatprep.subr.mxu0 0.0
    %3262 = vmatpush1.msra.mxu0 0.0
    %3263 = vmatprep.subr.mxu0 0.0
    %3264 = vmatpush1.msra.mxu0 0.0
    %3265 = vmatprep.subr.mxu0 0.0
    %3266 = vmatpush1.msra.mxu0 0.0
    %3267 = vmatprep.subr.mxu0 0.0
    %3268 = vmatpush1.msra.mxu0 0.0
    %3269 = vmatprep.subr.mxu0 0.0
    %3270 = vmatpush1.msra.mxu0 0.0
    %3271 = vmatprep.subr.mxu0 0.0
    %3272 = vmatpush1.msra.mxu0 0.0
    %3273 = vmatprep.subr.mxu0 0.0
    %3274 = vmatpush1.msra.mxu0 0.0
    %3275 = vmatprep.subr.mxu0 0.0
    %3276 = vmatpush1.msra.mxu0 0.0
    %3277 = vmatprep.subr.mxu0 0.0
    %3278 = vmatpush1.msra.mxu0 0.0
    %3279 = vmatprep.mubr.f32.mxu0 0.0
    %3280 = vmatmul.mubr.f32.gmra.mrb[0].mxu0 %v1002
    %v3281 = vpop.f32.mrb[0].mxu0
    %v3282 = vadd.f32 %v3152, %v3281
    %v3283 = vpop.f32.mrb[0].mxu0
    %3284 = vmatprep.mubr.f32.mxu0 0.0
    %3285 = vmatmul.mubr.f32.gmra.mrb[0].mxu0 %v1005
    %v3286 = vpop.f32.mrb[0].mxu0
    %v3287 = vadd.f32 %v3157, %v3286
    %v3288 = vpop.f32.mrb[0].mxu0
    %3289 = vmatprep.mubr.f32.mxu0 0.0
    %3290 = vmatmul.mubr.f32.gmra.mrb[0].mxu0 %v1008
    %v3291 = vpop.f32.mrb[0].mxu0
    %v3292 = vadd.f32 %v3162, %v3291
    %v3293 = vpop.f32.mrb[0].mxu0
    %3294 = vmatprep.mubr.f32.mxu0 0.0
    %3295 = vmatmul.mubr.f32.gmra.mrb[0].mxu0 %v1011
    %v3296 = vpop.f32.mrb[0].mxu0
    %v3297 = vadd.f32 %v3167, %v3296
    %v3298 = vpop.f32.mrb[0].mxu0
    %3299 = vmatprep.mubr.f32.mxu0 0.0
    %3300 = vmatmul.mubr.f32.gmra.mrb[0].mxu0 %v1014
    %v3301 = vpop.f32.mrb[0].mxu0
    %v3302 = vadd.f32 %v3172, %v3301
    %v3303 = vpop.f32.mrb[0].mxu0
    %3304 = vmatprep.mubr.f32.mxu0 0.0
    %3305 = vmatmul.mubr.f32.gmra.mrb[0].mxu0 %v1017
    %v3306 = vpop.f32.mrb[0].mxu0
    %v3307 = vadd.f32 %v3177, %v3306
    %v3308 = vpop.f32.mrb[0].mxu0
    %3309 = vmatprep.mubr.f32.mxu0 0.0
    %3310 = vmatmul.mubr.f32.gmra.mrb[0].mxu0 %v1020
    %v3311 = vpop.f32.mrb[0].mxu0
    %v3312 = vadd.f32 %v3182, %v3311
    %v3313 = vpop.f32.mrb[0].mxu0
    %3314 = vmatprep.mubr.f32.mxu0 0.0
    %3315 = vmatmul.mubr.f32.gmra.mrb[0].mxu0 %v1023
    %v3316 = vpop.f32.mrb[0].mxu0
    %v3317 = vadd.f32 %v3187, %v3316
    %v3318 = vpop.f32.mrb[0].mxu0
    %3319 = vmatprep.mubr.f32.mxu0 0.0
    %3320 = vmatmul.mubr.f32.gmra.mrb[0].mxu0 %v1026
    %v3321 = vpop.f32.mrb[0].mxu0
    %v3322 = vadd.f32 %v3192, %v3321
    %v3323 = vpop.f32.mrb[0].mxu0
    %3324 = vmatprep.mubr.f32.mxu0 0.0
    %3325 = vmatmul.mubr.f32.gmra.mrb[0].mxu0 %v1029
    %v3326 = vpop.f32.mrb[0].mxu0
    %v3327 = vadd.f32 %v3197, %v3326
    %v3328 = vpop.f32.mrb[0].mxu0
    %3329 = vmatprep.mubr.f32.mxu0 0.0
    %3330 = vmatmul.mubr.f32.gmra.mrb[0].mxu0 %v1032
    %v3331 = vpop.f32.mrb[0].mxu0
    %v3332 = vadd.f32 %v3202, %v3331
    %v3333 = vpop.f32.mrb[0].mxu0
    %3334 = vmatprep.mubr.f32.mxu0 0.0
    %3335 = vmatmul.mubr.f32.gmra.mrb[0].mxu0 %v1035
    %v3336 = vpop.f32.mrb[0].mxu0
    %v3337 = vadd.f32 %v3207, %v3336
    %v3338 = vpop.f32.mrb[0].mxu0
    %3339 = vmatprep.mubr.f32.mxu0 0.0
    %3340 = vmatmul.mubr.f32.gmra.mrb[0].mxu0 %v1038
    %v3341 = vpop.f32.mrb[0].mxu0
    %v3342 = vadd.f32 %v3212, %v3341
    %v3343 = vpop.f32.mrb[0].mxu0
    %3344 = vdwg.mxu0
    %v3345 = vmax.f32 %v3282, 0.0
    %v3346 = vmax.f32 %v3287, 0.0
    %v3347 = vmax.f32 %v3292, 0.0
    %v3348 = vmax.f32 %v3297, 0.0
    %v3349 = vmax.f32 %v3302, 0.0
    %v3350 = vmax.f32 %v3307, 0.0
    %v3351 = vmax.f32 %v3312, 0.0
    %v3352 = vmax.f32 %v3317, 0.0
    %v3353 = vmax.f32 %v3322, 0.0
    %v3354 = vmax.f32 %v3327, 0.0
    %v3355 = vmax.f32 %v3332, 0.0
    %v3356 = vmax.f32 %v3337, 0.0
    %v3357 = vmax.f32 %v3342, 0.0
    %v3358 = vsel %vm248, %v3345, 0.0
    %v3359 = vsel %vm248, %v3346, 0.0
    %v3360 = vsel %vm248, %v3347, 0.0
    %v3361 = vsel %vm248, %v3348, 0.0
    %v3362 = vsel %vm248, %v3349, 0.0
    %v3363 = vsel %vm248, %v3350, 0.0
    %v3364 = vsel %vm248, %v3351, 0.0
    %v3365 = vsel %vm248, %v3352, 0.0
    %v3366 = vsel %vm248, %v3353, 0.0
    %v3367 = vsel %vm248, %v3354, 0.0
    %v3368 = vsel %vm248, %v3355, 0.0
    %v3369 = vsel %vm248, %v3356, 0.0
    %v3370 = vsel %vm248, %v3357, 0.0
    %3384 = vrot.lane.b32.xlu0 %v3358, 1
    %v3385 = vpop.permute.xlu0 %3384
    %3386 = vrot.lane.b32.xlu0 %v3359, 1
    %v3387 = vpop.permute.xlu0 %3386
    %3388 = vrot.lane.b32.xlu0 %v3360, 1
    %v3389 = vpop.permute.xlu0 %3388
    %3390 = vrot.lane.b32.xlu0 %v3361, 1
    %v3391 = vpop.permute.xlu0 %3390
    %3392 = vrot.lane.b32.xlu0 %v3362, 1
    %v3393 = vpop.permute.xlu0 %3392
    %3394 = vrot.lane.b32.xlu0 %v3363, 1
    %v3395 = vpop.permute.xlu0 %3394
    %3396 = vrot.lane.b32.xlu0 %v3364, 1
    %v3397 = vpop.permute.xlu0 %3396
    %3398 = vrot.lane.b32.xlu0 %v3365, 1
    %v3399 = vpop.permute.xlu0 %3398
    %3400 = vrot.lane.b32.xlu0 %v3366, 1
    %v3401 = vpop.permute.xlu0 %3400
    %3402 = vrot.lane.b32.xlu0 %v3367, 1
    %v3403 = vpop.permute.xlu0 %3402
    %3404 = vrot.lane.b32.xlu0 %v3368, 1
    %v3405 = vpop.permute.xlu0 %3404
    %3406 = vrot.lane.b32.xlu0 %v3369, 1
    %v3407 = vpop.permute.xlu0 %3406
    %3408 = vrot.lane.b32.xlu0 %v3370, 1
    %v3409 = vpop.permute.xlu0 %3408
    %v3423 = vsel %vm269, 0.0, %v3385
    %v3424 = vsel %vm269, 0.0, %v3387
    %v3425 = vsel %vm269, 0.0, %v3389
    %v3426 = vsel %vm269, 0.0, %v3391
    %v3427 = vsel %vm269, 0.0, %v3393
    %v3428 = vsel %vm269, 0.0, %v3395
    %v3429 = vsel %vm269, 0.0, %v3397
    %v3430 = vsel %vm269, 0.0, %v3399
    %v3431 = vsel %vm269, 0.0, %v3401
    %v3432 = vsel %vm269, 0.0, %v3403
    %v3433 = vsel %vm269, 0.0, %v3405
    %v3434 = vsel %vm269, 0.0, %v3407
    %v3435 = vsel %vm269, 0.0, %v3409
    %3436 = vrot.lane.b32.xlu0 %v3358, 127
    %v3437 = vpop.permute.xlu0 %3436
    %3438 = vrot.lane.b32.xlu0 %v3359, 127
    %v3439 = vpop.permute.xlu0 %3438
    %3440 = vrot.lane.b32.xlu0 %v3360, 127
    %v3441 = vpop.permute.xlu0 %3440
    %3442 = vrot.lane.b32.xlu0 %v3361, 127
    %v3443 = vpop.permute.xlu0 %3442
    %3444 = vrot.lane.b32.xlu0 %v3362, 127
    %v3445 = vpop.permute.xlu0 %3444
    %3446 = vrot.lane.b32.xlu0 %v3363, 127
    %v3447 = vpop.permute.xlu0 %3446
    %3448 = vrot.lane.b32.xlu0 %v3364, 127
    %v3449 = vpop.permute.xlu0 %3448
    %3450 = vrot.lane.b32.xlu0 %v3365, 127
    %v3451 = vpop.permute.xlu0 %3450
    %3452 = vrot.lane.b32.xlu0 %v3366, 127
    %v3453 = vpop.permute.xlu0 %3452
    %3454 = vrot.lane.b32.xlu0 %v3367, 127
    %v3455 = vpop.permute.xlu0 %3454
    %3456 = vrot.lane.b32.xlu0 %v3368, 127
    %v3457 = vpop.permute.xlu0 %3456
    %3458 = vrot.lane.b32.xlu0 %v3369, 127
    %v3459 = vpop.permute.xlu0 %3458
    %3460 = vrot.lane.b32.xlu0 %v3370, 127
    %v3461 = vpop.permute.xlu0 %3460
    %v3475 = vsel %vm286, %v3437, 0.0
    %v3476 = vsel %vm286, %v3439, 0.0
    %v3477 = vsel %vm286, %v3441, 0.0
    %v3478 = vsel %vm286, %v3443, 0.0
    %v3479 = vsel %vm286, %v3445, 0.0
    %v3480 = vsel %vm286, %v3447, 0.0
    %v3481 = vsel %vm286, %v3449, 0.0
    %v3482 = vsel %vm286, %v3451, 0.0
    %v3483 = vsel %vm286, %v3453, 0.0
    %v3484 = vsel %vm286, %v3455, 0.0
    %v3485 = vsel %vm286, %v3457, 0.0
    %v3486 = vsel %vm286, %v3459, 0.0
    %v3487 = vsel %vm286, %v3461, 0.0
    %v3488 = vrot.slane %v3358, 4
    %v3489 = vrot.slane %v3359, 4
    %v3490 = vsel %vm576, %v3488, %v3489
    %v3491 = vrot.slane %v3360, 4
    %v3492 = vsel %vm576, %v3489, %v3491
    %v3493 = vrot.slane %v3361, 4
    %v3494 = vsel %vm576, %v3491, %v3493
    %v3495 = vrot.slane %v3362, 4
    %v3496 = vsel %vm576, %v3493, %v3495
    %v3497 = vrot.slane %v3363, 4
    %v3498 = vsel %vm576, %v3495, %v3497
    %v3499 = vrot.slane %v3364, 4
    %v3500 = vsel %vm576, %v3497, %v3499
    %v3501 = vrot.slane %v3365, 4
    %v3502 = vsel %vm576, %v3499, %v3501
    %v3503 = vrot.slane %v3366, 4
    %v3504 = vsel %vm576, %v3501, %v3503
    %v3505 = vrot.slane %v3367, 4
    %v3506 = vsel %vm576, %v3503, %v3505
    %v3507 = vrot.slane %v3368, 4
    %v3508 = vsel %vm576, %v3505, %v3507
    %v3509 = vrot.slane %v3369, 4
    %v3510 = vsel %vm576, %v3507, %v3509
    %v3511 = vrot.slane %v3370, 4
    %v3512 = vsel %vm576, %v3509, %v3511
    %v3526 = vsel %vm576, %v3435, %v3488
    %v3528 = vsel %vm576, %v3487, 0
    %3530 = vmatprep.subr.mxu0 0.0
    %3531 = vmatpush1.msra.mxu0 %v3423
    %3532 = vmatprep.subr.mxu0 0.0
    %3533 = vmatpush1.msra.mxu0 %v3424
    %3534 = vmatprep.subr.mxu0 0.0
    %3535 = vmatpush1.msra.mxu0 %v3425
    %3536 = vmatprep.subr.mxu0 0.0
    %3537 = vmatpush1.msra.mxu0 %v3426
    %3538 = vmatprep.subr.mxu0 0.0
    %3539 = vmatpush1.msra.mxu0 %v3427
    %3540 = vmatprep.subr.mxu0 0.0
    %3541 = vmatpush1.msra.mxu0 %v3428
    %3542 = vmatprep.subr.mxu0 0.0
    %3543 = vmatpush1.msra.mxu0 %v3429
    %3544 = vmatprep.subr.mxu0 0.0
    %3545 = vmatpush1.msra.mxu0 %v3430
    %3546 = vmatprep.subr.mxu0 0.0
    %3547 = vmatpush1.msra.mxu0 %v3431
    %3548 = vmatprep.subr.mxu0 0.0
    %3549 = vmatpush1.msra.mxu0 %v3432
    %3550 = vmatprep.subr.mxu0 0.0
    %3551 = vmatpush1.msra.mxu0 %v3433
    %3552 = vmatprep.subr.mxu0 0.0
    %3553 = vmatpush1.msra.mxu0 %v3434
    %3554 = vmatprep.subr.mxu0 0.0
    %3555 = vmatpush1.msra.mxu0 %v3526
    %3556 = vmatprep.subr.mxu0 0.0
    %3557 = vmatpush1.msra.mxu0 %v3490
    %3558 = vmatprep.subr.mxu0 0.0
    %3559 = vmatpush1.msra.mxu0 %v3492
    %3560 = vmatprep.subr.mxu0 0.0
    %3561 = vmatpush1.msra.mxu0 %v3494
    %3562 = vmatprep.subr.mxu0 0.0
    %3563 = vmatpush1.msra.mxu0 %v3496
    %3564 = vmatprep.subr.mxu0 0.0
    %3565 = vmatpush1.msra.mxu0 %v3498
    %3566 = vmatprep.subr.mxu0 0.0
    %3567 = vmatpush1.msra.mxu0 %v3500
    %3568 = vmatprep.subr.mxu0 0.0
    %3569 = vmatpush1.msra.mxu0 %v3502
    %3570 = vmatprep.subr.mxu0 0.0
    %3571 = vmatpush1.msra.mxu0 %v3504
    %3572 = vmatprep.subr.mxu0 0.0
    %3573 = vmatpush1.msra.mxu0 %v3506
    %3574 = vmatprep.subr.mxu0 0.0
    %3575 = vmatpush1.msra.mxu0 %v3508
    %3576 = vmatprep.subr.mxu0 0.0
    %3577 = vmatpush1.msra.mxu0 %v3510
    %3578 = vmatprep.subr.mxu0 0.0
    %3579 = vmatpush1.msra.mxu0 %v3512
    %3580 = vmatprep.subr.mxu0 0.0
    %3581 = vmatpush1.msra.mxu0 %v3475
    %3582 = vmatprep.subr.mxu0 0.0
    %3583 = vmatpush1.msra.mxu0 %v3476
    %3584 = vmatprep.subr.mxu0 0.0
    %3585 = vmatpush1.msra.mxu0 %v3477
    %3586 = vmatprep.subr.mxu0 0.0
    %3587 = vmatpush1.msra.mxu0 %v3478
    %3588 = vmatprep.subr.mxu0 0.0
    %3589 = vmatpush1.msra.mxu0 %v3479
    %3590 = vmatprep.subr.mxu0 0.0
    %3591 = vmatpush1.msra.mxu0 %v3480
    %3592 = vmatprep.subr.mxu0 0.0
    %3593 = vmatpush1.msra.mxu0 %v3481
    %3594 = vmatprep.mubr.f32.mxu0 %v66
    %3595 = vmatmul.mubr.f32.gmra.mrb[0].mxu0 %v65
    %v3596 = vpop.f32.mrb[0].mxu0
    %v3597 = vadd.f32 %v938, %v3596
    %v3598 = vpop.f32.mrb[0].mxu0
    %3599 = vmatprep.mubr.f32.mxu0 %v69
    %3600 = vmatmul.mubr.f32.gmra.mrb[0].mxu0 %v68
    %v3601 = vpop.f32.mrb[0].mxu0
    %v3602 = vadd.f32 %v943, %v3601
    %v3603 = vpop.f32.mrb[0].mxu0
    %3604 = vmatprep.mubr.f32.mxu0 %v72
    %3605 = vmatmul.mubr.f32.gmra.mrb[0].mxu0 %v71
    %v3606 = vpop.f32.mrb[0].mxu0
    %v3607 = vadd.f32 %v948, %v3606
    %v3608 = vpop.f32.mrb[0].mxu0
    %3609 = vmatprep.mubr.f32.mxu0 %v75
    %3610 = vmatmul.mubr.f32.gmra.mrb[0].mxu0 %v74
    %v3611 = vpop.f32.mrb[0].mxu0
    %v3612 = vadd.f32 %v953, %v3611
    %v3613 = vpop.f32.mrb[0].mxu0
    %3614 = vmatprep.mubr.f32.mxu0 %v78
    %3615 = vmatmul.mubr.f32.gmra.mrb[0].mxu0 %v77
    %v3616 = vpop.f32.mrb[0].mxu0
    %v3617 = vadd.f32 %v958, %v3616
    %v3618 = vpop.f32.mrb[0].mxu0
    %3619 = vmatprep.mubr.f32.mxu0 %v81
    %3620 = vmatmul.mubr.f32.gmra.mrb[0].mxu0 %v80
    %v3621 = vpop.f32.mrb[0].mxu0
    %v3622 = vadd.f32 %v963, %v3621
    %v3623 = vpop.f32.mrb[0].mxu0
    %3624 = vmatprep.mubr.f32.mxu0 %v84
    %3625 = vmatmul.mubr.f32.gmra.mrb[0].mxu0 %v83
    %v3626 = vpop.f32.mrb[0].mxu0
    %v3627 = vadd.f32 %v968, %v3626
    %v3628 = vpop.f32.mrb[0].mxu0
    %3629 = vmatprep.mubr.f32.mxu0 %v87
    %3630 = vmatmul.mubr.f32.gmra.mrb[0].mxu0 %v86
    %v3631 = vpop.f32.mrb[0].mxu0
    %v3632 = vadd.f32 %v973, %v3631
    %v3633 = vpop.f32.mrb[0].mxu0
    %3634 = vmatprep.mubr.f32.mxu0 %v90
    %3635 = vmatmul.mubr.f32.gmra.mrb[0].mxu0 %v89
    %v3636 = vpop.f32.mrb[0].mxu0
    %v3637 = vadd.f32 %v978, %v3636
    %v3638 = vpop.f32.mrb[0].mxu0
    %3639 = vmatprep.mubr.f32.mxu0 %v93
    %3640 = vmatmul.mubr.f32.gmra.mrb[0].mxu0 %v92
    %v3641 = vpop.f32.mrb[0].mxu0
    %v3642 = vadd.f32 %v983, %v3641
    %v3643 = vpop.f32.mrb[0].mxu0
    %3644 = vmatprep.mubr.f32.mxu0 %v96
    %3645 = vmatmul.mubr.f32.gmra.mrb[0].mxu0 %v95
    %v3646 = vpop.f32.mrb[0].mxu0
    %v3647 = vadd.f32 %v988, %v3646
    %v3648 = vpop.f32.mrb[0].mxu0
    %3649 = vmatprep.mubr.f32.mxu0 %v99
    %3650 = vmatmul.mubr.f32.gmra.mrb[0].mxu0 %v98
    %v3651 = vpop.f32.mrb[0].mxu0
    %v3652 = vadd.f32 %v993, %v3651
    %v3653 = vpop.f32.mrb[0].mxu0
    %3654 = vmatprep.mubr.f32.mxu0 %v102
    %3655 = vmatmul.mubr.f32.gmra.mrb[0].mxu0 %v101
    %v3656 = vpop.f32.mrb[0].mxu0
    %v3657 = vadd.f32 %v998, %v3656
    %v3658 = vpop.f32.mrb[0].mxu0
    %3659 = vdwg.mxu0
    %3660 = vmatprep.subr.mxu0 0.0
    %3661 = vmatpush1.msra.mxu0 %v3482
    %3662 = vmatprep.subr.mxu0 0.0
    %3663 = vmatpush1.msra.mxu0 %v3483
    %3664 = vmatprep.subr.mxu0 0.0
    %3665 = vmatpush1.msra.mxu0 %v3484
    %3666 = vmatprep.subr.mxu0 0.0
    %3667 = vmatpush1.msra.mxu0 %v3485
    %3668 = vmatprep.subr.mxu0 0.0
    %3669 = vmatpush1.msra.mxu0 %v3486
    %3670 = vmatprep.subr.mxu0 0.0
    %3671 = vmatpush1.msra.mxu0 %v3528
    %3672 = vmatprep.subr.mxu0 0.0
    %3673 = vmatpush1.msra.mxu0 0.0
    %3674 = vmatprep.subr.mxu0 0.0
    %3675 = vmatpush1.msra.mxu0 0.0
    %3676 = vmatprep.subr.mxu0 0.0
    %3677 = vmatpush1.msra.mxu0 0.0
    %3678 = vmatprep.subr.mxu0 0.0
    %3679 = vmatpush1.msra.mxu0 0.0
    %3680 = vmatprep.subr.mxu0 0.0
    %3681 = vmatpush1.msra.mxu0 0.0
    %3682 = vmatprep.subr.mxu0 0.0
    %3683 = vmatpush1.msra.mxu0 0.0
    %3684 = vmatprep.subr.mxu0 0.0
    %3685 = vmatpush1.msra.mxu0 0.0
    %3686 = vmatprep.subr.mxu0 0.0
    %3687 = vmatpush1.msra.mxu0 0.0
    %3688 = vmatprep.subr.mxu0 0.0
    %3689 = vmatpush1.msra.mxu0 0.0
    %3690 = vmatprep.subr.mxu0 0.0
    %3691 = vmatpush1.msra.mxu0 0.0
    %3692 = vmatprep.subr.mxu0 0.0
    %3693 = vmatpush1.msra.mxu0 0.0
    %3694 = vmatprep.subr.mxu0 0.0
    %3695 = vmatpush1.msra.mxu0 0.0
    %3696 = vmatprep.subr.mxu0 0.0
    %3697 = vmatpush1.msra.mxu0 0.0
    %3698 = vmatprep.subr.mxu0 0.0
    %3699 = vmatpush1.msra.mxu0 0.0
    %3700 = vmatprep.subr.mxu0 0.0
    %3701 = vmatpush1.msra.mxu0 0.0
    %3702 = vmatprep.subr.mxu0 0.0
    %3703 = vmatpush1.msra.mxu0 0.0
    %3704 = vmatprep.subr.mxu0 0.0
    %3705 = vmatpush1.msra.mxu0 0.0
    %3706 = vmatprep.subr.mxu0 0.0
    %3707 = vmatpush1.msra.mxu0 0.0
    %3708 = vmatprep.subr.mxu0 0.0
    %3709 = vmatpush1.msra.mxu0 0.0
    %3710 = vmatprep.subr.mxu0 0.0
    %3711 = vmatpush1.msra.mxu0 0.0
    %3712 = vmatprep.subr.mxu0 0.0
    %3713 = vmatpush1.msra.mxu0 0.0
    %3714 = vmatprep.subr.mxu0 0.0
    %3715 = vmatpush1.msra.mxu0 0.0
    %3716 = vmatprep.subr.mxu0 0.0
    %3717 = vmatpush1.msra.mxu0 0.0
    %3718 = vmatprep.subr.mxu0 0.0
    %3719 = vmatpush1.msra.mxu0 0.0
    %3720 = vmatprep.subr.mxu0 0.0
    %3721 = vmatpush1.msra.mxu0 0.0
    %3722 = vmatprep.subr.mxu0 0.0
    %3723 = vmatpush1.msra.mxu0 0.0
    %3724 = vmatprep.mubr.f32.mxu0 0.0
    %3725 = vmatmul.mubr.f32.gmra.mrb[0].mxu0 %v1002
    %v3726 = vpop.f32.mrb[0].mxu0
    %v3727 = vadd.f32 %v3597, %v3726
    %v3728 = vpop.f32.mrb[0].mxu0
    %3729 = vmatprep.mubr.f32.mxu0 0.0
    %3730 = vmatmul.mubr.f32.gmra.mrb[0].mxu0 %v1005
    %v3731 = vpop.f32.mrb[0].mxu0
    %v3732 = vadd.f32 %v3602, %v3731
    %v3733 = vpop.f32.mrb[0].mxu0
    %3734 = vmatprep.mubr.f32.mxu0 0.0
    %3735 = vmatmul.mubr.f32.gmra.mrb[0].mxu0 %v1008
    %v3736 = vpop.f32.mrb[0].mxu0
    %v3737 = vadd.f32 %v3607, %v3736
    %v3738 = vpop.f32.mrb[0].mxu0
    %3739 = vmatprep.mubr.f32.mxu0 0.0
    %3740 = vmatmul.mubr.f32.gmra.mrb[0].mxu0 %v1011
    %v3741 = vpop.f32.mrb[0].mxu0
    %v3742 = vadd.f32 %v3612, %v3741
    %v3743 = vpop.f32.mrb[0].mxu0
    %3744 = vmatprep.mubr.f32.mxu0 0.0
    %3745 = vmatmul.mubr.f32.gmra.mrb[0].mxu0 %v1014
    %v3746 = vpop.f32.mrb[0].mxu0
    %v3747 = vadd.f32 %v3617, %v3746
    %v3748 = vpop.f32.mrb[0].mxu0
    %3749 = vmatprep.mubr.f32.mxu0 0.0
    %3750 = vmatmul.mubr.f32.gmra.mrb[0].mxu0 %v1017
    %v3751 = vpop.f32.mrb[0].mxu0
    %v3752 = vadd.f32 %v3622, %v3751
    %v3753 = vpop.f32.mrb[0].mxu0
    %3754 = vmatprep.mubr.f32.mxu0 0.0
    %3755 = vmatmul.mubr.f32.gmra.mrb[0].mxu0 %v1020
    %v3756 = vpop.f32.mrb[0].mxu0
    %v3757 = vadd.f32 %v3627, %v3756
    %v3758 = vpop.f32.mrb[0].mxu0
    %3759 = vmatprep.mubr.f32.mxu0 0.0
    %3760 = vmatmul.mubr.f32.gmra.mrb[0].mxu0 %v1023
    %v3761 = vpop.f32.mrb[0].mxu0
    %v3762 = vadd.f32 %v3632, %v3761
    %v3763 = vpop.f32.mrb[0].mxu0
    %3764 = vmatprep.mubr.f32.mxu0 0.0
    %3765 = vmatmul.mubr.f32.gmra.mrb[0].mxu0 %v1026
    %v3766 = vpop.f32.mrb[0].mxu0
    %v3767 = vadd.f32 %v3637, %v3766
    %v3768 = vpop.f32.mrb[0].mxu0
    %3769 = vmatprep.mubr.f32.mxu0 0.0
    %3770 = vmatmul.mubr.f32.gmra.mrb[0].mxu0 %v1029
    %v3771 = vpop.f32.mrb[0].mxu0
    %v3772 = vadd.f32 %v3642, %v3771
    %v3773 = vpop.f32.mrb[0].mxu0
    %3774 = vmatprep.mubr.f32.mxu0 0.0
    %3775 = vmatmul.mubr.f32.gmra.mrb[0].mxu0 %v1032
    %v3776 = vpop.f32.mrb[0].mxu0
    %v3777 = vadd.f32 %v3647, %v3776
    %v3778 = vpop.f32.mrb[0].mxu0
    %3779 = vmatprep.mubr.f32.mxu0 0.0
    %3780 = vmatmul.mubr.f32.gmra.mrb[0].mxu0 %v1035
    %v3781 = vpop.f32.mrb[0].mxu0
    %v3782 = vadd.f32 %v3652, %v3781
    %v3783 = vpop.f32.mrb[0].mxu0
    %3784 = vmatprep.mubr.f32.mxu0 0.0
    %3785 = vmatmul.mubr.f32.gmra.mrb[0].mxu0 %v1038
    %v3786 = vpop.f32.mrb[0].mxu0
    %v3787 = vadd.f32 %v3657, %v3786
    %v3788 = vpop.f32.mrb[0].mxu0
    %3789 = vdwg.mxu0
    %v3790 = vmax.f32 %v3727, 0.0
    %v3791 = vmax.f32 %v3732, 0.0
    %v3792 = vmax.f32 %v3737, 0.0
    %v3793 = vmax.f32 %v3742, 0.0
    %v3794 = vmax.f32 %v3747, 0.0
    %v3795 = vmax.f32 %v3752, 0.0
    %v3796 = vmax.f32 %v3757, 0.0
    %v3797 = vmax.f32 %v3762, 0.0
    %v3798 = vmax.f32 %v3767, 0.0
    %v3799 = vmax.f32 %v3772, 0.0
    %v3800 = vmax.f32 %v3777, 0.0
    %v3801 = vmax.f32 %v3782, 0.0
    %v3802 = vmax.f32 %v3787, 0.0
    %v3803 = vld [vmem:[%s8] sm:$0xff]
    %v3804 = vld [vmem:[%s8 + $0x8] sm:$0xff]
    %v3805 = vld [vmem:[%s8 + $0x10] sm:$0xff]
    %v3806 = vld [vmem:[%s8 + $0x18] sm:$0xff]
    %v3807 = vld [vmem:[%s8 + $0x20] sm:$0xff]
    %v3808 = vld [vmem:[%s8 + $0x28] sm:$0xff]
    %v3809 = vld [vmem:[%s8 + $0x30] sm:$0xff]
    %v3810 = vld [vmem:[%s8 + $0x38] sm:$0xff]
    %v3811 = vld [vmem:[%s8 + $0x40] sm:$0xff]
    %v3812 = vld [vmem:[%s8 + $0x48] sm:$0xff]
    %v3813 = vld [vmem:[%s8 + $0x50] sm:$0xff]
    %v3814 = vld [vmem:[%s8 + $0x58] sm:$0xff]
    %v3815 = vld [vmem:[%s8 + $0x60] sm:$0xf]
    %v3817 = vsel %vm606, %v3803, 0
    %v3820 = vsel %vm606, %v3804, 0
    %v3823 = vsel %vm606, %v3805, 0
    %v3826 = vsel %vm606, %v3806, 0
    %v3829 = vsel %vm606, %v3807, 0
    %v3832 = vsel %vm606, %v3808, 0
    %v3835 = vsel %vm606, %v3809, 0
    %v3838 = vsel %vm606, %v3810, 0
    %v3841 = vsel %vm606, %v3811, 0
    %v3844 = vsel %vm606, %v3812, 0
    %v3847 = vsel %vm606, %v3813, 0
    %v3850 = vsel %vm606, %v3814, 0
    %v3853 = vsel %vm606, %v3815, 0
    %v3856 = vsel %vm576, %v2923, 0
    %3858 = vmatprep.subr.mxu0 0.0
    %3859 = vmatpush1.msra.mxu0 %v2863
    %3860 = vmatprep.subr.mxu0 0.0
    %3861 = vmatpush1.msra.mxu0 %v2868
    %3862 = vmatprep.subr.mxu0 0.0
    %3863 = vmatpush1.msra.mxu0 %v2873
    %3864 = vmatprep.subr.mxu0 0.0
    %3865 = vmatpush1.msra.mxu0 %v2878
    %3866 = vmatprep.subr.mxu0 0.0
    %3867 = vmatpush1.msra.mxu0 %v2883
    %3868 = vmatprep.subr.mxu0 0.0
    %3869 = vmatpush1.msra.mxu0 %v2888
    %3870 = vmatprep.subr.mxu0 0.0
    %3871 = vmatpush1.msra.mxu0 %v2893
    %3872 = vmatprep.subr.mxu0 0.0
    %3873 = vmatpush1.msra.mxu0 %v2898
    %3874 = vmatprep.subr.mxu0 0.0
    %3875 = vmatpush1.msra.mxu0 %v2903
    %3876 = vmatprep.subr.mxu0 0.0
    %3877 = vmatpush1.msra.mxu0 %v2908
    %3878 = vmatprep.subr.mxu0 0.0
    %3879 = vmatpush1.msra.mxu0 %v2913
    %3880 = vmatprep.subr.mxu0 0.0
    %3881 = vmatpush1.msra.mxu0 %v2918
    %3882 = vmatprep.subr.mxu0 0.0
    %3883 = vmatpush1.msra.mxu0 %v3856
    %3884 = vmatprep.subr.mxu0 0.0
    %3885 = vmatpush1.msra.mxu0 0.0
    %3886 = vmatprep.subr.mxu0 0.0
    %3887 = vmatpush1.msra.mxu0 0.0
    %3888 = vmatprep.subr.mxu0 0.0
    %3889 = vmatpush1.msra.mxu0 0.0
    %3890 = vmatprep.subr.mxu0 0.0
    %3891 = vmatpush1.msra.mxu0 0.0
    %3892 = vmatprep.subr.mxu0 0.0
    %3893 = vmatpush1.msra.mxu0 0.0
    %3894 = vmatprep.subr.mxu0 0.0
    %3895 = vmatpush1.msra.mxu0 0.0
    %3896 = vmatprep.subr.mxu0 0.0
    %3897 = vmatpush1.msra.mxu0 0.0
    %3898 = vmatprep.subr.mxu0 0.0
    %3899 = vmatpush1.msra.mxu0 0.0
    %3900 = vmatprep.subr.mxu0 0.0
    %3901 = vmatpush1.msra.mxu0 0.0
    %3902 = vmatprep.subr.mxu0 0.0
    %3903 = vmatpush1.msra.mxu0 0.0
    %3904 = vmatprep.subr.mxu0 0.0
    %3905 = vmatpush1.msra.mxu0 0.0
    %3906 = vmatprep.subr.mxu0 0.0
    %3907 = vmatpush1.msra.mxu0 0.0
    %3908 = vmatprep.subr.mxu0 0.0
    %3909 = vmatpush1.msra.mxu0 0.0
    %3910 = vmatprep.subr.mxu0 0.0
    %3911 = vmatpush1.msra.mxu0 0.0
    %3912 = vmatprep.subr.mxu0 0.0
    %3913 = vmatpush1.msra.mxu0 0.0
    %3914 = vmatprep.subr.mxu0 0.0
    %3915 = vmatpush1.msra.mxu0 0.0
    %3916 = vmatprep.subr.mxu0 0.0
    %3917 = vmatpush1.msra.mxu0 0.0
    %3918 = vmatprep.subr.mxu0 0.0
    %3919 = vmatpush1.msra.mxu0 0.0
    %3920 = vmatprep.subr.mxu0 0.0
    %3921 = vmatpush1.msra.mxu0 0.0
    %3922 = vmatprep.mubr.f32.mxu0 0.0
    %3923 = vmatmul.mubr.f32.gmra.mrb[0].mxu0 %v3817
    %v3924 = vpop.f32.mrb[0].mxu0
    %v3925 = vadd.f32 0.0, %v3924
    %v3926 = vpop.f32.mrb[0].mxu0
    %3927 = vmatprep.mubr.f32.mxu0 0.0
    %3928 = vmatmul.mubr.f32.gmra.mrb[0].mxu0 %v3820
    %v3929 = vpop.f32.mrb[0].mxu0
    %v3930 = vadd.f32 0.0, %v3929
    %v3931 = vpop.f32.mrb[0].mxu0
    %3932 = vmatprep.mubr.f32.mxu0 0.0
    %3933 = vmatmul.mubr.f32.gmra.mrb[0].mxu0 %v3823
    %v3934 = vpop.f32.mrb[0].mxu0
    %v3935 = vadd.f32 0.0, %v3934
    %v3936 = vpop.f32.mrb[0].mxu0
    %3937 = vmatprep.mubr.f32.mxu0 0.0
    %3938 = vmatmul.mubr.f32.gmra.mrb[0].mxu0 %v3826
    %v3939 = vpop.f32.mrb[0].mxu0
    %v3940 = vadd.f32 0.0, %v3939
    %v3941 = vpop.f32.mrb[0].mxu0
    %3942 = vmatprep.mubr.f32.mxu0 0.0
    %3943 = vmatmul.mubr.f32.gmra.mrb[0].mxu0 %v3829
    %v3944 = vpop.f32.mrb[0].mxu0
    %v3945 = vadd.f32 0.0, %v3944
    %v3946 = vpop.f32.mrb[0].mxu0
    %3947 = vmatprep.mubr.f32.mxu0 0.0
    %3948 = vmatmul.mubr.f32.gmra.mrb[0].mxu0 %v3832
    %v3949 = vpop.f32.mrb[0].mxu0
    %v3950 = vadd.f32 0.0, %v3949
    %v3951 = vpop.f32.mrb[0].mxu0
    %3952 = vmatprep.mubr.f32.mxu0 0.0
    %3953 = vmatmul.mubr.f32.gmra.mrb[0].mxu0 %v3835
    %v3954 = vpop.f32.mrb[0].mxu0
    %v3955 = vadd.f32 0.0, %v3954
    %v3956 = vpop.f32.mrb[0].mxu0
    %3957 = vmatprep.mubr.f32.mxu0 0.0
    %3958 = vmatmul.mubr.f32.gmra.mrb[0].mxu0 %v3838
    %v3959 = vpop.f32.mrb[0].mxu0
    %v3960 = vadd.f32 0.0, %v3959
    %v3961 = vpop.f32.mrb[0].mxu0
    %3962 = vmatprep.mubr.f32.mxu0 0.0
    %3963 = vmatmul.mubr.f32.gmra.mrb[0].mxu0 %v3841
    %v3964 = vpop.f32.mrb[0].mxu0
    %v3965 = vadd.f32 0.0, %v3964
    %v3966 = vpop.f32.mrb[0].mxu0
    %3967 = vmatprep.mubr.f32.mxu0 0.0
    %3968 = vmatmul.mubr.f32.gmra.mrb[0].mxu0 %v3844
    %v3969 = vpop.f32.mrb[0].mxu0
    %v3970 = vadd.f32 0.0, %v3969
    %v3971 = vpop.f32.mrb[0].mxu0
    %3972 = vmatprep.mubr.f32.mxu0 0.0
    %3973 = vmatmul.mubr.f32.gmra.mrb[0].mxu0 %v3847
    %v3974 = vpop.f32.mrb[0].mxu0
    %v3975 = vadd.f32 0.0, %v3974
    %v3976 = vpop.f32.mrb[0].mxu0
    %3977 = vmatprep.mubr.f32.mxu0 0.0
    %3978 = vmatmul.mubr.f32.gmra.mrb[0].mxu0 %v3850
    %v3979 = vpop.f32.mrb[0].mxu0
    %v3980 = vadd.f32 0.0, %v3979
    %v3981 = vpop.f32.mrb[0].mxu0
    %3982 = vmatprep.mubr.f32.mxu0 0.0
    %3983 = vmatmul.mubr.f32.gmra.mrb[0].mxu0 %v3853
    %v3984 = vpop.f32.mrb[0].mxu0
    %v3985 = vadd.f32 0.0, %v3984
    %v3986 = vpop.f32.mrb[0].mxu0
    %3987 = vdwg.mxu0
    %v3988 = vld [vmem:[%s9] sm:$0xff]
    %v3989 = vld [vmem:[%s9 + $0x8] sm:$0xff]
    %v3990 = vld [vmem:[%s9 + $0x10] sm:$0xff]
    %v3991 = vld [vmem:[%s9 + $0x18] sm:$0xff]
    %v3992 = vld [vmem:[%s9 + $0x20] sm:$0xff]
    %v3993 = vld [vmem:[%s9 + $0x28] sm:$0xff]
    %v3994 = vld [vmem:[%s9 + $0x30] sm:$0xff]
    %v3995 = vld [vmem:[%s9 + $0x38] sm:$0xff]
    %v3996 = vld [vmem:[%s9 + $0x40] sm:$0xff]
    %v3997 = vld [vmem:[%s9 + $0x48] sm:$0xff]
    %v3998 = vld [vmem:[%s9 + $0x50] sm:$0xff]
    %v3999 = vld [vmem:[%s9 + $0x58] sm:$0xff]
    %v4000 = vld [vmem:[%s9 + $0x60] sm:$0xf]
    %4002 = vset.pattern.permute.xlu0 0
    %4003 = vperm.xlu0 %4002, %v3925
    %v4004 = vpop.permute.xlu0 %4003
    %4007 = vset.pattern.permute.xlu0 0
    %4008 = vperm.xlu0 %4007, %v3930
    %v4009 = vpop.permute.xlu0 %4008
    %4012 = vset.pattern.permute.xlu0 0
    %4013 = vperm.xlu0 %4012, %v3935
    %v4014 = vpop.permute.xlu0 %4013
    %4017 = vset.pattern.permute.xlu0 0
    %4018 = vperm.xlu0 %4017, %v3940
    %v4019 = vpop.permute.xlu0 %4018
    %4022 = vset.pattern.permute.xlu0 0
    %4023 = vperm.xlu0 %4022, %v3945
    %v4024 = vpop.permute.xlu0 %4023
    %4027 = vset.pattern.permute.xlu0 0
    %4028 = vperm.xlu0 %4027, %v3950
    %v4029 = vpop.permute.xlu0 %4028
    %4032 = vset.pattern.permute.xlu0 0
    %4033 = vperm.xlu0 %4032, %v3955
    %v4034 = vpop.permute.xlu0 %4033
    %4037 = vset.pattern.permute.xlu0 0
    %4038 = vperm.xlu0 %4037, %v3960
    %v4039 = vpop.permute.xlu0 %4038
    %4042 = vset.pattern.permute.xlu0 0
    %4043 = vperm.xlu0 %4042, %v3965
    %v4044 = vpop.permute.xlu0 %4043
    %4047 = vset.pattern.permute.xlu0 0
    %4048 = vperm.xlu0 %4047, %v3970
    %v4049 = vpop.permute.xlu0 %4048
    %4052 = vset.pattern.permute.xlu0 0
    %4053 = vperm.xlu0 %4052, %v3975
    %v4054 = vpop.permute.xlu0 %4053
    %4057 = vset.pattern.permute.xlu0 0
    %4058 = vperm.xlu0 %4057, %v3980
    %v4059 = vpop.permute.xlu0 %4058
    %4062 = vset.pattern.permute.xlu0 0
    %4063 = vperm.xlu0 %4062, %v3985
    %v4064 = vpop.permute.xlu0 %4063
    %v4067 = vsel %vm606, %v3988, 0
    %v4070 = vsel %vm606, %v3989, 0
    %v4073 = vsel %vm606, %v3990, 0
    %v4076 = vsel %vm606, %v3991, 0
    %v4079 = vsel %vm606, %v3992, 0
    %v4082 = vsel %vm606, %v3993, 0
    %v4085 = vsel %vm606, %v3994, 0
    %v4088 = vsel %vm606, %v3995, 0
    %v4091 = vsel %vm606, %v3996, 0
    %v4094 = vsel %vm606, %v3997, 0
    %v4097 = vsel %vm606, %v3998, 0
    %v4100 = vsel %vm606, %v3999, 0
    %v4103 = vsel %vm606, %v4000, 0
    %v4106 = vsel %vm576, %v3802, 0
    %4108 = vmatprep.subr.mxu0 0.0
    %4109 = vmatpush1.msra.mxu0 %v3790
    %4110 = vmatprep.subr.mxu0 0.0
    %4111 = vmatpush1.msra.mxu0 %v3791
    %4112 = vmatprep.subr.mxu0 0.0
    %4113 = vmatpush1.msra.mxu0 %v3792
    %4114 = vmatprep.subr.mxu0 0.0
    %4115 = vmatpush1.msra.mxu0 %v3793
    %4116 = vmatprep.subr.mxu0 0.0
    %4117 = vmatpush1.msra.mxu0 %v3794
    %4118 = vmatprep.subr.mxu0 0.0
    %4119 = vmatpush1.msra.mxu0 %v3795
    %4120 = vmatprep.subr.mxu0 0.0
    %4121 = vmatpush1.msra.mxu0 %v3796
    %4122 = vmatprep.subr.mxu0 0.0
    %4123 = vmatpush1.msra.mxu0 %v3797
    %4124 = vmatprep.subr.mxu0 0.0
    %4125 = vmatpush1.msra.mxu0 %v3798
    %4126 = vmatprep.subr.mxu0 0.0
    %4127 = vmatpush1.msra.mxu0 %v3799
    %4128 = vmatprep.subr.mxu0 0.0
    %4129 = vmatpush1.msra.mxu0 %v3800
    %4130 = vmatprep.subr.mxu0 0.0
    %4131 = vmatpush1.msra.mxu0 %v3801
    %4132 = vmatprep.subr.mxu0 0.0
    %4133 = vmatpush1.msra.mxu0 %v4106
    %4134 = vmatprep.subr.mxu0 0.0
    %4135 = vmatpush1.msra.mxu0 0.0
    %4136 = vmatprep.subr.mxu0 0.0
    %4137 = vmatpush1.msra.mxu0 0.0
    %4138 = vmatprep.subr.mxu0 0.0
    %4139 = vmatpush1.msra.mxu0 0.0
    %4140 = vmatprep.subr.mxu0 0.0
    %4141 = vmatpush1.msra.mxu0 0.0
    %4142 = vmatprep.subr.mxu0 0.0
    %4143 = vmatpush1.msra.mxu0 0.0
    %4144 = vmatprep.subr.mxu0 0.0
    %4145 = vmatpush1.msra.mxu0 0.0
    %4146 = vmatprep.subr.mxu0 0.0
    %4147 = vmatpush1.msra.mxu0 0.0
    %4148 = vmatprep.subr.mxu0 0.0
    %4149 = vmatpush1.msra.mxu0 0.0
    %4150 = vmatprep.subr.mxu0 0.0
    %4151 = vmatpush1.msra.mxu0 0.0
    %4152 = vmatprep.subr.mxu0 0.0
    %4153 = vmatpush1.msra.mxu0 0.0
    %4154 = vmatprep.subr.mxu0 0.0
    %4155 = vmatpush1.msra.mxu0 0.0
    %4156 = vmatprep.subr.mxu0 0.0
    %4157 = vmatpush1.msra.mxu0 0.0
    %4158 = vmatprep.subr.mxu0 0.0
    %4159 = vmatpush1.msra.mxu0 0.0
    %4160 = vmatprep.subr.mxu0 0.0
    %4161 = vmatpush1.msra.mxu0 0.0
    %4162 = vmatprep.subr.mxu0 0.0
    %4163 = vmatpush1.msra.mxu0 0.0
    %4164 = vmatprep.subr.mxu0 0.0
    %4165 = vmatpush1.msra.mxu0 0.0
    %4166 = vmatprep.subr.mxu0 0.0
    %4167 = vmatpush1.msra.mxu0 0.0
    %4168 = vmatprep.subr.mxu0 0.0
    %4169 = vmatpush1.msra.mxu0 0.0
    %4170 = vmatprep.subr.mxu0 0.0
    %4171 = vmatpush1.msra.mxu0 0.0
    %4172 = vmatprep.mubr.f32.mxu0 0.0
    %4173 = vmatmul.mubr.f32.gmra.mrb[0].mxu0 %v4067
    %v4174 = vpop.f32.mrb[0].mxu0
    %v4175 = vadd.f32 %v4004, %v4174
    %v4176 = vpop.f32.mrb[0].mxu0
    %4177 = vmatprep.mubr.f32.mxu0 0.0
    %4178 = vmatmul.mubr.f32.gmra.mrb[0].mxu0 %v4070
    %v4179 = vpop.f32.mrb[0].mxu0
    %v4180 = vadd.f32 %v4009, %v4179
    %v4181 = vpop.f32.mrb[0].mxu0
    %4182 = vmatprep.mubr.f32.mxu0 0.0
    %4183 = vmatmul.mubr.f32.gmra.mrb[0].mxu0 %v4073
    %v4184 = vpop.f32.mrb[0].mxu0
    %v4185 = vadd.f32 %v4014, %v4184
    %v4186 = vpop.f32.mrb[0].mxu0
    %4187 = vmatprep.mubr.f32.mxu0 0.0
    %4188 = vmatmul.mubr.f32.gmra.mrb[0].mxu0 %v4076
    %v4189 = vpop.f32.mrb[0].mxu0
    %v4190 = vadd.f32 %v4019, %v4189
    %v4191 = vpop.f32.mrb[0].mxu0
    %4192 = vmatprep.mubr.f32.mxu0 0.0
    %4193 = vmatmul.mubr.f32.gmra.mrb[0].mxu0 %v4079
    %v4194 = vpop.f32.mrb[0].mxu0
    %v4195 = vadd.f32 %v4024, %v4194
    %v4196 = vpop.f32.mrb[0].mxu0
    %4197 = vmatprep.mubr.f32.mxu0 0.0
    %4198 = vmatmul.mubr.f32.gmra.mrb[0].mxu0 %v4082
    %v4199 = vpop.f32.mrb[0].mxu0
    %v4200 = vadd.f32 %v4029, %v4199
    %v4201 = vpop.f32.mrb[0].mxu0
    %4202 = vmatprep.mubr.f32.mxu0 0.0
    %4203 = vmatmul.mubr.f32.gmra.mrb[0].mxu0 %v4085
    %v4204 = vpop.f32.mrb[0].mxu0
    %v4205 = vadd.f32 %v4034, %v4204
    %v4206 = vpop.f32.mrb[0].mxu0
    %4207 = vmatprep.mubr.f32.mxu0 0.0
    %4208 = vmatmul.mubr.f32.gmra.mrb[0].mxu0 %v4088
    %v4209 = vpop.f32.mrb[0].mxu0
    %v4210 = vadd.f32 %v4039, %v4209
    %v4211 = vpop.f32.mrb[0].mxu0
    %4212 = vmatprep.mubr.f32.mxu0 0.0
    %4213 = vmatmul.mubr.f32.gmra.mrb[0].mxu0 %v4091
    %v4214 = vpop.f32.mrb[0].mxu0
    %v4215 = vadd.f32 %v4044, %v4214
    %v4216 = vpop.f32.mrb[0].mxu0
    %4217 = vmatprep.mubr.f32.mxu0 0.0
    %4218 = vmatmul.mubr.f32.gmra.mrb[0].mxu0 %v4094
    %v4219 = vpop.f32.mrb[0].mxu0
    %v4220 = vadd.f32 %v4049, %v4219
    %v4221 = vpop.f32.mrb[0].mxu0
    %4222 = vmatprep.mubr.f32.mxu0 0.0
    %4223 = vmatmul.mubr.f32.gmra.mrb[0].mxu0 %v4097
    %v4224 = vpop.f32.mrb[0].mxu0
    %v4225 = vadd.f32 %v4054, %v4224
    %v4226 = vpop.f32.mrb[0].mxu0
    %4227 = vmatprep.mubr.f32.mxu0 0.0
    %4228 = vmatmul.mubr.f32.gmra.mrb[0].mxu0 %v4100
    %v4229 = vpop.f32.mrb[0].mxu0
    %v4230 = vadd.f32 %v4059, %v4229
    %v4231 = vpop.f32.mrb[0].mxu0
    %4232 = vmatprep.mubr.f32.mxu0 0.0
    %4233 = vmatmul.mubr.f32.gmra.mrb[0].mxu0 %v4103
    %v4234 = vpop.f32.mrb[0].mxu0
    %v4235 = vadd.f32 %v4064, %v4234
    %v4236 = vpop.f32.mrb[0].mxu0
    %4237 = vdwg.mxu0
    %v4238 = vld [vmem:[%s10] sm:$0xff]
    %v4239 = vld [vmem:[%s10 + $0x8] sm:$0xff]
    %v4240 = vld [vmem:[%s10 + $0x10] sm:$0xff]
    %v4241 = vld [vmem:[%s10 + $0x18] sm:$0xff]
    %v4242 = vld [vmem:[%s10 + $0x20] sm:$0xff]
    %v4243 = vld [vmem:[%s10 + $0x28] sm:$0xff]
    %v4244 = vld [vmem:[%s10 + $0x30] sm:$0xff]
    %v4245 = vld [vmem:[%s10 + $0x38] sm:$0xff]
    %v4246 = vld [vmem:[%s10 + $0x40] sm:$0xff]
    %v4247 = vld [vmem:[%s10 + $0x48] sm:$0xff]
    %v4248 = vld [vmem:[%s10 + $0x50] sm:$0xff]
    %v4249 = vld [vmem:[%s10 + $0x58] sm:$0xff]
    %v4250 = vld [vmem:[%s10 + $0x60] sm:$0xf]
    %4252 = vset.pattern.permute.xlu0 0
    %4253 = vperm.xlu0 %4252, %v4238
    %v4254 = vpop.permute.xlu0 %4253
    %4257 = vset.pattern.permute.xlu0 0
    %4258 = vperm.xlu0 %4257, %v4239
    %v4259 = vpop.permute.xlu0 %4258
    %4262 = vset.pattern.permute.xlu0 0
    %4263 = vperm.xlu0 %4262, %v4240
    %v4264 = vpop.permute.xlu0 %4263
    %4267 = vset.pattern.permute.xlu0 0
    %4268 = vperm.xlu0 %4267, %v4241
    %v4269 = vpop.permute.xlu0 %4268
    %4272 = vset.pattern.permute.xlu0 0
    %4273 = vperm.xlu0 %4272, %v4242
    %v4274 = vpop.permute.xlu0 %4273
    %4277 = vset.pattern.permute.xlu0 0
    %4278 = vperm.xlu0 %4277, %v4243
    %v4279 = vpop.permute.xlu0 %4278
    %4282 = vset.pattern.permute.xlu0 0
    %4283 = vperm.xlu0 %4282, %v4244
    %v4284 = vpop.permute.xlu0 %4283
    %4287 = vset.pattern.permute.xlu0 0
    %4288 = vperm.xlu0 %4287, %v4245
    %v4289 = vpop.permute.xlu0 %4288
    %4292 = vset.pattern.permute.xlu0 0
    %4293 = vperm.xlu0 %4292, %v4246
    %v4294 = vpop.permute.xlu0 %4293
    %4297 = vset.pattern.permute.xlu0 0
    %4298 = vperm.xlu0 %4297, %v4247
    %v4299 = vpop.permute.xlu0 %4298
    %4302 = vset.pattern.permute.xlu0 0
    %4303 = vperm.xlu0 %4302, %v4248
    %v4304 = vpop.permute.xlu0 %4303
    %4307 = vset.pattern.permute.xlu0 0
    %4308 = vperm.xlu0 %4307, %v4249
    %v4309 = vpop.permute.xlu0 %4308
    %4312 = vset.pattern.permute.xlu0 0
    %4313 = vperm.xlu0 %4312, %v4250
    %v4314 = vpop.permute.xlu0 %4313
    %v4316 = vadd.f32 %v4175, %v4254
    %v4317 = vadd.f32 %v4180, %v4259
    %v4318 = vadd.f32 %v4185, %v4264
    %v4319 = vadd.f32 %v4190, %v4269
    %v4320 = vadd.f32 %v4195, %v4274
    %v4321 = vadd.f32 %v4200, %v4279
    %v4322 = vadd.f32 %v4205, %v4284
    %v4323 = vadd.f32 %v4210, %v4289
    %v4324 = vadd.f32 %v4215, %v4294
    %v4325 = vadd.f32 %v4220, %v4299
    %v4326 = vadd.f32 %v4225, %v4304
    %v4327 = vadd.f32 %v4230, %v4309
    %v4328 = vadd.f32 %v4235, %v4314
    %v4329 = vmax.f32 %v4316, 0.0
    %v4330 = vmax.f32 %v4317, 0.0
    %v4331 = vmax.f32 %v4318, 0.0
    %v4332 = vmax.f32 %v4319, 0.0
    %v4333 = vmax.f32 %v4320, 0.0
    %v4334 = vmax.f32 %v4321, 0.0
    %v4335 = vmax.f32 %v4322, 0.0
    %v4336 = vmax.f32 %v4323, 0.0
    %v4337 = vmax.f32 %v4324, 0.0
    %v4338 = vmax.f32 %v4325, 0.0
    %v4339 = vmax.f32 %v4326, 0.0
    %v4340 = vmax.f32 %v4327, 0.0
    %v4341 = vmax.f32 %v4328, 0.0
    %v4342 = vld [vmem:[%s11] sm:$0x1]
    %v4343 = vld [vmem:[#allocation6] sm:$0x1]
    %4345 = vset.pattern.permute.xlu0 0
    %4346 = vperm.xlu0 %4345, %v4343
    %v4347 = vpop.permute.xlu0 %4346
    %v4349 = vlaneseq
    %v4350 = vshrl.u32 %v4349, 7
    %v4351 = vsub.s32 0, %v4350
    %v4352 = vrot.slane %v4347, %v4351
    %v4354 = vsel %vm606, %v4342, 0
    %v4357 = vsel %vm576, %v4341, 0
    %4359 = vmatprep.subr.mxu0 0.0
    %4360 = vmatpush1.msra.mxu0 %v4329
    %4361 = vmatprep.subr.mxu0 0.0
    %4362 = vmatpush1.msra.mxu0 %v4330
    %4363 = vmatprep.subr.mxu0 0.0
    %4364 = vmatpush1.msra.mxu0 %v4331
    %4365 = vmatprep.subr.mxu0 0.0
    %4366 = vmatpush1.msra.mxu0 %v4332
    %4367 = vmatprep.subr.mxu0 0.0
    %4368 = vmatpush1.msra.mxu0 %v4333
    %4369 = vmatprep.subr.mxu0 0.0
    %4370 = vmatpush1.msra.mxu0 %v4334
    %4371 = vmatprep.subr.mxu0 0.0
    %4372 = vmatpush1.msra.mxu0 %v4335
    %4373 = vmatprep.subr.mxu0 0.0
    %4374 = vmatpush1.msra.mxu0 %v4336
    %4375 = vmatprep.subr.mxu0 0.0
    %4376 = vmatpush1.msra.mxu0 %v4337
    %4377 = vmatprep.subr.mxu0 0.0
    %4378 = vmatpush1.msra.mxu0 %v4338
    %4379 = vmatprep.subr.mxu0 0.0
    %4380 = vmatpush1.msra.mxu0 %v4339
    %4381 = vmatprep.subr.mxu0 0.0
    %4382 = vmatpush1.msra.mxu0 %v4340
    %4383 = vmatprep.subr.mxu0 0.0
    %4384 = vmatpush1.msra.mxu0 %v4357
    %4385 = vmatprep.subr.mxu0 0.0
    %4386 = vmatpush1.msra.mxu0 0.0
    %4387 = vmatprep.subr.mxu0 0.0
    %4388 = vmatpush1.msra.mxu0 0.0
    %4389 = vmatprep.subr.mxu0 0.0
    %4390 = vmatpush1.msra.mxu0 0.0
    %4391 = vmatprep.subr.mxu0 0.0
    %4392 = vmatpush1.msra.mxu0 0.0
    %4393 = vmatprep.subr.mxu0 0.0
    %4394 = vmatpush1.msra.mxu0 0.0
    %4395 = vmatprep.subr.mxu0 0.0
    %4396 = vmatpush1.msra.mxu0 0.0
    %4397 = vmatprep.subr.mxu0 0.0
    %4398 = vmatpush1.msra.mxu0 0.0
    %4399 = vmatprep.subr.mxu0 0.0
    %4400 = vmatpush1.msra.mxu0 0.0
    %4401 = vmatprep.subr.mxu0 0.0
    %4402 = vmatpush1.msra.mxu0 0.0
    %4403 = vmatprep.subr.mxu0 0.0
    %4404 = vmatpush1.msra.mxu0 0.0
    %4405 = vmatprep.subr.mxu0 0.0
    %4406 = vmatpush1.msra.mxu0 0.0
    %4407 = vmatprep.subr.mxu0 0.0
    %4408 = vmatpush1.msra.mxu0 0.0
    %4409 = vmatprep.subr.mxu0 0.0
    %4410 = vmatpush1.msra.mxu0 0.0
    %4411 = vmatprep.subr.mxu0 0.0
    %4412 = vmatpush1.msra.mxu0 0.0
    %4413 = vmatprep.subr.mxu0 0.0
    %4414 = vmatpush1.msra.mxu0 0.0
    %4415 = vmatprep.subr.mxu0 0.0
    %4416 = vmatpush1.msra.mxu0 0.0
    %4417 = vmatprep.subr.mxu0 0.0
    %4418 = vmatpush1.msra.mxu0 0.0
    %4419 = vmatprep.subr.mxu0 0.0
    %4420 = vmatpush1.msra.mxu0 0.0
    %4421 = vmatprep.subr.mxu0 0.0
    %4422 = vmatpush1.msra.mxu0 0.0
    %4423 = vmatprep.mubr.f32.mxu0 0.0
    %4424 = vmatmul.mubr.f32.gmra.mrb[0].mxu0 %v4354
    %v4425 = vpop.f32.mrb[0].mxu0
    %v4426 = vadd.f32 %v4352, %v4425
    %v4427 = vpop.f32.mrb[0].mxu0
    %4428 = vdwg.mxu0
    %s4429 = scalar_lea.vmem [#allocation7], 1
    %4430 = vst [vmem:[%s4429] sm:$0x1] %v4426
    // Predicated region
    $region134: #{tpu_custom_call.1} parent=1 // pred_check
      _
    $region135: #{tpu_custom_call.1} parent=1 // pred_check_branch
      %4432 = sbr.rel (0) target = $region137
    $region136: #{tpu_custom_call.1} parent=1 // pred_region
      %s4434 = ssub.s32 32, 32
      %4435 = vsyncadd [#allocation8], %s4434
      %s4436 = sshll.u32 [#allocation7], 4
      %s4437 = int_to_ptr.vmem [resolvable:$true] %s4436
      %4442 = dma.vmem_to_hbm [thread:$0]  %s4437, 32, %s13, [#allocation8], 16, 16, 1
    $region137: #{tpu_custom_call.1} parent=1 // pred_fallthru
      _
    // Predicated region
    $region138: #{tpu_custom_call.1} parent=1 // pred_check
      _
    $region139: #{tpu_custom_call.1} parent=1 // pred_check_branch
      %4444 = sbr.rel (0) target = $region141
    $region140: #{tpu_custom_call.1} parent=1 // pred_region
      %4445 = dma.done [#allocation8], 32
    $region141: #{tpu_custom_call.1} parent=1 // pred_fallthru
      _
    %4446 = vsyncpa [#allocation8], 1
  %4447 = vsyncmov [#allocation3]
  %s4448 = vpop.sfrf %4447
  %p4449 = scmp.eq.s32.totalorder %s4448, 0
  %p4450 = pneg %p4449
  %4452 = shalt.err (%p4450)

</llo_original>
